<compile_context>
chip_gen: v7x
topology: tpu7x:2x2x1
jax: 0.10.0
libtpu: 0.0.40
codegen_flags: <defaults>
</compile_context>

<pallas_src>
import functools

import jax
import jax.numpy as jnp
from jax import lax
from jax.experimental import pallas as pl
from jax.experimental.pallas import tpu as pltpu

PATCH = 16  # backbone stride (conv kernel == stride == 16)


# --------------------------------------------------------------------------
# In-kernel helpers
# --------------------------------------------------------------------------
def _mxdot(a, b):
    """(m,k)@(k,n) on the MXU: bf16 operands, f32 accumulation."""
    return lax.dot_general(a.astype(jnp.bfloat16), b.astype(jnp.bfloat16),
                           (((1,), (0,)), ((), ())),
                           preferred_element_type=jnp.float32)


def _mxdot_t(a, b):
    """(m,k) x (n,k) -> (m,n): contract last dims (A @ B^T) on the MXU."""
    return lax.dot_general(a.astype(jnp.bfloat16), b.astype(jnp.bfloat16),
                           (((1,), (1,)), ((), ())),
                           preferred_element_type=jnp.float32)


def _softplus(x):
    # stable softplus without log1p (exp/log/abs all map to EUP/VPU)
    return jnp.maximum(x, 0.0) + jnp.log(1.0 + jnp.exp(-jnp.abs(x)))


# --------------------------------------------------------------------------
# Pallas kernels
# --------------------------------------------------------------------------
def _backbone_clf_kernel(xp_ref, bbw_ref, bbb_ref, clfw_ref, clfb_ref,
                         feat_ref, clf_ref):
    """Fused stride-16 backbone conv (as im2col matmul) + 1x1 clf conv.

    xp: (Cin*P*P, Npix) bf16; outputs feat (c_bb, Npix) bf16, clf (c_clf, Npix) bf16.
    The intermediate `feat` never leaves VMEM before the second dot.
    """
    feat = jnp.maximum(_mxdot(bbw_ref[...], xp_ref[...]) + bbb_ref[...], 0.0)
    feat_ref[...] = feat.astype(feat_ref.dtype)
    clf = jnp.maximum(_mxdot(clfw_ref[...], feat) + clfb_ref[...], 0.0)
    clf_ref[...] = clf.astype(clf_ref.dtype)


def _encode_kernel(feat_ref, mask_ref, wf_ref, wm_ref, b_ref, o_ref):
    """Box label encoder: split-weight 1x1 conv over [feat ; mask] without
    materialising the concat: w_f@feat + w_m*mask + b."""
    y = _mxdot(wf_ref[...], feat_ref[...]) + wm_ref[...] * mask_ref[...] + b_ref[...]
    o_ref[...] = y


def _label_encode_kernel(feat_ref, mask_ref, wf_ref, wm_ref, b_ref,
                         enc_ref, sw_ref, *, nf):
    """Label encoder: label head and sample-weight head stacked along Cout and
    computed with one dot; softplus applied in-kernel (EUP)."""
    y = _mxdot(wf_ref[...], feat_ref[...]) + wm_ref[...] * mask_ref[...] + b_ref[...]
    enc_ref[...] = y[:nf]
    sw_ref[...] = _softplus(y[nf:]) + 0.01


def _decoder_kernel(enc_ref, feat_ref, w1a_ref, w1b_ref, b1_ref,
                    w2_ref, b2_ref, o_ref):
    """Decoder: two 1x1 convs fused; split-weight dot instead of channel concat."""
    d = jnp.maximum(_mxdot(w1a_ref[...], enc_ref[...])
                    + _mxdot(w1b_ref[...], feat_ref[...]) + b1_ref[...], 0.0)
    o_ref[...] = _mxdot(w2_ref[...], d) + b2_ref[...]


def _filter_kernel(x_ref, y_ref, s_ref, filt_ref, *, num_iter, reg):
    """Target model: filter init + `num_iter` steepest-descent refinements,
    fully fused for one sequence (grid axis = batch).  All intermediates
    (scores, residual, gradient, step size) live in vregs/VMEM."""
    x = x_ref[0]            # (C, TP)   bf16
    yv = y_ref[0]           # (nf, TP)  f32
    sv = s_ref[0]           # (nf, TP)  f32
    nf = yv.shape[0]

    # init: label-weighted feature pooling
    num = _mxdot_t(yv * sv, x)                               # (nf, C)
    den = jnp.sum(sv, axis=1, keepdims=True) + 1e-6
    f = num / den
    filt_ref[0, 0:nf, :] = f

    # steepest-descent refinement (unrolled)
    for it in range(num_iter):
        scores = _mxdot(f, x)                                # (nf, TP)
        r = sv * (scores - yv)
        g = _mxdot_t(r, x) + reg * f                         # (nf, C)
        sg = _mxdot(g, x)                                    # (nf, TP)
        a_num = jnp.sum(g * g)
        a_den = jnp.sum(sv * sg * sg) + reg * a_num + 1e-8
        f = f - (a_num / a_den) * g
        filt_ref[0, (it + 1) * nf:(it + 2) * nf, :] = f


def _classify_kernel(f_ref, x_ref, o_ref):
    """Classify the test features with ALL filter iterations at once:
    (n_iter*nf, C) @ (C, T_te*hw).  The filter stays resident — no broadcast."""
    o_ref[0] = _mxdot(f_ref[0], x_ref[0])


# --------------------------------------------------------------------------
# pallas_call wrappers
# --------------------------------------------------------------------------
def backbone_and_clf(p, xp):
    """xp: (Cin*PATCH*PATCH, Npix) bf16 -> (feat, feat_clf), both (*, Npix) bf16."""
    npix = xp.shape[1]
    c_bb = p["bb_w"].shape[0]
    c_clf = p["clf_w"].shape[0]
    return pl.pallas_call(
        _backbone_clf_kernel,
        out_shape=(jax.ShapeDtypeStruct((c_bb, npix), jnp.bfloat16),
                   jax.ShapeDtypeStruct((c_clf, npix), jnp.bfloat16)),
    )(xp, p["bb_w"], p["bb_b"], p["clf_w"], p["clf_b"])


def box_label_encoder(p, box_mask, feat_clf):
    nf = p["boxe_wf"].shape[0]
    npix = feat_clf.shape[1]
    return pl.pallas_call(
        _encode_kernel,
        out_shape=jax.ShapeDtypeStruct((nf, npix), jnp.float32),
    )(feat_clf, box_mask, p["boxe_wf"], p["boxe_wm"], p["boxe_b"])


def label_encoder(p, mask_ds, feat_clf):
    nf = p["le_wf"].shape[0] // 2
    npix = feat_clf.shape[1]
    kernel = functools.partial(_label_encode_kernel, nf=nf)
    return pl.pallas_call(
        kernel,
        out_shape=(jax.ShapeDtypeStruct((nf, npix), jnp.float32),
                   jax.ShapeDtypeStruct((nf, npix), jnp.float32)),
    )(feat_clf, mask_ds, p["le_wf"], p["le_wm"], p["le_b"])


def decoder(p, mask_enc, feat):
    npix = feat.shape[1]
    return pl.pallas_call(
        _decoder_kernel,
        out_shape=jax.ShapeDtypeStruct((1, npix), jnp.float32),
    )(mask_enc, feat, p["dec1_wa"], p["dec1_wb"], p["dec1_b"],
      p["dec2_w"], p["dec2_b"])


def target_model_get_filter(x, y, s, *, num_iter=2, reg=0.1):
    """x: (B, C, TP) bf16; y, s: (B, nf, TP) f32 -> (B, (num_iter+1)*nf, C) f32
    holding every filter iteration (rows [i*nf:(i+1)*nf] = iteration i)."""
    B, C, TP = x.shape
    nf = y.shape[1]
    n_out = (num_iter + 1) * nf
    kernel = functools.partial(_filter_kernel, num_iter=num_iter, reg=reg)
    return pl.pallas_call(
        kernel,
        out_shape=jax.ShapeDtypeStruct((B, n_out, C), jnp.float32),
        grid=(B,),
        in_specs=[pl.BlockSpec((1, C, TP), lambda b: (b, 0, 0)),
                  pl.BlockSpec((1, nf, TP), lambda b: (b, 0, 0)),
                  pl.BlockSpec((1, nf, TP), lambda b: (b, 0, 0))],
        out_specs=pl.BlockSpec((1, n_out, C), lambda b: (b, 0, 0)),
        compiler_params=pltpu.CompilerParams(dimension_semantics=("parallel",)),
    )(x, y, s)


def target_model_classify_all(filters, x):
    """filters: (B, n_iter*nf, C) f32; x: (B, C, T_te*hw) bf16 -> (B, n_iter*nf, T_te*hw)."""
    B, NF, C = filters.shape
    P = x.shape[2]
    return pl.pallas_call(
        _classify_kernel,
        out_shape=jax.ShapeDtypeStruct((B, NF, P), jnp.float32),
        grid=(B,),
        in_specs=[pl.BlockSpec((1, NF, C), lambda b: (b, 0, 0)),
                  pl.BlockSpec((1, C, P), lambda b: (b, 0, 0))],
        out_specs=pl.BlockSpec((1, NF, P), lambda b: (b, 0, 0)),
        compiler_params=pltpu.CompilerParams(dimension_semantics=("parallel",)),
    )(filters, x)


# --------------------------------------------------------------------------
# Deterministic parameter initialisation (synthetic, no checkpoint)
# --------------------------------------------------------------------------
def init_params(key, c_img=3, c_bb=32, c_clf=32, nf=8, c_dec=16):
    ks = jax.random.split(key, 8)

    def w(k, shape, scale):
        return jax.random.normal(k, shape, jnp.float32) * scale

    return {
        "bb_w": w(ks[0], (c_bb, c_img * PATCH * PATCH), 0.05),
        "bb_b": jnp.zeros((c_bb,), jnp.float32),
        "clf_w": w(ks[1], (c_clf, c_bb), 0.1),
        "clf_b": jnp.zeros((c_clf,), jnp.float32),
        "boxe_w": w(ks[2], (nf, c_clf + 1), 0.1),
        "boxe_b": jnp.zeros((nf,), jnp.float32),
        "le_w": w(ks[3], (nf, c_clf + 1), 0.1),
        "le_b": jnp.zeros((nf,), jnp.float32),
        "sw_w": w(ks[4], (nf, c_clf + 1), 0.1),
        "sw_b": jnp.zeros((nf,), jnp.float32),
        "dec1_w": w(ks[5], (c_dec, nf + c_bb), 0.1),
        "dec1_b": jnp.zeros((c_dec,), jnp.float32),
        "dec2_w": w(ks[6], (1, c_dec), 0.1),
        "dec2_b": jnp.zeros((1,), jnp.float32),
    }


def prepare_params(raw):
    """One-time prep: cast MXU weights to bf16, split concatenated-input
    weights into (feature, mask) parts, stack the two label-encoder heads,
    and shape biases as (Cout, 1) lane-broadcast columns.  Removes all
    per-call astypes / activation concats."""
    c_clf = raw["clf_w"].shape[0]
    nf = raw["le_w"].shape[0]

    def col(b):
        return b.reshape(-1, 1).astype(jnp.float32)

    return {
        "bb_w": raw["bb_w"].astype(jnp.bfloat16), "bb_b": col(raw["bb_b"]),
        "clf_w": raw["clf_w"].astype(jnp.bfloat16), "clf_b": col(raw["clf_b"]),
        # box label encoder: split feature / mask columns
        "boxe_wf": raw["boxe_w"][:, :c_clf].astype(jnp.bfloat16),
        "boxe_wm": raw["boxe_w"][:, c_clf:].astype(jnp.float32),
        "boxe_b": col(raw["boxe_b"]),
        # label encoder: label + sample-weight heads stacked along Cout
        "le_wf": jnp.concatenate([raw["le_w"][:, :c_clf],
                                  raw["sw_w"][:, :c_clf]], axis=0).astype(jnp.bfloat16),
        "le_wm": jnp.concatenate([raw["le_w"][:, c_clf:],
                                  raw["sw_w"][:, c_clf:]], axis=0).astype(jnp.float32),
        "le_b": jnp.concatenate([col(raw["le_b"]), col(raw["sw_b"])], axis=0),
        # decoder: split mask-enc / backbone-feat columns
        "dec1_wa": raw["dec1_w"][:, :nf].astype(jnp.bfloat16),
        "dec1_wb": raw["dec1_w"][:, nf:].astype(jnp.bfloat16),
        "dec1_b": col(raw["dec1_b"]),
        "dec2_w": raw["dec2_w"].astype(jnp.bfloat16),
        "dec2_b": col(raw["dec2_b"]),
    }


# --------------------------------------------------------------------------
# Plain-JAX glue (layout / rasterisation / pooling / upsampling)
# --------------------------------------------------------------------------
def _patchify(imgs):
    """(N, C, H, W) f32 -> (C*PATCH*PATCH, N*h*w) bf16 im2col for the stride-16 conv.
    Folding N into the lane axis gives lane-dense kernel blocks."""
    N, C, H, W = imgs.shape
    h, w = H // PATCH, W // PATCH
    x = imgs.reshape(N, C, h, PATCH, w, PATCH)
    x = jnp.transpose(x, (1, 3, 5, 0, 2, 4))       # (C, py, px, N, h, w)
    x = x.reshape(C * PATCH * PATCH, N * h * w)
    return x.astype(jnp.bfloat16), (h, w)


def _rasterize_boxes(bb, T, B, h, w):
    """bb: (T, B, 4) as (x, y, w, h) in image pixels -> (1, T*B*h*w) f32 mask."""
    bb = bb.reshape(T * B, 4)
    ys = (jnp.arange(h, dtype=jnp.float32) + 0.5) * PATCH
    xs = (jnp.arange(w, dtype=jnp.float32) + 0.5) * PATCH
    yy, xx = jnp.meshgrid(ys, xs, indexing="ij")
    x0 = bb[:, 0][:, None, None]
    y0 = bb[:, 1][:, None, None]
    x1 = x0 + bb[:, 2][:, None, None]
    y1 = y0 + bb[:, 3][:, None, None]
    m = (xx[None] >= x0) & (xx[None] < x1) & (yy[None] >= y0) & (yy[None] < y1)
    return m.astype(jnp.float32).reshape(1, T * B * h * w)


def _downsample_mask(mask_nchw, h, w):
    """(N, 1, H, W) -> (1, N*h*w): PATCH x PATCH average pooling."""
    N = mask_nchw.shape[0]
    m = mask_nchw.reshape(N, 1, h, PATCH, w, PATCH).mean(axis=(3, 5))
    return m.reshape(1, N * h * w)


def _upsample16(m_low, T, B, h, w):
    """(1, T*B*h*w) logits -> (T*B, 1, H, W) nearest x16 upsample."""
    # TODO(synk): real decoder uses learned upsampling with skip connections.
    m = m_low.reshape(T * B, 1, h, w)
    return jnp.repeat(jnp.repeat(m, PATCH, axis=2), PATCH, axis=3)


# --------------------------------------------------------------------------
# LWTLBoxNet.forward
# --------------------------------------------------------------------------
def lwtl_box_net_forward(p, train_imgs, test_imgs, train_masks, test_masks,
                         bb_train, num_refinement_iter=2):
    assert train_imgs.ndim == 5 and test_imgs.ndim == 5, "Expect 5 dimensional inputs"
    assert train_masks.ndim == 4, "Expect 4 dimensional masks"

    T_tr, B = train_imgs.shape[0], train_imgs.shape[1]
    T_te = test_imgs.shape[0]
    H, W = train_imgs.shape[-2], train_imgs.shape[-1]
    h, w = H // PATCH, W // PATCH
    hw = h * w

    train_im_flat = train_imgs.reshape(-1, *train_imgs.shape[-3:])
    test_im_flat = test_imgs.reshape(-1, *test_imgs.shape[-3:])

    # backbone + clf-feature conv fused (one kernel per frame set)
    # TODO(synk): real feature_extractor is a multi-layer ResNet; this stand-in
    # exposes a single stride-16 'layer3'.
    xp_tr, _ = _patchify(train_im_flat)
    xp_te, _ = _patchify(test_im_flat)
    train_feat, train_feat_clf = backbone_and_clf(p, xp_tr)      # (c, T_tr*B*hw)
    test_feat, test_feat_clf = backbone_and_clf(p, xp_te)        # (c, T_te*B*hw)

    # box encoding -> decoder on the TEST-frame backbone features.
    # NOTE: mirrors the reference forward, which mixes the train-frame box
    # encoding with test_feat; this requires T_tr == T_te (true in training).
    assert train_feat_clf.shape[1] == test_feat.shape[1]
    box_mask = _rasterize_boxes(bb_train, T_tr, B, h, w)
    bb_mask_enc = box_label_encoder(p, box_mask, train_feat_clf)  # (nf, Npix)
    box_mask_logits = decoder(p, bb_mask_enc, test_feat)          # (1, Npix)
    box_mask_pred = _upsample16(box_mask_logits, T_te, B, h, w)   # (T_te*B,1,H,W)

    # fused label / sample-weight encoders
    train_mask_ds = _downsample_mask(box_mask_pred, h, w)
    y_enc, s_w = label_encoder(p, train_mask_ds, train_feat_clf)
    test_mask_ds = _downsample_mask(
        test_masks.reshape(T_te * B, 1, H, W).astype(jnp.float32), h, w)
    mask_enc_test, _ = label_encoder(p, test_mask_ds, test_feat_clf)

    nf = y_enc.shape[0]

    # per-sequence layout (B, C, T*hw) for the target model
    def to_seq(a, T):
        c = a.shape[0]
        return jnp.transpose(a.reshape(c, T, B, hw), (2, 0, 1, 3)).reshape(B, c, T * hw)

    x_tr = to_seq(train_feat_clf, T_tr)      # (B, C, T_tr*hw) bf16
    y_tr = to_seq(y_enc, T_tr)               # (B, nf, T_tr*hw) f32
    s_tr = to_seq(s_w, T_tr)
    x_te = to_seq(test_feat_clf, T_te)       # (B, C, T_te*hw) bf16

    # ONE kernel: filter init + all steepest-descent iterations
    filters = target_model_get_filter(x_tr, y_tr, s_tr,
                                      num_iter=num_refinement_iter, reg=0.1)
    # ONE kernel: classify every filter iteration (no filter broadcast)
    scores = target_model_classify_all(filters, x_te)   # (B, n_iter*nf, T_te*hw)

    n_iter = num_refinement_iter + 1
    scores_r = scores.reshape(B, n_iter, nf, T_te, h, w)
    scores_r = jnp.transpose(scores_r, (1, 3, 0, 2, 4, 5))  # (n_iter, T_te, B, nf, h, w)
    target_scores = [scores_r[i] for i in range(n_iter)]
    target_scores_last = target_scores[-1]

    # second decoder pass on the last-iteration target scores
    enc_last = jnp.transpose(target_scores_last.reshape(T_te, B, nf, hw),
                             (2, 0, 1, 3)).reshape(nf, T_te * B * hw)
    mask_logits = decoder(p, enc_last, test_feat)
    mask_pred = _upsample16(mask_logits, T_te, B, h, w)

    # mask_enc_test back to NCHW layout (decoder_feat['mask_enc'] of the
    # reference is set but never returned).
    mask_enc_test = jnp.transpose(
        mask_enc_test.reshape(nf, T_te * B, hw), (1, 0, 2)).reshape(T_te * B, nf, h, w)

    return mask_pred, target_scores, mask_enc_test, box_mask_pred


# --------------------------------------------------------------------------
if __name__ == "__main__":
    key = jax.random.PRNGKey(0)
    k_params, k_tr, k_te, k_trm, k_tem = jax.random.split(key, 5)

    # H=W=128 -> h=w=8, so the fused lane axis (T*B*h*w) is exactly 128.
    T_tr, T_te, B, C_img, H, W = 1, 1, 2, 3, 128, 128
    raw_params = init_params(k_params, c_img=C_img)
    params = prepare_params(raw_params)

    train_imgs = jax.random.normal(k_tr, (T_tr, B, C_img, H, W), jnp.float32)
    test_imgs = jax.random.normal(k_te, (T_te, B, C_img, H, W), jnp.float32)
    train_masks = (jax.random.uniform(k_trm, (T_tr, B, H, W)) > 0.5).astype(jnp.float32)
    test_masks = (jax.random.uniform(k_tem, (T_te, B, H, W)) > 0.5).astype(jnp.float32)
    bb_train = jnp.array([[[16.0, 16.0, 80.0, 64.0],
                           [32.0, 24.0, 48.0, 72.0]]], dtype=jnp.float32)  # (T_tr, B, 4)

    fwd = jax.jit(lwtl_box_net_forward, static_argnames=("num_refinement_iter",))
    outs = fwd(params, train_imgs, test_imgs, train_masks, test_masks, bb_train)
    jax.block_until_ready(outs)

    mask_pred, target_scores, mask_enc_test, box_mask_pred = outs
    h, w = H // PATCH, W // PATCH
    assert mask_pred.shape == (T_te * B, 1, H, W)
    assert box_mask_pred.shape == (T_te * B, 1, H, W)
    assert len(target_scores) == 3  # init filter + 2 SD iterations
    assert target_scores[0].shape == (T_te, B, 8, h, w)
    assert mask_enc_test.shape == (T_te * B, 8, h, w)
    assert bool(jnp.isfinite(mask_pred).all())
    print("KERNEL_OK")
</pallas_src>

<mosaic_0001>
module attributes {stable_mosaic.version = 11 : i64} {
  func.func @_backbone_clf_kernel(%arg0: memref<768x128xbf16, #tpu.memory_space<vmem>>, %arg1: memref<32x768xbf16, #tpu.memory_space<vmem>>, %arg2: memref<32x1xf32, #tpu.memory_space<vmem>>, %arg3: memref<32x32xbf16, #tpu.memory_space<vmem>>, %arg4: memref<32x1xf32, #tpu.memory_space<vmem>>, %arg5: memref<32x128xbf16, #tpu.memory_space<vmem>>, %arg6: memref<32x128xbf16, #tpu.memory_space<vmem>>) attributes {dimension_semantics = [], scalar_prefetch = 0 : i64, scratch_operands = 0 : i64, tpu.core_type = #tpu.core_type<tc>} {
    %c0 = arith.constant 0 : index
    %c0_0 = arith.constant 0 : index
    %0 = vector.load %arg1[%c0, %c0_0] : memref<32x768xbf16, #tpu.memory_space<vmem>>, vector<32x768xbf16>
    %c0_1 = arith.constant 0 : index
    %c0_2 = arith.constant 0 : index
    %1 = vector.load %arg0[%c0_1, %c0_2] : memref<768x128xbf16, #tpu.memory_space<vmem>>, vector<768x128xbf16>
    %cst = arith.constant dense<0.000000e+00> : vector<32x128xf32>
    %2 = tpu.matmul %0, %1, %cst {dimension_numbers = #tpu.dot_dimension_numbers<[1], [0], [0], [1], [0, 0, 1, 1], [], []>} : vector<32x768xbf16>, vector<768x128xbf16>, vector<32x128xf32> -> vector<32x128xf32>
    %c0_3 = arith.constant 0 : index
    %c0_4 = arith.constant 0 : index
    %3 = vector.load %arg2[%c0_3, %c0_4] : memref<32x1xf32, #tpu.memory_space<vmem>>, vector<32x1xf32>
    %4 = vector.broadcast %3 : vector<32x1xf32> to vector<32x128xf32>
    %5 = arith.addf %2, %4 : vector<32x128xf32>
    %cst_5 = arith.constant 0.000000e+00 : f32
    %6 = vector.broadcast %cst_5 : f32 to vector<32x128xf32>
    %7 = arith.maximumf %5, %6 : vector<32x128xf32>
    %8 = arith.truncf %7 : vector<32x128xf32> to vector<32x128xbf16>
    %c0_6 = arith.constant 0 : index
    %c0_7 = arith.constant 0 : index
    %9 = vector.load %arg5[%c0_6, %c0_7] : memref<32x128xbf16, #tpu.memory_space<vmem>>, vector<32x128xbf16>
    tpu.vector_store %arg5[%c0_6, %c0_7], %8 {strides = array<i32>} : memref<32x128xbf16, #tpu.memory_space<vmem>>, vector<32x128xbf16>,
    %c0_8 = arith.constant 0 : index
    %c0_9 = arith.constant 0 : index
    %10 = vector.load %arg3[%c0_8, %c0_9] : memref<32x32xbf16, #tpu.memory_space<vmem>>, vector<32x32xbf16>
    %11 = arith.truncf %7 : vector<32x128xf32> to vector<32x128xbf16>
    %cst_10 = arith.constant dense<0.000000e+00> : vector<32x128xf32>
    %12 = tpu.matmul %10, %11, %cst_10 {dimension_numbers = #tpu.dot_dimension_numbers<[1], [0], [0], [1], [0, 0, 1, 1], [], []>} : vector<32x32xbf16>, vector<32x128xbf16>, vector<32x128xf32> -> vector<32x128xf32>
    %c0_11 = arith.constant 0 : index
    %c0_12 = arith.constant 0 : index
    %13 = vector.load %arg4[%c0_11, %c0_12] : memref<32x1xf32, #tpu.memory_space<vmem>>, vector<32x1xf32>
    %14 = vector.broadcast %13 : vector<32x1xf32> to vector<32x128xf32>
    %15 = arith.addf %12, %14 : vector<32x128xf32>
    %cst_13 = arith.constant 0.000000e+00 : f32
    %16 = vector.broadcast %cst_13 : f32 to vector<32x128xf32>
    %17 = arith.maximumf %15, %16 : vector<32x128xf32>
    %18 = arith.truncf %17 : vector<32x128xf32> to vector<32x128xbf16>
    %c0_14 = arith.constant 0 : index
    %c0_15 = arith.constant 0 : index
    %19 = vector.load %arg6[%c0_14, %c0_15] : memref<32x128xbf16, #tpu.memory_space<vmem>>, vector<32x128xbf16>
    tpu.vector_store %arg6[%c0_14, %c0_15], %18 {strides = array<i32>} : memref<32x128xbf16, #tpu.memory_space<vmem>>, vector<32x128xbf16>,
    return
  }
}

module attributes {stable_mosaic.version = 11 : i64} {
  func.func @_encode_kernel(%arg0: memref<32x128xbf16, #tpu.memory_space<vmem>>, %arg1: memref<1x128xf32, #tpu.memory_space<vmem>>, %arg2: memref<8x32xbf16, #tpu.memory_space<vmem>>, %arg3: memref<8x1xf32, #tpu.memory_space<vmem>>, %arg4: memref<8x1xf32, #tpu.memory_space<vmem>>, %arg5: memref<8x128xf32, #tpu.memory_space<vmem>>) attributes {dimension_semantics = [], scalar_prefetch = 0 : i64, scratch_operands = 0 : i64, tpu.core_type = #tpu.core_type<tc>} {
    %c0 = arith.constant 0 : index
    %c0_0 = arith.constant 0 : index
    %0 = vector.load %arg2[%c0, %c0_0] : memref<8x32xbf16, #tpu.memory_space<vmem>>, vector<8x32xbf16>
    %c0_1 = arith.constant 0 : index
    %c0_2 = arith.constant 0 : index
    %1 = vector.load %arg0[%c0_1, %c0_2] : memref<32x128xbf16, #tpu.memory_space<vmem>>, vector<32x128xbf16>
    %cst = arith.constant dense<0.000000e+00> : vector<8x128xf32>
    %2 = tpu.matmul %0, %1, %cst {dimension_numbers = #tpu.dot_dimension_numbers<[1], [0], [0], [1], [0, 0, 1, 1], [], []>} : vector<8x32xbf16>, vector<32x128xbf16>, vector<8x128xf32> -> vector<8x128xf32>
    %c0_3 = arith.constant 0 : index
    %c0_4 = arith.constant 0 : index
    %3 = vector.load %arg3[%c0_3, %c0_4] : memref<8x1xf32, #tpu.memory_space<vmem>>, vector<8x1xf32>
    %c0_5 = arith.constant 0 : index
    %c0_6 = arith.constant 0 : index
    %4 = vector.load %arg1[%c0_5, %c0_6] : memref<1x128xf32, #tpu.memory_space<vmem>>, vector<1x128xf32>
    %5 = vector.broadcast %3 : vector<8x1xf32> to vector<8x128xf32>
    %6 = vector.broadcast %4 : vector<1x128xf32> to vector<8x128xf32>
    %7 = arith.mulf %5, %6 : vector<8x128xf32>
    %8 = arith.addf %2, %7 : vector<8x128xf32>
    %c0_7 = arith.constant 0 : index
    %c0_8 = arith.constant 0 : index
    %9 = vector.load %arg4[%c0_7, %c0_8] : memref<8x1xf32, #tpu.memory_space<vmem>>, vector<8x1xf32>
    %10 = vector.broadcast %9 : vector<8x1xf32> to vector<8x128xf32>
    %11 = arith.addf %8, %10 : vector<8x128xf32>
    %c0_9 = arith.constant 0 : index
    %c0_10 = arith.constant 0 : index
    %12 = vector.load %arg5[%c0_9, %c0_10] : memref<8x128xf32, #tpu.memory_space<vmem>>, vector<8x128xf32>
    tpu.vector_store %arg5[%c0_9, %c0_10], %11 {strides = array<i32>} : memref<8x128xf32, #tpu.memory_space<vmem>>, vector<8x128xf32>,
    return
  }
}

module attributes {stable_mosaic.version = 11 : i64} {
  func.func @_decoder_kernel(%arg0: memref<8x128xf32, #tpu.memory_space<vmem>>, %arg1: memref<32x128xbf16, #tpu.memory_space<vmem>>, %arg2: memref<16x8xbf16, #tpu.memory_space<vmem>>, %arg3: memref<16x32xbf16, #tpu.memory_space<vmem>>, %arg4: memref<16x1xf32, #tpu.memory_space<vmem>>, %arg5: memref<1x16xbf16, #tpu.memory_space<vmem>>, %arg6: memref<1x1xf32, #tpu.memory_space<vmem>>, %arg7: memref<1x128xf32, #tpu.memory_space<vmem>>) attributes {dimension_semantics = [], scalar_prefetch = 0 : i64, scratch_operands = 0 : i64, tpu.core_type = #tpu.core_type<tc>} {
    %c0 = arith.constant 0 : index
    %c0_0 = arith.constant 0 : index
    %0 = vector.load %arg2[%c0, %c0_0] : memref<16x8xbf16, #tpu.memory_space<vmem>>, vector<16x8xbf16>
    %c0_1 = arith.constant 0 : index
    %c0_2 = arith.constant 0 : index
    %1 = vector.load %arg0[%c0_1, %c0_2] : memref<8x128xf32, #tpu.memory_space<vmem>>, vector<8x128xf32>
    %2 = arith.truncf %1 : vector<8x128xf32> to vector<8x128xbf16>
    %cst = arith.constant dense<0.000000e+00> : vector<16x128xf32>
    %3 = tpu.matmul %0, %2, %cst {dimension_numbers = #tpu.dot_dimension_numbers<[1], [0], [0], [1], [0, 0, 1, 1], [], []>} : vector<16x8xbf16>, vector<8x128xbf16>, vector<16x128xf32> -> vector<16x128xf32>
    %c0_3 = arith.constant 0 : index
    %c0_4 = arith.constant 0 : index
    %4 = vector.load %arg3[%c0_3, %c0_4] : memref<16x32xbf16, #tpu.memory_space<vmem>>, vector<16x32xbf16>
    %c0_5 = arith.constant 0 : index
    %c0_6 = arith.constant 0 : index
    %5 = vector.load %arg1[%c0_5, %c0_6] : memref<32x128xbf16, #tpu.memory_space<vmem>>, vector<32x128xbf16>
    %cst_7 = arith.constant dense<0.000000e+00> : vector<16x128xf32>
    %6 = tpu.matmul %4, %5, %cst_7 {dimension_numbers = #tpu.dot_dimension_numbers<[1], [0], [0], [1], [0, 0, 1, 1], [], []>} : vector<16x32xbf16>, vector<32x128xbf16>, vector<16x128xf32> -> vector<16x128xf32>
    %7 = arith.addf %3, %6 : vector<16x128xf32>
    %c0_8 = arith.constant 0 : index
    %c0_9 = arith.constant 0 : index
    %8 = vector.load %arg4[%c0_8, %c0_9] : memref<16x1xf32, #tpu.memory_space<vmem>>, vector<16x1xf32>
    %9 = vector.broadcast %8 : vector<16x1xf32> to vector<16x128xf32>
    %10 = arith.addf %7, %9 : vector<16x128xf32>
    %cst_10 = arith.constant 0.000000e+00 : f32
    %11 = vector.broadcast %cst_10 : f32 to vector<16x128xf32>
    %12 = arith.maximumf %10, %11 : vector<16x128xf32>
    %c0_11 = arith.constant 0 : index
    %c0_12 = arith.constant 0 : index
    %13 = vector.load %arg5[%c0_11, %c0_12] : memref<1x16xbf16, #tpu.memory_space<vmem>>, vector<1x16xbf16>
    %14 = arith.truncf %12 : vector<16x128xf32> to vector<16x128xbf16>
    %cst_13 = arith.constant dense<0.000000e+00> : vector<1x128xf32>
    %15 = tpu.matmul %13, %14, %cst_13 {dimension_numbers = #tpu.dot_dimension_numbers<[1], [0], [0], [1], [0, 0, 1, 1], [], []>} : vector<1x16xbf16>, vector<16x128xbf16>, vector<1x128xf32> -> vector<1x128xf32>
    %c0_14 = arith.constant 0 : index
    %c0_15 = arith.constant 0 : index
    %16 = vector.load %arg6[%c0_14, %c0_15] : memref<1x1xf32, #tpu.memory_space<vmem>>, vector<1x1xf32>
    %17 = vector.broadcast %16 : vector<1x1xf32> to vector<1x128xf32>
    %18 = arith.addf %15, %17 : vector<1x128xf32>
    %c0_16 = arith.constant 0 : index
    %c0_17 = arith.constant 0 : index
    %19 = vector.load %arg7[%c0_16, %c0_17] : memref<1x128xf32, #tpu.memory_space<vmem>>, vector<1x128xf32>
    tpu.vector_store %arg7[%c0_16, %c0_17], %18 {strides = array<i32>} : memref<1x128xf32, #tpu.memory_space<vmem>>, vector<1x128xf32>,
    return
  }
}

module attributes {stable_mosaic.version = 11 : i64} {
  func.func @_backbone_clf_kernel(%arg0: memref<768x128xbf16, #tpu.memory_space<vmem>>, %arg1: memref<32x768xbf16, #tpu.memory_space<vmem>>, %arg2: memref<32x1xf32, #tpu.memory_space<vmem>>, %arg3: memref<32x32xbf16, #tpu.memory_space<vmem>>, %arg4: memref<32x1xf32, #tpu.memory_space<vmem>>, %arg5: memref<32x128xbf16, #tpu.memory_space<vmem>>, %arg6: memref<32x128xbf16, #tpu.memory_space<vmem>>) attributes {dimension_semantics = [], scalar_prefetch = 0 : i64, scratch_operands = 0 : i64, tpu.core_type = #tpu.core_type<tc>} {
    %c0 = arith.constant 0 : index
    %c0_0 = arith.constant 0 : index
    %0 = vector.load %arg1[%c0, %c0_0] : memref<32x768xbf16, #tpu.memory_space<vmem>>, vector<32x768xbf16>
    %c0_1 = arith.constant 0 : index
    %c0_2 = arith.constant 0 : index
    %1 = vector.load %arg0[%c0_1, %c0_2] : memref<768x128xbf16, #tpu.memory_space<vmem>>, vector<768x128xbf16>
    %cst = arith.constant dense<0.000000e+00> : vector<32x128xf32>
    %2 = tpu.matmul %0, %1, %cst {dimension_numbers = #tpu.dot_dimension_numbers<[1], [0], [0], [1], [0, 0, 1, 1], [], []>} : vector<32x768xbf16>, vector<768x128xbf16>, vector<32x128xf32> -> vector<32x128xf32>
    %c0_3 = arith.constant 0 : index
    %c0_4 = arith.constant 0 : index
    %3 = vector.load %arg2[%c0_3, %c0_4] : memref<32x1xf32, #tpu.memory_space<vmem>>, vector<32x1xf32>
    %4 = vector.broadcast %3 : vector<32x1xf32> to vector<32x128xf32>
    %5 = arith.addf %2, %4 : vector<32x128xf32>
    %cst_5 = arith.constant 0.000000e+00 : f32
    %6 = vector.broadcast %cst_5 : f32 to vector<32x128xf32>
    %7 = arith.maximumf %5, %6 : vector<32x128xf32>
    %8 = arith.truncf %7 : vector<32x128xf32> to vector<32x128xbf16>
    %c0_6 = arith.constant 0 : index
    %c0_7 = arith.constant 0 : index
    %9 = vector.load %arg5[%c0_6, %c0_7] : memref<32x128xbf16, #tpu.memory_space<vmem>>, vector<32x128xbf16>
    tpu.vector_store %arg5[%c0_6, %c0_7], %8 {strides = array<i32>} : memref<32x128xbf16, #tpu.memory_space<vmem>>, vector<32x128xbf16>,
    %c0_8 = arith.constant 0 : index
    %c0_9 = arith.constant 0 : index
    %10 = vector.load %arg3[%c0_8, %c0_9] : memref<32x32xbf16, #tpu.memory_space<vmem>>, vector<32x32xbf16>
    %11 = arith.truncf %7 : vector<32x128xf32> to vector<32x128xbf16>
    %cst_10 = arith.constant dense<0.000000e+00> : vector<32x128xf32>
    %12 = tpu.matmul %10, %11, %cst_10 {dimension_numbers = #tpu.dot_dimension_numbers<[1], [0], [0], [1], [0, 0, 1, 1], [], []>} : vector<32x32xbf16>, vector<32x128xbf16>, vector<32x128xf32> -> vector<32x128xf32>
    %c0_11 = arith.constant 0 : index
    %c0_12 = arith.constant 0 : index
    %13 = vector.load %arg4[%c0_11, %c0_12] : memref<32x1xf32, #tpu.memory_space<vmem>>, vector<32x1xf32>
    %14 = vector.broadcast %13 : vector<32x1xf32> to vector<32x128xf32>
    %15 = arith.addf %12, %14 : vector<32x128xf32>
    %cst_13 = arith.constant 0.000000e+00 : f32
    %16 = vector.broadcast %cst_13 : f32 to vector<32x128xf32>
    %17 = arith.maximumf %15, %16 : vector<32x128xf32>
    %18 = arith.truncf %17 : vector<32x128xf32> to vector<32x128xbf16>
    %c0_14 = arith.constant 0 : index
    %c0_15 = arith.constant 0 : index
    %19 = vector.load %arg6[%c0_14, %c0_15] : memref<32x128xbf16, #tpu.memory_space<vmem>>, vector<32x128xbf16>
    tpu.vector_store %arg6[%c0_14, %c0_15], %18 {strides = array<i32>} : memref<32x128xbf16, #tpu.memory_space<vmem>>, vector<32x128xbf16>,
    return
  }
}

module attributes {stable_mosaic.version = 11 : i64} {
  func.func @_label_encode_kernel(%arg0: memref<32x128xbf16, #tpu.memory_space<vmem>>, %arg1: memref<1x128xf32, #tpu.memory_space<vmem>>, %arg2: memref<16x32xbf16, #tpu.memory_space<vmem>>, %arg3: memref<16x1xf32, #tpu.memory_space<vmem>>, %arg4: memref<16x1xf32, #tpu.memory_space<vmem>>, %arg5: memref<8x128xf32, #tpu.memory_space<vmem>>, %arg6: memref<8x128xf32, #tpu.memory_space<vmem>>) attributes {dimension_semantics = [], scalar_prefetch = 0 : i64, scratch_operands = 0 : i64, tpu.core_type = #tpu.core_type<tc>} {
    %c0 = arith.constant 0 : index
    %c0_0 = arith.constant 0 : index
    %0 = vector.load %arg2[%c0, %c0_0] : memref<16x32xbf16, #tpu.memory_space<vmem>>, vector<16x32xbf16>
    %c0_1 = arith.constant 0 : index
    %c0_2 = arith.constant 0 : index
    %1 = vector.load %arg0[%c0_1, %c0_2] : memref<32x128xbf16, #tpu.memory_space<vmem>>, vector<32x128xbf16>
    %cst = arith.constant dense<0.000000e+00> : vector<16x128xf32>
    %2 = tpu.matmul %0, %1, %cst {dimension_numbers = #tpu.dot_dimension_numbers<[1], [0], [0], [1], [0, 0, 1, 1], [], []>} : vector<16x32xbf16>, vector<32x128xbf16>, vector<16x128xf32> -> vector<16x128xf32>
    %c0_3 = arith.constant 0 : index
    %c0_4 = arith.constant 0 : index
    %3 = vector.load %arg3[%c0_3, %c0_4] : memref<16x1xf32, #tpu.memory_space<vmem>>, vector<16x1xf32>
    %c0_5 = arith.constant 0 : index
    %c0_6 = arith.constant 0 : index
    %4 = vector.load %arg1[%c0_5, %c0_6] : memref<1x128xf32, #tpu.memory_space<vmem>>, vector<1x128xf32>
    %5 = vector.broadcast %3 : vector<16x1xf32> to vector<16x128xf32>
    %6 = vector.broadcast %4 : vector<1x128xf32> to vector<16x128xf32>
    %7 = arith.mulf %5, %6 : vector<16x128xf32>
    %8 = arith.addf %2, %7 : vector<16x128xf32>
    %c0_7 = arith.constant 0 : index
    %c0_8 = arith.constant 0 : index
    %9 = vector.load %arg4[%c0_7, %c0_8] : memref<16x1xf32, #tpu.memory_space<vmem>>, vector<16x1xf32>
    %10 = vector.broadcast %9 : vector<16x1xf32> to vector<16x128xf32>
    %11 = arith.addf %8, %10 : vector<16x128xf32>
    %12 = vector.extract_strided_slice %11 {offsets = [0, 0], sizes = [8, 128], strides = [1, 1]} : vector<16x128xf32> to vector<8x128xf32>
    %c0_9 = arith.constant 0 : index
    %c0_10 = arith.constant 0 : index
    %13 = vector.load %arg5[%c0_9, %c0_10] : memref<8x128xf32, #tpu.memory_space<vmem>>, vector<8x128xf32>
    tpu.vector_store %arg5[%c0_9, %c0_10], %12 {strides = array<i32>} : memref<8x128xf32, #tpu.memory_space<vmem>>, vector<8x128xf32>,
    %14 = vector.extract_strided_slice %11 {offsets = [8, 0], sizes = [8, 128], strides = [1, 1]} : vector<16x128xf32> to vector<8x128xf32>
    %cst_11 = arith.constant 0.000000e+00 : f32
    %15 = vector.broadcast %cst_11 : f32 to vector<8x128xf32>
    %16 = arith.maximumf %14, %15 : vector<8x128xf32>
    %17 = math.absf %14 : vector<8x128xf32>
    %cst_12 = arith.constant 0.000000e+00 : f32
    %18 = vector.broadcast %cst_12 : f32 to vector<8x128xf32>
    %19 = arith.subf %18, %17 : vector<8x128xf32>
    %20 = math.exp %19 : vector<8x128xf32>
    %cst_13 = arith.constant 1.000000e+00 : f32
    %21 = vector.broadcast %cst_13 : f32 to vector<8x128xf32>
    %22 = arith.addf %21, %20 : vector<8x128xf32>
    %23 = math.log %22 : vector<8x128xf32>
    %24 = arith.addf %16, %23 : vector<8x128xf32>
    %cst_14 = arith.constant 0.00999999977 : f32
    %25 = vector.broadcast %cst_14 : f32 to vector<8x128xf32>
    %26 = arith.addf %24, %25 : vector<8x128xf32>
    %c0_15 = arith.constant 0 : index
    %c0_16 = arith.constant 0 : index
    %27 = vector.load %arg6[%c0_15, %c0_16] : memref<8x128xf32, #tpu.memory_space<vmem>>, vector<8x128xf32>
    tpu.vector_store %arg6[%c0_15, %c0_16], %26 {strides = array<i32>} : memref<8x128xf32, #tpu.memory_space<vmem>>, vector<8x128xf32>,
    return
  }
}

module attributes {stable_mosaic.version = 11 : i64} {
  func.func @_filter_kernel(%arg0: i32, %arg1: memref<1x32x64xbf16, #tpu.memory_space<vmem>>, %arg2: memref<1x8x64xf32, #tpu.memory_space<vmem>>, %arg3: memref<1x8x64xf32, #tpu.memory_space<vmem>>, %arg4: memref<1x24x32xf32, #tpu.memory_space<vmem>>) attributes {dimension_semantics = [#tpu.dimension_semantics<parallel>], iteration_bounds = array<i64: 2>, scalar_prefetch = 0 : i64, scratch_operands = 0 : i64, tpu.core_type = #tpu.core_type<tc>, window_params = [{transform_indices = @transform_0, window_bounds = array<i64: 1, 32, 64>}, {transform_indices = @transform_1, window_bounds = array<i64: 1, 8, 64>}, {transform_indices = @transform_2, window_bounds = array<i64: 1, 8, 64>}, {transform_indices = @transform_3, window_bounds = array<i64: 1, 24, 32>}]} {
    %c0 = arith.constant 0 : index
    %c0_0 = arith.constant 0 : index
    %c0_1 = arith.constant 0 : index
    %0 = vector.load %arg1[%c0, %c0_0, %c0_1] : memref<1x32x64xbf16, #tpu.memory_space<vmem>>, vector<1x32x64xbf16>
    %1 = vector.shape_cast %0 : vector<1x32x64xbf16> to vector<32x64xbf16>
    %c0_2 = arith.constant 0 : index
    %c0_3 = arith.constant 0 : index
    %c0_4 = arith.constant 0 : index
    %2 = vector.load %arg2[%c0_2, %c0_3, %c0_4] : memref<1x8x64xf32, #tpu.memory_space<vmem>>, vector<1x8x64xf32>
    %3 = vector.shape_cast %2 : vector<1x8x64xf32> to vector<8x64xf32>
    %c0_5 = arith.constant 0 : index
    %c0_6 = arith.constant 0 : index
    %c0_7 = arith.constant 0 : index
    %4 = vector.load %arg3[%c0_5, %c0_6, %c0_7] : memref<1x8x64xf32, #tpu.memory_space<vmem>>, vector<1x8x64xf32>
    %5 = vector.shape_cast %4 : vector<1x8x64xf32> to vector<8x64xf32>
    %6 = arith.mulf %3, %5 : vector<8x64xf32>
    %7 = arith.truncf %6 : vector<8x64xf32> to vector<8x64xbf16>
    %cst = arith.constant dense<0.000000e+00> : vector<8x32xf32>
    %8 = tpu.matmul %7, %1, %cst {dimension_numbers = #tpu.dot_dimension_numbers<[1], [1], [0], [0], [0, 0, 1, 0], [], []>} : vector<8x64xbf16>, vector<32x64xbf16>, vector<8x32xf32> -> vector<8x32xf32>
    %cst_8 = arith.constant dense<0.000000e+00> : vector<8xf32>
    %9 = vector.multi_reduction <add>, %5, %cst_8 [1] : vector<8x64xf32> to vector<8xf32>
    %10 = vector.shape_cast %9 : vector<8xf32> to vector<8x1xf32>
    %cst_9 = arith.constant 9.99999997E-7 : f32
    %11 = vector.broadcast %cst_9 : f32 to vector<8x1xf32>
    %12 = arith.addf %10, %11 : vector<8x1xf32>
    %13 = vector.broadcast %12 : vector<8x1xf32> to vector<8x32xf32>
    %14 = arith.divf %8, %13 : vector<8x32xf32>
    %c0_10 = arith.constant 0 : index
    %c0_11 = arith.constant 0 : index
    %c0_12 = arith.constant 0 : index
    %15 = vector.load %arg4[%c0_10, %c0_11, %c0_12] : memref<1x24x32xf32, #tpu.memory_space<vmem>>, vector<1x8x32xf32>
    %16 = vector.shape_cast %15 : vector<1x8x32xf32> to vector<8x32xf32>
    %17 = vector.shape_cast %14 : vector<8x32xf32> to vector<1x8x32xf32>
    tpu.vector_store %arg4[%c0_10, %c0_11, %c0_12], %17 {strides = array<i32>} : memref<1x24x32xf32, #tpu.memory_space<vmem>>, vector<1x8x32xf32>,
    %18 = arith.truncf %14 : vector<8x32xf32> to vector<8x32xbf16>
    %cst_13 = arith.constant dense<0.000000e+00> : vector<8x64xf32>
    %19 = tpu.matmul %18, %1, %cst_13 {dimension_numbers = #tpu.dot_dimension_numbers<[1], [0], [0], [1], [0, 0, 1, 1], [], []>} : vector<8x32xbf16>, vector<32x64xbf16>, vector<8x64xf32> -> vector<8x64xf32>
    %20 = arith.subf %19, %3 : vector<8x64xf32>
    %21 = arith.mulf %5, %20 : vector<8x64xf32>
    %22 = arith.truncf %21 : vector<8x64xf32> to vector<8x64xbf16>
    %cst_14 = arith.constant dense<0.000000e+00> : vector<8x32xf32>
    %23 = tpu.matmul %22, %1, %cst_14 {dimension_numbers = #tpu.dot_dimension_numbers<[1], [1], [0], [0], [0, 0, 1, 0], [], []>} : vector<8x64xbf16>, vector<32x64xbf16>, vector<8x32xf32> -> vector<8x32xf32>
    %cst_15 = arith.constant 1.000000e-01 : f32
    %24 = vector.broadcast %cst_15 : f32 to vector<8x32xf32>
    %25 = arith.mulf %24, %14 : vector<8x32xf32>
    %26 = arith.addf %23, %25 : vector<8x32xf32>
    %27 = arith.truncf %26 : vector<8x32xf32> to vector<8x32xbf16>
    %cst_16 = arith.constant dense<0.000000e+00> : vector<8x64xf32>
    %28 = tpu.matmul %27, %1, %cst_16 {dimension_numbers = #tpu.dot_dimension_numbers<[1], [0], [0], [1], [0, 0, 1, 1], [], []>} : vector<8x32xbf16>, vector<32x64xbf16>, vector<8x64xf32> -> vector<8x64xf32>
    %29 = arith.mulf %26, %26 : vector<8x32xf32>
    %30 = vector.shape_cast %29 : vector<8x32xf32> to vector<1x8x32xf32>
    %cst_17 = arith.constant dense<0.000000e+00> : vector<1xf32>
    %31 = vector.multi_reduction <add>, %30, %cst_17 [1, 2] : vector<1x8x32xf32> to vector<1xf32>
    %32 = vector.shape_cast %31 : vector<1xf32> to vector<1x1x1xf32>
    %33 = vector.extract %32[0, 0, 0] : f32 from vector<1x1x1xf32>
    %34 = arith.mulf %5, %28 : vector<8x64xf32>
    %35 = arith.mulf %34, %28 : vector<8x64xf32>
    %36 = vector.shape_cast %35 : vector<8x64xf32> to vector<1x8x64xf32>
    %cst_18 = arith.constant dense<0.000000e+00> : vector<1xf32>
    %37 = vector.multi_reduction <add>, %36, %cst_18 [1, 2] : vector<1x8x64xf32> to vector<1xf32>
    %38 = vector.shape_cast %37 : vector<1xf32> to vector<1x1x1xf32>
    %39 = vector.extract %38[0, 0, 0] : f32 from vector<1x1x1xf32>
    %cst_19 = arith.constant 1.000000e-01 : f32
    %40 = arith.mulf %cst_19, %33 : f32
    %41 = arith.addf %39, %40 : f32
    %cst_20 = arith.constant 9.99999993E-9 : f32
    %42 = arith.addf %41, %cst_20 : f32
    %43 = arith.divf %33, %42 : f32
    %44 = vector.broadcast %43 : f32 to vector<8x32xf32>
    %45 = arith.mulf %44, %26 : vector<8x32xf32>
    %46 = arith.subf %14, %45 : vector<8x32xf32>
    %c0_21 = arith.constant 0 : index
    %c8 = arith.constant 8 : index
    %c0_22 = arith.constant 0 : index
    %47 = vector.load %arg4[%c0_21, %c8, %c0_22] : memref<1x24x32xf32, #tpu.memory_space<vmem>>, vector<1x8x32xf32>
    %48 = vector.shape_cast %47 : vector<1x8x32xf32> to vector<8x32xf32>
    %49 = vector.shape_cast %46 : vector<8x32xf32> to vector<1x8x32xf32>
    tpu.vector_store %arg4[%c0_21, %c8, %c0_22], %49 {strides = array<i32>} : memref<1x24x32xf32, #tpu.memory_space<vmem>>, vector<1x8x32xf32>,
    %50 = arith.truncf %46 : vector<8x32xf32> to vector<8x32xbf16>
    %cst_23 = arith.constant dense<0.000000e+00> : vector<8x64xf32>
    %51 = tpu.matmul %50, %1, %cst_23 {dimension_numbers = #tpu.dot_dimension_numbers<[1], [0], [0], [1], [0, 0, 1, 1], [], []>} : vector<8x32xbf16>, vector<32x64xbf16>, vector<8x64xf32> -> vector<8x64xf32>
    %52 = arith.subf %51, %3 : vector<8x64xf32>
    %53 = arith.mulf %5, %52 : vector<8x64xf32>
    %54 = arith.truncf %53 : vector<8x64xf32> to vector<8x64xbf16>
    %cst_24 = arith.constant dense<0.000000e+00> : vector<8x32xf32>
    %55 = tpu.matmul %54, %1, %cst_24 {dimension_numbers = #tpu.dot_dimension_numbers<[1], [1], [0], [0], [0, 0, 1, 0], [], []>} : vector<8x64xbf16>, vector<32x64xbf16>, vector<8x32xf32> -> vector<8x32xf32>
    %cst_25 = arith.constant 1.000000e-01 : f32
    %56 = vector.broadcast %cst_25 : f32 to vector<8x32xf32>
    %57 = arith.mulf %56, %46 : vector<8x32xf32>
    %58 = arith.addf %55, %57 : vector<8x32xf32>
    %59 = arith.truncf %58 : vector<8x32xf32> to vector<8x32xbf16>
    %cst_26 = arith.constant dense<0.000000e+00> : vector<8x64xf32>
    %60 = tpu.matmul %59, %1, %cst_26 {dimension_numbers = #tpu.dot_dimension_numbers<[1], [0], [0], [1], [0, 0, 1, 1], [], []>} : vector<8x32xbf16>, vector<32x64xbf16>, vector<8x64xf32> -> vector<8x64xf32>
    %61 = arith.mulf %58, %58 : vector<8x32xf32>
    %62 = vector.shape_cast %61 : vector<8x32xf32> to vector<1x8x32xf32>
    %cst_27 = arith.constant dense<0.000000e+00> : vector<1xf32>
    %63 = vector.multi_reduction <add>, %62, %cst_27 [1, 2] : vector<1x8x32xf32> to vector<1xf32>
    %64 = vector.shape_cast %63 : vector<1xf32> to vector<1x1x1xf32>
    %65 = vector.extract %64[0, 0, 0] : f32 from vector<1x1x1xf32>
    %66 = arith.mulf %5, %60 : vector<8x64xf32>
    %67 = arith.mulf %66, %60 : vector<8x64xf32>
    %68 = vector.shape_cast %67 : vector<8x64xf32> to vector<1x8x64xf32>
    %cst_28 = arith.constant dense<0.000000e+00> : vector<1xf32>
    %69 = vector.multi_reduction <add>, %68, %cst_28 [1, 2] : vector<1x8x64xf32> to vector<1xf32>
    %70 = vector.shape_cast %69 : vector<1xf32> to vector<1x1x1xf32>
    %71 = vector.extract %70[0, 0, 0] : f32 from vector<1x1x1xf32>
    %cst_29 = arith.constant 1.000000e-01 : f32
    %72 = arith.mulf %cst_29, %65 : f32
    %73 = arith.addf %71, %72 : f32
    %cst_30 = arith.constant 9.99999993E-9 : f32
    %74 = arith.addf %73, %cst_30 : f32
    %75 = arith.divf %65, %74 : f32
    %76 = vector.broadcast %75 : f32 to vector<8x32xf32>
    %77 = arith.mulf %76, %58 : vector<8x32xf32>
    %78 = arith.subf %46, %77 : vector<8x32xf32>
    %c0_31 = arith.constant 0 : index
    %c16 = arith.constant 16 : index
    %c0_32 = arith.constant 0 : index
    %79 = vector.load %arg4[%c0_31, %c16, %c0_32] : memref<1x24x32xf32, #tpu.memory_space<vmem>>, vector<1x8x32xf32>
    %80 = vector.shape_cast %79 : vector<1x8x32xf32> to vector<8x32xf32>
    %81 = vector.shape_cast %78 : vector<8x32xf32> to vector<1x8x32xf32>
    tpu.vector_store %arg4[%c0_31, %c16, %c0_32], %81 {strides = array<i32>} : memref<1x24x32xf32, #tpu.memory_space<vmem>>, vector<1x8x32xf32>,
    return
  }
  func.func @transform_0(%arg0: i32) -> (i32, i32, i32) {
    %c0_i32 = arith.constant 0 : i32
    %c0_i32_0 = arith.constant 0 : i32
    %c0_i32_1 = arith.constant 0 : i32
    return %arg0, %c0_i32, %c0_i32_0 : i32, i32, i32
  }
  func.func @transform_1(%arg0: i32) -> (i32, i32, i32) {
    %c0_i32 = arith.constant 0 : i32
    %c0_i32_0 = arith.constant 0 : i32
    %c0_i32_1 = arith.constant 0 : i32
    return %arg0, %c0_i32, %c0_i32_0 : i32, i32, i32
  }
  func.func @transform_2(%arg0: i32) -> (i32, i32, i32) {
    %c0_i32 = arith.constant 0 : i32
    %c0_i32_0 = arith.constant 0 : i32
    %c0_i32_1 = arith.constant 0 : i32
    return %arg0, %c0_i32, %c0_i32_0 : i32, i32, i32
  }
  func.func @transform_3(%arg0: i32) -> (i32, i32, i32) {
    %c0_i32 = arith.constant 0 : i32
    %c0_i32_0 = arith.constant 0 : i32
    %c0_i32_1 = arith.constant 0 : i32
    return %arg0, %c0_i32, %c0_i32_0 : i32, i32, i32
  }
}

module attributes {stable_mosaic.version = 11 : i64} {
  func.func @_classify_kernel(%arg0: i32, %arg1: memref<1x24x32xf32, #tpu.memory_space<vmem>>, %arg2: memref<1x32x64xbf16, #tpu.memory_space<vmem>>, %arg3: memref<1x24x64xf32, #tpu.memory_space<vmem>>) attributes {dimension_semantics = [#tpu.dimension_semantics<parallel>], iteration_bounds = array<i64: 2>, scalar_prefetch = 0 : i64, scratch_operands = 0 : i64, tpu.core_type = #tpu.core_type<tc>, window_params = [{transform_indices = @transform_0, window_bounds = array<i64: 1, 24, 32>}, {transform_indices = @transform_1, window_bounds = array<i64: 1, 32, 64>}, {transform_indices = @transform_2, window_bounds = array<i64: 1, 24, 64>}]} {
    %c0 = arith.constant 0 : index
    %c0_0 = arith.constant 0 : index
    %c0_1 = arith.constant 0 : index
    %0 = vector.load %arg1[%c0, %c0_0, %c0_1] : memref<1x24x32xf32, #tpu.memory_space<vmem>>, vector<1x24x32xf32>
    %1 = vector.shape_cast %0 : vector<1x24x32xf32> to vector<24x32xf32>
    %c0_2 = arith.constant 0 : index
    %c0_3 = arith.constant 0 : index
    %c0_4 = arith.constant 0 : index
    %2 = vector.load %arg2[%c0_2, %c0_3, %c0_4] : memref<1x32x64xbf16, #tpu.memory_space<vmem>>, vector<1x32x64xbf16>
    %3 = vector.shape_cast %2 : vector<1x32x64xbf16> to vector<32x64xbf16>
    %4 = arith.truncf %1 : vector<24x32xf32> to vector<24x32xbf16>
    %cst = arith.constant dense<0.000000e+00> : vector<24x64xf32>
    %5 = tpu.matmul %4, %3, %cst {dimension_numbers = #tpu.dot_dimension_numbers<[1], [0], [0], [1], [0, 0, 1, 1], [], []>} : vector<24x32xbf16>, vector<32x64xbf16>, vector<24x64xf32> -> vector<24x64xf32>
    %c0_5 = arith.constant 0 : index
    %c0_6 = arith.constant 0 : index
    %c0_7 = arith.constant 0 : index
    %6 = vector.load %arg3[%c0_5, %c0_6, %c0_7] : memref<1x24x64xf32, #tpu.memory_space<vmem>>, vector<1x24x64xf32>
    %7 = vector.shape_cast %6 : vector<1x24x64xf32> to vector<24x64xf32>
    %8 = vector.shape_cast %5 : vector<24x64xf32> to vector<1x24x64xf32>
    tpu.vector_store %arg3[%c0_5, %c0_6, %c0_7], %8 {strides = array<i32>} : memref<1x24x64xf32, #tpu.memory_space<vmem>>, vector<1x24x64xf32>,
    return
  }
  func.func @transform_0(%arg0: i32) -> (i32, i32, i32) {
    %c0_i32 = arith.constant 0 : i32
    %c0_i32_0 = arith.constant 0 : i32
    %c0_i32_1 = arith.constant 0 : i32
    return %arg0, %c0_i32, %c0_i32_0 : i32, i32, i32
  }
  func.func @transform_1(%arg0: i32) -> (i32, i32, i32) {
    %c0_i32 = arith.constant 0 : i32
    %c0_i32_0 = arith.constant 0 : i32
    %c0_i32_1 = arith.constant 0 : i32
    return %arg0, %c0_i32, %c0_i32_0 : i32, i32, i32
  }
  func.func @transform_2(%arg0: i32) -> (i32, i32, i32) {
    %c0_i32 = arith.constant 0 : i32
    %c0_i32_0 = arith.constant 0 : i32
    %c0_i32_1 = arith.constant 0 : i32
    return %arg0, %c0_i32, %c0_i32_0 : i32, i32, i32
  }
}

module attributes {stable_mosaic.version = 11 : i64} {
  func.func @_label_encode_kernel(%arg0: memref<32x128xbf16, #tpu.memory_space<vmem>>, %arg1: memref<1x128xf32, #tpu.memory_space<vmem>>, %arg2: memref<16x32xbf16, #tpu.memory_space<vmem>>, %arg3: memref<16x1xf32, #tpu.memory_space<vmem>>, %arg4: memref<16x1xf32, #tpu.memory_space<vmem>>, %arg5: memref<8x128xf32, #tpu.memory_space<vmem>>, %arg6: memref<8x128xf32, #tpu.memory_space<vmem>>) attributes {dimension_semantics = [], scalar_prefetch = 0 : i64, scratch_operands = 0 : i64, tpu.core_type = #tpu.core_type<tc>} {
    %c0 = arith.constant 0 : index
    %c0_0 = arith.constant 0 : index
    %0 = vector.load %arg2[%c0, %c0_0] : memref<16x32xbf16, #tpu.memory_space<vmem>>, vector<16x32xbf16>
    %c0_1 = arith.constant 0 : index
    %c0_2 = arith.constant 0 : index
    %1 = vector.load %arg0[%c0_1, %c0_2] : memref<32x128xbf16, #tpu.memory_space<vmem>>, vector<32x128xbf16>
    %cst = arith.constant dense<0.000000e+00> : vector<16x128xf32>
    %2 = tpu.matmul %0, %1, %cst {dimension_numbers = #tpu.dot_dimension_numbers<[1], [0], [0], [1], [0, 0, 1, 1], [], []>} : vector<16x32xbf16>, vector<32x128xbf16>, vector<16x128xf32> -> vector<16x128xf32>
    %c0_3 = arith.constant 0 : index
    %c0_4 = arith.constant 0 : index
    %3 = vector.load %arg3[%c0_3, %c0_4] : memref<16x1xf32, #tpu.memory_space<vmem>>, vector<16x1xf32>
    %c0_5 = arith.constant 0 : index
    %c0_6 = arith.constant 0 : index
    %4 = vector.load %arg1[%c0_5, %c0_6] : memref<1x128xf32, #tpu.memory_space<vmem>>, vector<1x128xf32>
    %5 = vector.broadcast %3 : vector<16x1xf32> to vector<16x128xf32>
    %6 = vector.broadcast %4 : vector<1x128xf32> to vector<16x128xf32>
    %7 = arith.mulf %5, %6 : vector<16x128xf32>
    %8 = arith.addf %2, %7 : vector<16x128xf32>
    %c0_7 = arith.constant 0 : index
    %c0_8 = arith.constant 0 : index
    %9 = vector.load %arg4[%c0_7, %c0_8] : memref<16x1xf32, #tpu.memory_space<vmem>>, vector<16x1xf32>
    %10 = vector.broadcast %9 : vector<16x1xf32> to vector<16x128xf32>
    %11 = arith.addf %8, %10 : vector<16x128xf32>
    %12 = vector.extract_strided_slice %11 {offsets = [0, 0], sizes = [8, 128], strides = [1, 1]} : vector<16x128xf32> to vector<8x128xf32>
    %c0_9 = arith.constant 0 : index
    %c0_10 = arith.constant 0 : index
    %13 = vector.load %arg5[%c0_9, %c0_10] : memref<8x128xf32, #tpu.memory_space<vmem>>, vector<8x128xf32>
    tpu.vector_store %arg5[%c0_9, %c0_10], %12 {strides = array<i32>} : memref<8x128xf32, #tpu.memory_space<vmem>>, vector<8x128xf32>,
    %14 = vector.extract_strided_slice %11 {offsets = [8, 0], sizes = [8, 128], strides = [1, 1]} : vector<16x128xf32> to vector<8x128xf32>
    %cst_11 = arith.constant 0.000000e+00 : f32
    %15 = vector.broadcast %cst_11 : f32 to vector<8x128xf32>
    %16 = arith.maximumf %14, %15 : vector<8x128xf32>
    %17 = math.absf %14 : vector<8x128xf32>
    %cst_12 = arith.constant 0.000000e+00 : f32
    %18 = vector.broadcast %cst_12 : f32 to vector<8x128xf32>
    %19 = arith.subf %18, %17 : vector<8x128xf32>
    %20 = math.exp %19 : vector<8x128xf32>
    %cst_13 = arith.constant 1.000000e+00 : f32
    %21 = vector.broadcast %cst_13 : f32 to vector<8x128xf32>
    %22 = arith.addf %21, %20 : vector<8x128xf32>
    %23 = math.log %22 : vector<8x128xf32>
    %24 = arith.addf %16, %23 : vector<8x128xf32>
    %cst_14 = arith.constant 0.00999999977 : f32
    %25 = vector.broadcast %cst_14 : f32 to vector<8x128xf32>
    %26 = arith.addf %24, %25 : vector<8x128xf32>
    %c0_15 = arith.constant 0 : index
    %c0_16 = arith.constant 0 : index
    %27 = vector.load %arg6[%c0_15, %c0_16] : memref<8x128xf32, #tpu.memory_space<vmem>>, vector<8x128xf32>
    tpu.vector_store %arg6[%c0_15, %c0_16], %26 {strides = array<i32>} : memref<8x128xf32, #tpu.memory_space<vmem>>, vector<8x128xf32>,
    return
  }
}

</mosaic_0001>

<llo_original>
// kernel: lwtl_box_net_forward.9
$region0: #{lwtl_box_net_forward.9}
  #allocation0 [shape = 'u32[]', space=smem, size = 0x4, offset = 0x4, fixed_abs, tag = 'smem constant byte address 0x4 - core index']
  #allocation1 [shape = 'u32[144,128]{1,0:T(1,128)}', space=vmem, size = 0x12000, scoped, tag = 'internal scratch']
  %s0 = inlined_call_operand.vmem [shape: bf16[768,128], index: 0, kind: input, shape index: {}]
  %s1 = inlined_call_operand.vmem [shape: bf16[32,768], index: 1, kind: input, shape index: {}]
  %s2 = inlined_call_operand.vmem [shape: f32[32,1], index: 2, kind: input, shape index: {}]
  %s3 = inlined_call_operand.vmem [shape: bf16[32,32], index: 3, kind: input, shape index: {}]
  %s4 = inlined_call_operand.vmem [shape: f32[32,1], index: 4, kind: input, shape index: {}]
  %s5 = inlined_call_operand.hbm [shape: bf16[32,128], index: 5, kind: output, shape index: {0}]
  %s6 = inlined_call_operand.vmem [shape: bf16[32,128], index: 6, kind: output, shape index: {1}]
  %7 = xla_tuple %s5, %s6
  %s8 = sld [smem:[#allocation0]]
  $region38: #{lwtl_box_net_forward.9} parent=0
    _
  %s10 = ssub.s32 1, %s8
  %s11 = scalar_select 0, %s10, %s8
  $region1: #{lwtl_box_net_forward.9} parent=0
    #allocation2 [shape = 'u8[8192]{0}', space=vmem, size = 0x2000, scoped, tag = 'output window, operand 0, single buffered']
    #allocation3 [shape = 's32[1]{0}', space=sflag, size = 0x4, scoped, tag = 'scoped memory for lwtl_box_net_forward.9']
    %12 = vsyncpa [#allocation3], 0
    // Predicated region
    $region2: #{lwtl_box_net_forward.9} parent=1 // pred_check
      _
    $region3: #{lwtl_box_net_forward.9} parent=1 // pred_check_branch
      %14 = sbr.rel (0) target = $region5
    $region4: #{lwtl_box_net_forward.9} parent=1 // pred_region
      _
    $region5: #{lwtl_box_net_forward.9} parent=1 // pred_fallthru
      _
    // Predicated region
    $region6: #{lwtl_box_net_forward.9} parent=1 // pred_check
      _
    $region7: #{lwtl_box_net_forward.9} parent=1 // pred_check_branch
      %16 = sbr.rel (0) target = $region9
    $region8: #{lwtl_box_net_forward.9} parent=1 // pred_region
      _
    $region9: #{lwtl_box_net_forward.9} parent=1 // pred_fallthru
      _
    // Predicated region
    $region10: #{lwtl_box_net_forward.9} parent=1 // pred_check
      _
    $region11: #{lwtl_box_net_forward.9} parent=1 // pred_check_branch
      %18 = sbr.rel (0) target = $region13
    $region12: #{lwtl_box_net_forward.9} parent=1 // pred_region
      _
    $region13: #{lwtl_box_net_forward.9} parent=1 // pred_fallthru
      _
    // Predicated region
    $region14: #{lwtl_box_net_forward.9} parent=1 // pred_check
      _
    $region15: #{lwtl_box_net_forward.9} parent=1 // pred_check_branch
      %20 = sbr.rel (0) target = $region17
    $region16: #{lwtl_box_net_forward.9} parent=1 // pred_region
      _
    $region17: #{lwtl_box_net_forward.9} parent=1 // pred_fallthru
      _
    // Predicated region
    $region18: #{lwtl_box_net_forward.9} parent=1 // pred_check
      _
    $region19: #{lwtl_box_net_forward.9} parent=1 // pred_check_branch
      %22 = sbr.rel (0) target = $region21
    $region20: #{lwtl_box_net_forward.9} parent=1 // pred_region
      _
    $region21: #{lwtl_box_net_forward.9} parent=1 // pred_fallthru
      _
    %v24 = vld [vmem:[%s1] sm:$0xff]
    %v25 = vld [vmem:[%s1 + $0x8] sm:$0xff]
    %v26 = vld [vmem:[%s1 + $0x10] sm:$0xff]
    %v27 = vld [vmem:[%s1 + $0x18] sm:$0xff]
    %v28 = vld [vmem:[%s1 + $0x20] sm:$0xff]
    %v29 = vld [vmem:[%s1 + $0x28] sm:$0xff]
    %v30 = vld [vmem:[%s1 + $0x30] sm:$0xff]
    %v31 = vld [vmem:[%s1 + $0x38] sm:$0xff]
    %v32 = vld [vmem:[%s1 + $0x40] sm:$0xff]
    %v33 = vld [vmem:[%s1 + $0x48] sm:$0xff]
    %v34 = vld [vmem:[%s1 + $0x50] sm:$0xff]
    %v35 = vld [vmem:[%s1 + $0x58] sm:$0xff]
    %v36 = vld [vmem:[%s0] sm:$0xf]
    %v37 = vld [vmem:[%s0 + $0x4] sm:$0xf]
    %v38 = vld [vmem:[%s0 + $0x8] sm:$0xf]
    %v39 = vld [vmem:[%s0 + $0xc] sm:$0xf]
    %v40 = vld [vmem:[%s0 + $0x10] sm:$0xf]
    %v41 = vld [vmem:[%s0 + $0x14] sm:$0xf]
    %v42 = vld [vmem:[%s0 + $0x18] sm:$0xf]
    %v43 = vld [vmem:[%s0 + $0x1c] sm:$0xf]
    %v44 = vld [vmem:[%s0 + $0x20] sm:$0xf]
    %v45 = vld [vmem:[%s0 + $0x24] sm:$0xf]
    %v46 = vld [vmem:[%s0 + $0x28] sm:$0xf]
    %v47 = vld [vmem:[%s0 + $0x2c] sm:$0xf]
    %v48 = vld [vmem:[%s0 + $0x30] sm:$0xf]
    %v49 = vld [vmem:[%s0 + $0x34] sm:$0xf]
    %v50 = vld [vmem:[%s0 + $0x38] sm:$0xf]
    %v51 = vld [vmem:[%s0 + $0x3c] sm:$0xf]
    %v52 = vld [vmem:[%s0 + $0x40] sm:$0xf]
    %v53 = vld [vmem:[%s0 + $0x44] sm:$0xf]
    %v54 = vld [vmem:[%s0 + $0x48] sm:$0xf]
    %v55 = vld [vmem:[%s0 + $0x4c] sm:$0xf]
    %v56 = vld [vmem:[%s0 + $0x50] sm:$0xf]
    %v57 = vld [vmem:[%s0 + $0x54] sm:$0xf]
    %v58 = vld [vmem:[%s0 + $0x58] sm:$0xf]
    %v59 = vld [vmem:[%s0 + $0x5c] sm:$0xf]
    %v60 = vld [vmem:[%s0 + $0x60] sm:$0xf]
    %v61 = vld [vmem:[%s0 + $0x64] sm:$0xf]
    %v62 = vld [vmem:[%s0 + $0x68] sm:$0xf]
    %v63 = vld [vmem:[%s0 + $0x6c] sm:$0xf]
    %v64 = vld [vmem:[%s0 + $0x70] sm:$0xf]
    %v65 = vld [vmem:[%s0 + $0x74] sm:$0xf]
    %v66 = vld [vmem:[%s0 + $0x78] sm:$0xf]
    %v67 = vld [vmem:[%s0 + $0x7c] sm:$0xf]
    %v68 = vld [vmem:[%s0 + $0x80] sm:$0xf]
    %v69 = vld [vmem:[%s0 + $0x84] sm:$0xf]
    %v70 = vld [vmem:[%s0 + $0x88] sm:$0xf]
    %v71 = vld [vmem:[%s0 + $0x8c] sm:$0xf]
    %v72 = vld [vmem:[%s0 + $0x90] sm:$0xf]
    %v73 = vld [vmem:[%s0 + $0x94] sm:$0xf]
    %v74 = vld [vmem:[%s0 + $0x98] sm:$0xf]
    %v75 = vld [vmem:[%s0 + $0x9c] sm:$0xf]
    %v76 = vld [vmem:[%s0 + $0xa0] sm:$0xf]
    %v77 = vld [vmem:[%s0 + $0xa4] sm:$0xf]
    %v78 = vld [vmem:[%s0 + $0xa8] sm:$0xf]
    %v79 = vld [vmem:[%s0 + $0xac] sm:$0xf]
    %v80 = vld [vmem:[%s0 + $0xb0] sm:$0xf]
    %v81 = vld [vmem:[%s0 + $0xb4] sm:$0xf]
    %v82 = vld [vmem:[%s0 + $0xb8] sm:$0xf]
    %v83 = vld [vmem:[%s0 + $0xbc] sm:$0xf]
    %v84 = vld [vmem:[%s0 + $0xc0] sm:$0xf]
    %v85 = vld [vmem:[%s0 + $0xc4] sm:$0xf]
    %v86 = vld [vmem:[%s0 + $0xc8] sm:$0xf]
    %v87 = vld [vmem:[%s0 + $0xcc] sm:$0xf]
    %v88 = vld [vmem:[%s0 + $0xd0] sm:$0xf]
    %v89 = vld [vmem:[%s0 + $0xd4] sm:$0xf]
    %v90 = vld [vmem:[%s0 + $0xd8] sm:$0xf]
    %v91 = vld [vmem:[%s0 + $0xdc] sm:$0xf]
    %v92 = vld [vmem:[%s0 + $0xe0] sm:$0xf]
    %v93 = vld [vmem:[%s0 + $0xe4] sm:$0xf]
    %v94 = vld [vmem:[%s0 + $0xe8] sm:$0xf]
    %v95 = vld [vmem:[%s0 + $0xec] sm:$0xf]
    %v96 = vld [vmem:[%s0 + $0xf0] sm:$0xf]
    %v97 = vld [vmem:[%s0 + $0xf4] sm:$0xf]
    %v98 = vld [vmem:[%s0 + $0xf8] sm:$0xf]
    %v99 = vld [vmem:[%s0 + $0xfc] sm:$0xf]
    %v100 = vld [vmem:[%s0 + $0x100] sm:$0xf]
    %v101 = vld [vmem:[%s0 + $0x104] sm:$0xf]
    %v102 = vld [vmem:[%s0 + $0x108] sm:$0xf]
    %v103 = vld [vmem:[%s0 + $0x10c] sm:$0xf]
    %v104 = vld [vmem:[%s0 + $0x110] sm:$0xf]
    %v105 = vld [vmem:[%s0 + $0x114] sm:$0xf]
    %v106 = vld [vmem:[%s0 + $0x118] sm:$0xf]
    %v107 = vld [vmem:[%s0 + $0x11c] sm:$0xf]
    %v108 = vld [vmem:[%s0 + $0x120] sm:$0xf]
    %v109 = vld [vmem:[%s0 + $0x124] sm:$0xf]
    %v110 = vld [vmem:[%s0 + $0x128] sm:$0xf]
    %v111 = vld [vmem:[%s0 + $0x12c] sm:$0xf]
    %v112 = vld [vmem:[%s0 + $0x130] sm:$0xf]
    %v113 = vld [vmem:[%s0 + $0x134] sm:$0xf]
    %v114 = vld [vmem:[%s0 + $0x138] sm:$0xf]
    %v115 = vld [vmem:[%s0 + $0x13c] sm:$0xf]
    %v116 = vld [vmem:[%s0 + $0x140] sm:$0xf]
    %v117 = vld [vmem:[%s0 + $0x144] sm:$0xf]
    %v118 = vld [vmem:[%s0 + $0x148] sm:$0xf]
    %v119 = vld [vmem:[%s0 + $0x14c] sm:$0xf]
    %v120 = vld [vmem:[%s0 + $0x150] sm:$0xf]
    %v121 = vld [vmem:[%s0 + $0x154] sm:$0xf]
    %v122 = vld [vmem:[%s0 + $0x158] sm:$0xf]
    %v123 = vld [vmem:[%s0 + $0x15c] sm:$0xf]
    %v124 = vld [vmem:[%s0 + $0x160] sm:$0xf]
    %v125 = vld [vmem:[%s0 + $0x164] sm:$0xf]
    %v126 = vld [vmem:[%s0 + $0x168] sm:$0xf]
    %v127 = vld [vmem:[%s0 + $0x16c] sm:$0xf]
    %v128 = vld [vmem:[%s0 + $0x170] sm:$0xf]
    %v129 = vld [vmem:[%s0 + $0x174] sm:$0xf]
    %v130 = vld [vmem:[%s0 + $0x178] sm:$0xf]
    %v131 = vld [vmem:[%s0 + $0x17c] sm:$0xf]
    %v132 = vld [vmem:[%s2] sm:$0xff]
    %v133 = vld [vmem:[%s2 + $0x8] sm:$0xff]
    %v134 = vld [vmem:[%s2 + $0x10] sm:$0xff]
    %v135 = vld [vmem:[%s2 + $0x18] sm:$0xff]
    %137 = vset.pattern.permute.xlu0 0
    %138 = vperm.xlu0 %137, %v132
    %v139 = vpop.permute.xlu0 %138
    %142 = vset.pattern.permute.xlu0 0
    %143 = vperm.xlu0 %142, %v133
    %v144 = vpop.permute.xlu0 %143
    %147 = vset.pattern.permute.xlu0 0
    %148 = vperm.xlu0 %147, %v134
    %v149 = vpop.permute.xlu0 %148
    %152 = vset.pattern.permute.xlu0 0
    %153 = vperm.xlu0 %152, %v135
    %v154 = vpop.permute.xlu0 %153
    %v168 = vunpack.c.l.b16 %v24
    %v169 = vunpack.c.h.b16 %v24
    %v170 = vunpack.c.l.b16 %v25
    %v171 = vunpack.c.h.b16 %v25
    %v172 = vunpack.c.l.b16 %v26
    %v173 = vunpack.c.h.b16 %v26
    %v174 = vunpack.c.l.b16 %v27
    %v175 = vunpack.c.h.b16 %v27
    %v176 = vunpack.c.l.b16 %v28
    %v177 = vunpack.c.h.b16 %v28
    %v178 = vunpack.c.l.b16 %v29
    %v179 = vunpack.c.h.b16 %v29
    %v180 = vunpack.c.l.b16 %v30
    %v181 = vunpack.c.h.b16 %v30
    %v182 = vunpack.c.l.b16 %v31
    %v183 = vunpack.c.h.b16 %v31
    %v184 = vunpack.c.l.b16 %v32
    %v185 = vunpack.c.h.b16 %v32
    %v186 = vunpack.c.l.b16 %v33
    %v187 = vunpack.c.h.b16 %v33
    %v188 = vunpack.c.l.b16 %v34
    %v189 = vunpack.c.h.b16 %v34
    %v190 = vunpack.c.l.b16 %v35
    %v191 = vunpack.c.h.b16 %v35
    %v192 = vpack.c.b16 %v174, %v168
    %v193 = vpack.c.b16 %v175, %v169
    %v194 = vpack.c.b16 %v176, %v170
    %v195 = vpack.c.b16 %v177, %v171
    %v196 = vpack.c.b16 %v178, %v172
    %v197 = vpack.c.b16 %v179, %v173
    %v198 = vpack.c.b16 %v186, %v180
    %v199 = vpack.c.b16 %v187, %v181
    %v200 = vpack.c.b16 %v188, %v182
    %v201 = vpack.c.b16 %v189, %v183
    %v202 = vpack.c.b16 %v190, %v184
    %v203 = vpack.c.b16 %v191, %v185
    %v312 = vunpack.c.l.b16 %v36
    %v313 = vunpack.c.l.b16 %v37
    %v314 = vunpack.c.l.b16 %v38
    %v315 = vunpack.c.l.b16 %v39
    %v316 = vunpack.c.l.b16 %v40
    %v317 = vunpack.c.l.b16 %v41
    %v318 = vunpack.c.l.b16 %v42
    %v319 = vunpack.c.l.b16 %v43
    %v320 = vunpack.c.l.b16 %v44
    %v321 = vunpack.c.l.b16 %v45
    %v322 = vunpack.c.l.b16 %v46
    %v323 = vunpack.c.l.b16 %v47
    %v324 = vunpack.c.l.b16 %v48
    %v325 = vunpack.c.l.b16 %v49
    %v326 = vunpack.c.l.b16 %v50
    %v327 = vunpack.c.l.b16 %v51
    %v328 = vunpack.c.l.b16 %v52
    %v329 = vunpack.c.l.b16 %v53
    %v330 = vunpack.c.l.b16 %v54
    %v331 = vunpack.c.l.b16 %v55
    %v332 = vunpack.c.l.b16 %v56
    %v333 = vunpack.c.l.b16 %v57
    %v334 = vunpack.c.l.b16 %v58
    %v335 = vunpack.c.l.b16 %v59
    %v336 = vunpack.c.l.b16 %v60
    %v337 = vunpack.c.l.b16 %v61
    %v338 = vunpack.c.l.b16 %v62
    %v339 = vunpack.c.l.b16 %v63
    %v340 = vunpack.c.l.b16 %v64
    %v341 = vunpack.c.l.b16 %v65
    %v342 = vunpack.c.l.b16 %v66
    %v343 = vunpack.c.l.b16 %v67
    %v344 = vunpack.c.l.b16 %v68
    %v345 = vunpack.c.l.b16 %v69
    %v346 = vunpack.c.l.b16 %v70
    %v347 = vunpack.c.l.b16 %v71
    %v348 = vunpack.c.l.b16 %v72
    %v349 = vunpack.c.l.b16 %v73
    %v350 = vunpack.c.l.b16 %v74
    %v351 = vunpack.c.l.b16 %v75
    %v352 = vunpack.c.l.b16 %v76
    %v353 = vunpack.c.l.b16 %v77
    %v354 = vunpack.c.l.b16 %v78
    %v355 = vunpack.c.l.b16 %v79
    %v356 = vunpack.c.l.b16 %v80
    %v357 = vunpack.c.l.b16 %v81
    %v358 = vunpack.c.l.b16 %v82
    %v359 = vunpack.c.l.b16 %v83
    %v360 = vunpack.c.l.b16 %v84
    %v361 = vunpack.c.l.b16 %v85
    %v362 = vunpack.c.l.b16 %v86
    %v363 = vunpack.c.l.b16 %v87
    %v364 = vunpack.c.l.b16 %v88
    %v365 = vunpack.c.l.b16 %v89
    %v366 = vunpack.c.l.b16 %v90
    %v367 = vunpack.c.l.b16 %v91
    %v368 = vunpack.c.l.b16 %v92
    %v369 = vunpack.c.l.b16 %v93
    %v370 = vunpack.c.l.b16 %v94
    %v371 = vunpack.c.l.b16 %v95
    %v372 = vunpack.c.l.b16 %v96
    %v373 = vunpack.c.l.b16 %v97
    %v374 = vunpack.c.l.b16 %v98
    %v375 = vunpack.c.l.b16 %v99
    %v376 = vunpack.c.l.b16 %v100
    %v377 = vunpack.c.l.b16 %v101
    %v378 = vunpack.c.l.b16 %v102
    %v379 = vunpack.c.l.b16 %v103
    %v380 = vunpack.c.l.b16 %v104
    %v381 = vunpack.c.l.b16 %v105
    %v382 = vunpack.c.l.b16 %v106
    %v383 = vunpack.c.l.b16 %v107
    %v384 = vunpack.c.l.b16 %v108
    %v385 = vunpack.c.l.b16 %v109
    %v386 = vunpack.c.l.b16 %v110
    %v387 = vunpack.c.l.b16 %v111
    %v388 = vunpack.c.l.b16 %v112
    %v389 = vunpack.c.l.b16 %v113
    %v390 = vunpack.c.l.b16 %v114
    %v391 = vunpack.c.l.b16 %v115
    %v392 = vunpack.c.l.b16 %v116
    %v393 = vunpack.c.l.b16 %v117
    %v394 = vunpack.c.l.b16 %v118
    %v395 = vunpack.c.l.b16 %v119
    %v396 = vunpack.c.l.b16 %v120
    %v397 = vunpack.c.l.b16 %v121
    %v398 = vunpack.c.l.b16 %v122
    %v399 = vunpack.c.l.b16 %v123
    %v400 = vunpack.c.l.b16 %v124
    %v401 = vunpack.c.l.b16 %v125
    %v402 = vunpack.c.l.b16 %v126
    %v403 = vunpack.c.l.b16 %v127
    %v404 = vunpack.c.l.b16 %v128
    %v405 = vunpack.c.l.b16 %v129
    %v406 = vunpack.c.l.b16 %v130
    %v407 = vunpack.c.l.b16 %v131
    %v408 = vpack.c.b16 %v313, %v312
    %v409 = vpack.c.b16 %v315, %v314
    %v410 = vpack.c.b16 %v317, %v316
    %v411 = vpack.c.b16 %v319, %v318
    %v412 = vpack.c.b16 %v321, %v320
    %v413 = vpack.c.b16 %v323, %v322
    %v414 = vpack.c.b16 %v325, %v324
    %v415 = vpack.c.b16 %v327, %v326
    %v416 = vpack.c.b16 %v329, %v328
    %v417 = vpack.c.b16 %v331, %v330
    %v418 = vpack.c.b16 %v333, %v332
    %v419 = vpack.c.b16 %v335, %v334
    %v420 = vpack.c.b16 %v337, %v336
    %v421 = vpack.c.b16 %v339, %v338
    %v422 = vpack.c.b16 %v341, %v340
    %v423 = vpack.c.b16 %v343, %v342
    %v424 = vpack.c.b16 %v345, %v344
    %v425 = vpack.c.b16 %v347, %v346
    %v426 = vpack.c.b16 %v349, %v348
    %v427 = vpack.c.b16 %v351, %v350
    %v428 = vpack.c.b16 %v353, %v352
    %v429 = vpack.c.b16 %v355, %v354
    %v430 = vpack.c.b16 %v357, %v356
    %v431 = vpack.c.b16 %v359, %v358
    %v432 = vpack.c.b16 %v361, %v360
    %v433 = vpack.c.b16 %v363, %v362
    %v434 = vpack.c.b16 %v365, %v364
    %v435 = vpack.c.b16 %v367, %v366
    %v436 = vpack.c.b16 %v369, %v368
    %v437 = vpack.c.b16 %v371, %v370
    %v438 = vpack.c.b16 %v373, %v372
    %v439 = vpack.c.b16 %v375, %v374
    %v440 = vpack.c.b16 %v377, %v376
    %v441 = vpack.c.b16 %v379, %v378
    %v442 = vpack.c.b16 %v381, %v380
    %v443 = vpack.c.b16 %v383, %v382
    %v444 = vpack.c.b16 %v385, %v384
    %v445 = vpack.c.b16 %v387, %v386
    %v446 = vpack.c.b16 %v389, %v388
    %v447 = vpack.c.b16 %v391, %v390
    %v448 = vpack.c.b16 %v393, %v392
    %v449 = vpack.c.b16 %v395, %v394
    %v450 = vpack.c.b16 %v397, %v396
    %v451 = vpack.c.b16 %v399, %v398
    %v452 = vpack.c.b16 %v401, %v400
    %v453 = vpack.c.b16 %v403, %v402
    %v454 = vpack.c.b16 %v405, %v404
    %v455 = vpack.c.b16 %v407, %v406
    %504 = vmatprep.subr.bf16.mxu0 0
    %505 = vmatpush1.bf16.msra.mxu0 %v408
    %506 = vmatprep.subr.bf16.mxu0 0
    %507 = vmatpush1.bf16.msra.mxu0 %v409
    %508 = vmatprep.subr.bf16.mxu0 0
    %509 = vmatpush1.bf16.msra.mxu0 %v410
    %510 = vmatprep.subr.bf16.mxu0 0
    %511 = vmatpush1.bf16.msra.mxu0 %v411
    %512 = vmatprep.subr.bf16.mxu0 0
    %513 = vmatpush1.bf16.msra.mxu0 %v412
    %514 = vmatprep.subr.bf16.mxu0 0
    %515 = vmatpush1.bf16.msra.mxu0 %v413
    %516 = vmatprep.subr.bf16.mxu0 0
    %517 = vmatpush1.bf16.msra.mxu0 %v414
    %518 = vmatprep.subr.bf16.mxu0 0
    %519 = vmatpush1.bf16.msra.mxu0 %v415
    %520 = vmatprep.subr.bf16.mxu0 0
    %521 = vmatpush1.bf16.msra.mxu0 %v416
    %522 = vmatprep.subr.bf16.mxu0 0
    %523 = vmatpush1.bf16.msra.mxu0 %v417
    %524 = vmatprep.subr.bf16.mxu0 0
    %525 = vmatpush1.bf16.msra.mxu0 %v418
    %526 = vmatprep.subr.bf16.mxu0 0
    %527 = vmatpush1.bf16.msra.mxu0 %v419
    %528 = vmatprep.subr.bf16.mxu0 0
    %529 = vmatpush1.bf16.msra.mxu0 %v420
    %530 = vmatprep.subr.bf16.mxu0 0
    %531 = vmatpush1.bf16.msra.mxu0 %v421
    %532 = vmatprep.subr.bf16.mxu0 0
    %533 = vmatpush1.bf16.msra.mxu0 %v422
    %534 = vmatprep.subr.bf16.mxu0 0
    %535 = vmatpush1.bf16.msra.mxu0 %v423
    %536 = vmatprep.mubr.bf16.mxu0 %v193
    %537 = vmatmul.mubr.bf16.gmra.mrb[0].mxu0 %v192
    %v538 = vpop.f32.mrb[0].mxu0
    %v539 = vadd.f32 %v139, %v538
    %v540 = vpop.f32.mrb[0].mxu0
    %v541 = vpop.f32.mrb[0].mxu0
    %v542 = vadd.f32 %v144, %v541
    %v543 = vpop.f32.mrb[0].mxu0
    %544 = vmatprep.mubr.bf16.mxu0 %v199
    %545 = vmatmul.mubr.bf16.gmra.mrb[0].mxu0 %v198
    %v546 = vpop.f32.mrb[0].mxu0
    %v547 = vadd.f32 %v149, %v546
    %v548 = vpop.f32.mrb[0].mxu0
    %v549 = vpop.f32.mrb[0].mxu0
    %v550 = vadd.f32 %v154, %v549
    %v551 = vpop.f32.mrb[0].mxu0
    %552 = vdwg.mxu0
    %553 = vmatprep.subr.bf16.mxu0 0
    %554 = vmatpush1.bf16.msra.mxu0 %v424
    %555 = vmatprep.subr.bf16.mxu0 0
    %556 = vmatpush1.bf16.msra.mxu0 %v425
    %557 = vmatprep.subr.bf16.mxu0 0
    %558 = vmatpush1.bf16.msra.mxu0 %v426
    %559 = vmatprep.subr.bf16.mxu0 0
    %560 = vmatpush1.bf16.msra.mxu0 %v427
    %561 = vmatprep.subr.bf16.mxu0 0
    %562 = vmatpush1.bf16.msra.mxu0 %v428
    %563 = vmatprep.subr.bf16.mxu0 0
    %564 = vmatpush1.bf16.msra.mxu0 %v429
    %565 = vmatprep.subr.bf16.mxu0 0
    %566 = vmatpush1.bf16.msra.mxu0 %v430
    %567 = vmatprep.subr.bf16.mxu0 0
    %568 = vmatpush1.bf16.msra.mxu0 %v431
    %569 = vmatprep.subr.bf16.mxu0 0
    %570 = vmatpush1.bf16.msra.mxu0 %v432
    %571 = vmatprep.subr.bf16.mxu0 0
    %572 = vmatpush1.bf16.msra.mxu0 %v433
    %573 = vmatprep.subr.bf16.mxu0 0
    %574 = vmatpush1.bf16.msra.mxu0 %v434
    %575 = vmatprep.subr.bf16.mxu0 0
    %576 = vmatpush1.bf16.msra.mxu0 %v435
    %577 = vmatprep.subr.bf16.mxu0 0
    %578 = vmatpush1.bf16.msra.mxu0 %v436
    %579 = vmatprep.subr.bf16.mxu0 0
    %580 = vmatpush1.bf16.msra.mxu0 %v437
    %581 = vmatprep.subr.bf16.mxu0 0
    %582 = vmatpush1.bf16.msra.mxu0 %v438
    %583 = vmatprep.subr.bf16.mxu0 0
    %584 = vmatpush1.bf16.msra.mxu0 %v439
    %585 = vmatprep.mubr.bf16.mxu0 %v195
    %586 = vmatmul.mubr.bf16.gmra.mrb[0].mxu0 %v194
    %v587 = vpop.f32.mrb[0].mxu0
    %v588 = vadd.f32 %v539, %v587
    %v589 = vpop.f32.mrb[0].mxu0
    %v590 = vpop.f32.mrb[0].mxu0
    %v591 = vadd.f32 %v542, %v590
    %v592 = vpop.f32.mrb[0].mxu0
    %593 = vmatprep.mubr.bf16.mxu0 %v201
    %594 = vmatmul.mubr.bf16.gmra.mrb[0].mxu0 %v200
    %v595 = vpop.f32.mrb[0].mxu0
    %v596 = vadd.f32 %v547, %v595
    %v597 = vpop.f32.mrb[0].mxu0
    %v598 = vpop.f32.mrb[0].mxu0
    %v599 = vadd.f32 %v550, %v598
    %v600 = vpop.f32.mrb[0].mxu0
    %601 = vdwg.mxu0
    %602 = vmatprep.subr.bf16.mxu0 0
    %603 = vmatpush1.bf16.msra.mxu0 %v440
    %604 = vmatprep.subr.bf16.mxu0 0
    %605 = vmatpush1.bf16.msra.mxu0 %v441
    %606 = vmatprep.subr.bf16.mxu0 0
    %607 = vmatpush1.bf16.msra.mxu0 %v442
    %608 = vmatprep.subr.bf16.mxu0 0
    %609 = vmatpush1.bf16.msra.mxu0 %v443
    %610 = vmatprep.subr.bf16.mxu0 0
    %611 = vmatpush1.bf16.msra.mxu0 %v444
    %612 = vmatprep.subr.bf16.mxu0 0
    %613 = vmatpush1.bf16.msra.mxu0 %v445
    %614 = vmatprep.subr.bf16.mxu0 0
    %615 = vmatpush1.bf16.msra.mxu0 %v446
    %616 = vmatprep.subr.bf16.mxu0 0
    %617 = vmatpush1.bf16.msra.mxu0 %v447
    %618 = vmatprep.subr.bf16.mxu0 0
    %619 = vmatpush1.bf16.msra.mxu0 %v448
    %620 = vmatprep.subr.bf16.mxu0 0
    %621 = vmatpush1.bf16.msra.mxu0 %v449
    %622 = vmatprep.subr.bf16.mxu0 0
    %623 = vmatpush1.bf16.msra.mxu0 %v450
    %624 = vmatprep.subr.bf16.mxu0 0
    %625 = vmatpush1.bf16.msra.mxu0 %v451
    %626 = vmatprep.subr.bf16.mxu0 0
    %627 = vmatpush1.bf16.msra.mxu0 %v452
    %628 = vmatprep.subr.bf16.mxu0 0
    %629 = vmatpush1.bf16.msra.mxu0 %v453
    %630 = vmatprep.subr.bf16.mxu0 0
    %631 = vmatpush1.bf16.msra.mxu0 %v454
    %632 = vmatprep.subr.bf16.mxu0 0
    %633 = vmatpush1.bf16.msra.mxu0 %v455
    %634 = vmatprep.mubr.bf16.mxu0 %v197
    %635 = vmatmul.mubr.bf16.gmra.mrb[0].mxu0 %v196
    %v636 = vpop.f32.mrb[0].mxu0
    %v637 = vadd.f32 %v588, %v636
    %v638 = vpop.f32.mrb[0].mxu0
    %v639 = vpop.f32.mrb[0].mxu0
    %v640 = vadd.f32 %v591, %v639
    %v641 = vpop.f32.mrb[0].mxu0
    %642 = vmatprep.mubr.bf16.mxu0 %v203
    %643 = vmatmul.mubr.bf16.gmra.mrb[0].mxu0 %v202
    %v644 = vpop.f32.mrb[0].mxu0
    %v645 = vadd.f32 %v596, %v644
    %v646 = vpop.f32.mrb[0].mxu0
    %v647 = vpop.f32.mrb[0].mxu0
    %v648 = vadd.f32 %v599, %v647
    %v649 = vpop.f32.mrb[0].mxu0
    %650 = vdwg.mxu0
    %v651 = vmax.f32 %v637, 0.0
    %v652 = vmax.f32 %v640, 0.0
    %v653 = vmax.f32 %v645, 0.0
    %v654 = vmax.f32 %v648, 0.0
    %v655 = vpack.c.bf16 %v652, %v651
    %v656 = vpack.c.bf16 %v654, %v653
    %v659 = vunpack.c.l.b16 %v655
    %v660 = vunpack.c.h.b16 %v655
    %v661 = vunpack.c.l.b16 %v656
    %v662 = vunpack.c.h.b16 %v656
    %v663 = vpack.c.b16 %v659, %v659
    %v664 = vpack.c.b16 %v660, %v660
    %v665 = vpack.c.b16 %v661, %v661
    %v666 = vpack.c.b16 %v662, %v662
    %671 = vst [vmem:[#allocation2] sm:$0xf] %v663
    %672 = vst [vmem:[#allocation2 + $0x4] sm:$0xf] %v664
    %673 = vst [vmem:[#allocation2 + $0x8] sm:$0xf] %v665
    %674 = vst [vmem:[#allocation2 + $0xc] sm:$0xf] %v666
    %v675 = vld [vmem:[%s3] sm:$0xf]
    %v676 = vld [vmem:[%s3 + $0x4] sm:$0xf]
    %v677 = vld [vmem:[%s3 + $0x8] sm:$0xf]
    %v678 = vld [vmem:[%s3 + $0xc] sm:$0xf]
    %v679 = vld [vmem:[%s4] sm:$0xff]
    %v680 = vld [vmem:[%s4 + $0x8] sm:$0xff]
    %v681 = vld [vmem:[%s4 + $0x10] sm:$0xff]
    %v682 = vld [vmem:[%s4 + $0x18] sm:$0xff]
    %684 = vset.pattern.permute.xlu0 0
    %685 = vperm.xlu0 %684, %v679
    %v686 = vpop.permute.xlu0 %685
    %689 = vset.pattern.permute.xlu0 0
    %690 = vperm.xlu0 %689, %v680
    %v691 = vpop.permute.xlu0 %690
    %694 = vset.pattern.permute.xlu0 0
    %695 = vperm.xlu0 %694, %v681
    %v696 = vpop.permute.xlu0 %695
    %699 = vset.pattern.permute.xlu0 0
    %700 = vperm.xlu0 %699, %v682
    %v701 = vpop.permute.xlu0 %700
    %v707 = vunpack.c.l.b16 %v675
    %v708 = vunpack.c.l.b16 %v676
    %v709 = vunpack.c.l.b16 %v677
    %v710 = vunpack.c.l.b16 %v678
    %v711 = vpack.c.b16 %v708, %v707
    %v712 = vpack.c.b16 %v710, %v709
    %vm713 = vcmask 261120
    %v715 = vsel %vm713, %v711, 0
    %v718 = vsel %vm713, %v712, 0
    %720 = vmatprep.subr.bf16.mxu0 0
    %721 = vmatpush1.bf16.msra.mxu0 %v655
    %722 = vmatprep.subr.bf16.mxu0 0
    %723 = vmatpush1.bf16.msra.mxu0 %v656
    %724 = vmatprep.subr.bf16.mxu0 0
    %725 = vmatpush1.bf16.msra.mxu0 0
    %726 = vmatprep.subr.bf16.mxu0 0
    %727 = vmatpush1.bf16.msra.mxu0 0
    %728 = vmatprep.subr.bf16.mxu0 0
    %729 = vmatpush1.bf16.msra.mxu0 0
    %730 = vmatprep.subr.bf16.mxu0 0
    %731 = vmatpush1.bf16.msra.mxu0 0
    %732 = vmatprep.subr.bf16.mxu0 0
    %733 = vmatpush1.bf16.msra.mxu0 0
    %734 = vmatprep.subr.bf16.mxu0 0
    %735 = vmatpush1.bf16.msra.mxu0 0
    %736 = vmatprep.subr.bf16.mxu0 0
    %737 = vmatpush1.bf16.msra.mxu0 0
    %738 = vmatprep.subr.bf16.mxu0 0
    %739 = vmatpush1.bf16.msra.mxu0 0
    %740 = vmatprep.subr.bf16.mxu0 0
    %741 = vmatpush1.bf16.msra.mxu0 0
    %742 = vmatprep.subr.bf16.mxu0 0
    %743 = vmatpush1.bf16.msra.mxu0 0
    %744 = vmatprep.subr.bf16.mxu0 0
    %745 = vmatpush1.bf16.msra.mxu0 0
    %746 = vmatprep.subr.bf16.mxu0 0
    %747 = vmatpush1.bf16.msra.mxu0 0
    %748 = vmatprep.subr.bf16.mxu0 0
    %749 = vmatpush1.bf16.msra.mxu0 0
    %750 = vmatprep.subr.bf16.mxu0 0
    %751 = vmatpush1.bf16.msra.mxu0 0
    %752 = vmatprep.mubr.bf16.mxu0 0
    %753 = vmatmul.mubr.bf16.gmra.mrb[0].mxu0 %v715
    %v754 = vpop.f32.mrb[0].mxu0
    %v755 = vadd.f32 %v686, %v754
    %v756 = vpop.f32.mrb[0].mxu0
    %v757 = vpop.f32.mrb[0].mxu0
    %v758 = vadd.f32 %v691, %v757
    %v759 = vpop.f32.mrb[0].mxu0
    %760 = vmatprep.mubr.bf16.mxu0 0
    %761 = vmatmul.mubr.bf16.gmra.mrb[0].mxu0 %v718
    %v762 = vpop.f32.mrb[0].mxu0
    %v763 = vadd.f32 %v696, %v762
    %v764 = vpop.f32.mrb[0].mxu0
    %v765 = vpop.f32.mrb[0].mxu0
    %v766 = vadd.f32 %v701, %v765
    %v767 = vpop.f32.mrb[0].mxu0
    %768 = vdwg.mxu0
    %v769 = vmax.f32 %v755, 0.0
    %v770 = vmax.f32 %v758, 0.0
    %v771 = vmax.f32 %v763, 0.0
    %v772 = vmax.f32 %v766, 0.0
    %v773 = vpack.c.bf16 %v770, %v769
    %v774 = vpack.c.bf16 %v772, %v771
    %v777 = vunpack.c.l.b16 %v773
    %v778 = vunpack.c.h.b16 %v773
    %v779 = vunpack.c.l.b16 %v774
    %v780 = vunpack.c.h.b16 %v774
    %v781 = vpack.c.b16 %v777, %v777
    %v782 = vpack.c.b16 %v778, %v778
    %v783 = vpack.c.b16 %v779, %v779
    %v784 = vpack.c.b16 %v780, %v780
    %789 = vst [vmem:[%s6] sm:$0xf] %v781
    %790 = vst [vmem:[%s6 + $0x4] sm:$0xf] %v782
    %791 = vst [vmem:[%s6 + $0x8] sm:$0xf] %v783
    %792 = vst [vmem:[%s6 + $0xc] sm:$0xf] %v784
    // Predicated region
    $region22: #{lwtl_box_net_forward.9} parent=1 // pred_check
      _
    $region23: #{lwtl_box_net_forward.9} parent=1 // pred_check_branch
      %794 = sbr.rel (0) target = $region25
    $region24: #{lwtl_box_net_forward.9} parent=1 // pred_region
      %s796 = ssub.s32 256, 256
      %797 = vsyncadd [#allocation3], %s796
      %s798 = sshll.u32 [#allocation2], 4
      %s799 = int_to_ptr.vmem [resolvable:$true] %s798
      %804 = dma.vmem_to_hbm [thread:$0]  %s799, 256, %s5, [#allocation3], 64, 64, 4
    $region25: #{lwtl_box_net_forward.9} parent=1 // pred_fallthru
      _
    // Predicated region
    $region26: #{lwtl_box_net_forward.9} parent=1 // pred_check
      _
    $region27: #{lwtl_box_net_forward.9} parent=1 // pred_check_branch
      %806 = sbr.rel (0) target = $region29
    $region28: #{lwtl_box_net_forward.9} parent=1 // pred_region
      _
    $region29: #{lwtl_box_net_forward.9} parent=1 // pred_fallthru
      _
    // Predicated region
    $region30: #{lwtl_box_net_forward.9} parent=1 // pred_check
      _
    $region31: #{lwtl_box_net_forward.9} parent=1 // pred_check_branch
      %808 = sbr.rel (0) target = $region33
    $region32: #{lwtl_box_net_forward.9} parent=1 // pred_region
      %809 = dma.done [#allocation3], 256
    $region33: #{lwtl_box_net_forward.9} parent=1 // pred_fallthru
      _
    // Predicated region
    $region34: #{lwtl_box_net_forward.9} parent=1 // pred_check
      _
    $region35: #{lwtl_box_net_forward.9} parent=1 // pred_check_branch
      %811 = sbr.rel (0) target = $region37
    $region36: #{lwtl_box_net_forward.9} parent=1 // pred_region
      _
    $region37: #{lwtl_box_net_forward.9} parent=1 // pred_fallthru
      _
    %812 = vsyncpa [#allocation3], 1

// kernel: lwtl_box_net_forward.11
$region0: #{lwtl_box_net_forward.11}
  #allocation0 [shape = 'u32[]', space=smem, size = 0x4, offset = 0x4, fixed_abs, tag = 'smem constant byte address 0x4 - core index']
  #allocation1 [shape = 'u32[144,128]{1,0:T(1,128)}', space=vmem, size = 0x12000, scoped, tag = 'internal scratch']
  %s0 = inlined_call_operand.vmem [shape: bf16[32,128], index: 0, kind: input, shape index: {}]
  %s1 = inlined_call_operand.vmem [shape: f32[1,128], index: 1, kind: input, shape index: {}]
  %s2 = inlined_call_operand.vmem [shape: bf16[8,32], index: 2, kind: input, shape index: {}]
  %s3 = inlined_call_operand.vmem [shape: f32[8,1], index: 3, kind: input, shape index: {}]
  %s4 = inlined_call_operand.vmem [shape: f32[8,1], index: 4, kind: input, shape index: {}]
  %s5 = inlined_call_operand.vmem [shape: f32[8,128], index: 5, kind: output, shape index: {}]
  %s6 = sld [smem:[#allocation0]]
  $region30: #{lwtl_box_net_forward.11} parent=0
    _
  %s8 = ssub.s32 1, %s6
  %s9 = scalar_select 0, %s8, %s6
  // Predicated region
  $region2: #{lwtl_box_net_forward.11} parent=0 // pred_check
    _
  $region3: #{lwtl_box_net_forward.11} parent=0 // pred_check_branch
    %11 = sbr.rel (0) target = $region5
  $region4: #{lwtl_box_net_forward.11} parent=0 // pred_region
    _
  $region5: #{lwtl_box_net_forward.11} parent=0 // pred_fallthru
    _
  // Predicated region
  $region6: #{lwtl_box_net_forward.11} parent=0 // pred_check
    _
  $region7: #{lwtl_box_net_forward.11} parent=0 // pred_check_branch
    %13 = sbr.rel (0) target = $region9
  $region8: #{lwtl_box_net_forward.11} parent=0 // pred_region
    _
  $region9: #{lwtl_box_net_forward.11} parent=0 // pred_fallthru
    _
  // Predicated region
  $region10: #{lwtl_box_net_forward.11} parent=0 // pred_check
    _
  $region11: #{lwtl_box_net_forward.11} parent=0 // pred_check_branch
    %15 = sbr.rel (0) target = $region13
  $region12: #{lwtl_box_net_forward.11} parent=0 // pred_region
    _
  $region13: #{lwtl_box_net_forward.11} parent=0 // pred_fallthru
    _
  // Predicated region
  $region14: #{lwtl_box_net_forward.11} parent=0 // pred_check
    _
  $region15: #{lwtl_box_net_forward.11} parent=0 // pred_check_branch
    %17 = sbr.rel (0) target = $region17
  $region16: #{lwtl_box_net_forward.11} parent=0 // pred_region
    _
  $region17: #{lwtl_box_net_forward.11} parent=0 // pred_fallthru
    _
  // Predicated region
  $region18: #{lwtl_box_net_forward.11} parent=0 // pred_check
    _
  $region19: #{lwtl_box_net_forward.11} parent=0 // pred_check_branch
    %19 = sbr.rel (0) target = $region21
  $region20: #{lwtl_box_net_forward.11} parent=0 // pred_region
    _
  $region21: #{lwtl_box_net_forward.11} parent=0 // pred_fallthru
    _
  %v21 = vld [vmem:[%s2] sm:$0xf]
  %v22 = vld [vmem:[%s0] sm:$0xf]
  %v23 = vld [vmem:[%s0 + $0x4] sm:$0xf]
  %v24 = vld [vmem:[%s0 + $0x8] sm:$0xf]
  %v25 = vld [vmem:[%s0 + $0xc] sm:$0xf]
  %v26 = vld [vmem:[%s3] sm:$0xff]
  %v27 = vld [vmem:[%s1] sm:$0x1]
  %29 = vset.pattern.permute.xlu0 0
  %30 = vperm.xlu0 %29, %v26
  %v31 = vpop.permute.xlu0 %30
  %v34 = vlaneseq
  %v35 = vshrl.u32 %v34, 7
  %v36 = vsub.s32 0, %v35
  %v37 = vrot.slane %v27, %v36
  %v39 = vmul.f32 %v31, %v37
  %v44 = vunpack.c.l.b16 %v22
  %v45 = vunpack.c.l.b16 %v23
  %v46 = vunpack.c.l.b16 %v24
  %v47 = vunpack.c.l.b16 %v25
  %v48 = vpack.c.b16 %v45, %v44
  %v49 = vpack.c.b16 %v47, %v46
  %vm52 = vcmask 261120
  %v54 = vsel %vm52, %v21, 0
  %56 = vmatprep.subr.bf16.mxu0 0
  %57 = vmatpush1.bf16.msra.mxu0 %v48
  %58 = vmatprep.subr.bf16.mxu0 0
  %59 = vmatpush1.bf16.msra.mxu0 %v49
  %60 = vmatprep.subr.bf16.mxu0 0
  %61 = vmatpush1.bf16.msra.mxu0 0
  %62 = vmatprep.subr.bf16.mxu0 0
  %63 = vmatpush1.bf16.msra.mxu0 0
  %64 = vmatprep.subr.bf16.mxu0 0
  %65 = vmatpush1.bf16.msra.mxu0 0
  %66 = vmatprep.subr.bf16.mxu0 0
  %67 = vmatpush1.bf16.msra.mxu0 0
  %68 = vmatprep.subr.bf16.mxu0 0
  %69 = vmatpush1.bf16.msra.mxu0 0
  %70 = vmatprep.subr.bf16.mxu0 0
  %71 = vmatpush1.bf16.msra.mxu0 0
  %72 = vmatprep.subr.bf16.mxu0 0
  %73 = vmatpush1.bf16.msra.mxu0 0
  %74 = vmatprep.subr.bf16.mxu0 0
  %75 = vmatpush1.bf16.msra.mxu0 0
  %76 = vmatprep.subr.bf16.mxu0 0
  %77 = vmatpush1.bf16.msra.mxu0 0
  %78 = vmatprep.subr.bf16.mxu0 0
  %79 = vmatpush1.bf16.msra.mxu0 0
  %80 = vmatprep.subr.bf16.mxu0 0
  %81 = vmatpush1.bf16.msra.mxu0 0
  %82 = vmatprep.subr.bf16.mxu0 0
  %83 = vmatpush1.bf16.msra.mxu0 0
  %84 = vmatprep.subr.bf16.mxu0 0
  %85 = vmatpush1.bf16.msra.mxu0 0
  %86 = vmatprep.subr.bf16.mxu0 0
  %87 = vmatpush1.bf16.msra.mxu0 0
  %88 = vmatprep.mubr.bf16.mxu0 0
  %89 = vmatmul.mubr.bf16.gmra.mrb[0].mxu0 %v54
  %v90 = vpop.f32.mrb[0].mxu0
  %v91 = vadd.f32 %v39, %v90
  %v92 = vpop.f32.mrb[0].mxu0
  %v93 = vpop.f32.mrb[0].mxu0
  %v94 = vpop.f32.mrb[0].mxu0
  %95 = vdwg.mxu0
  %v96 = vld [vmem:[%s4] sm:$0xff]
  %98 = vset.pattern.permute.xlu0 0
  %99 = vperm.xlu0 %98, %v96
  %v100 = vpop.permute.xlu0 %99
  %v102 = vadd.f32 %v91, %v100
  %103 = vst [vmem:[%s5] sm:$0xff] %v102
  // Predicated region
  $region22: #{lwtl_box_net_forward.11} parent=0 // pred_check
    _
  $region23: #{lwtl_box_net_forward.11} parent=0 // pred_check_branch
    %105 = sbr.rel (0) target = $region25
  $region24: #{lwtl_box_net_forward.11} parent=0 // pred_region
    _
  $region25: #{lwtl_box_net_forward.11} parent=0 // pred_fallthru
    _
  // Predicated region
  $region26: #{lwtl_box_net_forward.11} parent=0 // pred_check
    _
  $region27: #{lwtl_box_net_forward.11} parent=0 // pred_check_branch
    %107 = sbr.rel (0) target = $region29
  $region28: #{lwtl_box_net_forward.11} parent=0 // pred_region
    _
  $region29: #{lwtl_box_net_forward.11} parent=0 // pred_fallthru
    _

// kernel: lwtl_box_net_forward.12
$region0: #{lwtl_box_net_forward.12}
  #allocation0 [shape = 'u32[]', space=smem, size = 0x4, offset = 0x4, fixed_abs, tag = 'smem constant byte address 0x4 - core index']
  #allocation1 [shape = 'u32[144,128]{1,0:T(1,128)}', space=vmem, size = 0x12000, scoped, tag = 'internal scratch']
  #allocation2 [shape = 'f32[1,1]{1,0:T(1,128)S(1)}', space=vmem, size = 0x200, scoped, tag = 'scoped memory for lwtl_box_net_forward.12']
  %s0 = inlined_call_operand.vmem [shape: f32[8,128], index: 0, kind: input, shape index: {}]
  %s1 = inlined_call_operand.vmem [shape: bf16[32,128], index: 1, kind: input, shape index: {}]
  %s2 = inlined_call_operand.vmem [shape: bf16[16,8], index: 2, kind: input, shape index: {}]
  %s3 = inlined_call_operand.vmem [shape: bf16[16,32], index: 3, kind: input, shape index: {}]
  %s4 = inlined_call_operand.vmem [shape: f32[16,1], index: 4, kind: input, shape index: {}]
  %s5 = inlined_call_operand.vmem [shape: bf16[1,16], index: 5, kind: input, shape index: {}]
  %s6 = inlined_call_operand.<no memory space> [shape: f32[1,1], index: 6, kind: input, shape index: {}]
  %s7 = inlined_call_operand.vmem [shape: f32[1,128], index: 7, kind: output, shape index: {}]
  %s8 = sld [smem:[#allocation0]]
  $region38: #{lwtl_box_net_forward.12} parent=0
    _
  %s10 = ssub.s32 1, %s8
  %s11 = scalar_select 0, %s10, %s8
  %v12 = vstv %s6
  %13 = vst [vmem:[#allocation2] sm:$0x1] %v12
  // Predicated region
  $region2: #{lwtl_box_net_forward.12} parent=0 // pred_check
    _
  $region3: #{lwtl_box_net_forward.12} parent=0 // pred_check_branch
    %15 = sbr.rel (0) target = $region5
  $region4: #{lwtl_box_net_forward.12} parent=0 // pred_region
    _
  $region5: #{lwtl_box_net_forward.12} parent=0 // pred_fallthru
    _
  // Predicated region
  $region6: #{lwtl_box_net_forward.12} parent=0 // pred_check
    _
  $region7: #{lwtl_box_net_forward.12} parent=0 // pred_check_branch
    %17 = sbr.rel (0) target = $region9
  $region8: #{lwtl_box_net_forward.12} parent=0 // pred_region
    _
  $region9: #{lwtl_box_net_forward.12} parent=0 // pred_fallthru
    _
  // Predicated region
  $region10: #{lwtl_box_net_forward.12} parent=0 // pred_check
    _
  $region11: #{lwtl_box_net_forward.12} parent=0 // pred_check_branch
    %19 = sbr.rel (0) target = $region13
  $region12: #{lwtl_box_net_forward.12} parent=0 // pred_region
    _
  $region13: #{lwtl_box_net_forward.12} parent=0 // pred_fallthru
    _
  // Predicated region
  $region14: #{lwtl_box_net_forward.12} parent=0 // pred_check
    _
  $region15: #{lwtl_box_net_forward.12} parent=0 // pred_check_branch
    %21 = sbr.rel (0) target = $region17
  $region16: #{lwtl_box_net_forward.12} parent=0 // pred_region
    _
  $region17: #{lwtl_box_net_forward.12} parent=0 // pred_fallthru
    _
  // Predicated region
  $region18: #{lwtl_box_net_forward.12} parent=0 // pred_check
    _
  $region19: #{lwtl_box_net_forward.12} parent=0 // pred_check_branch
    %23 = sbr.rel (0) target = $region21
  $region20: #{lwtl_box_net_forward.12} parent=0 // pred_region
    _
  $region21: #{lwtl_box_net_forward.12} parent=0 // pred_fallthru
    _
  // Predicated region
  $region22: #{lwtl_box_net_forward.12} parent=0 // pred_check
    _
  $region23: #{lwtl_box_net_forward.12} parent=0 // pred_check_branch
    %25 = sbr.rel (0) target = $region25
  $region24: #{lwtl_box_net_forward.12} parent=0 // pred_region
    _
  $region25: #{lwtl_box_net_forward.12} parent=0 // pred_fallthru
    _
  // Predicated region
  $region26: #{lwtl_box_net_forward.12} parent=0 // pred_check
    _
  $region27: #{lwtl_box_net_forward.12} parent=0 // pred_check_branch
    %27 = sbr.rel (0) target = $region29
  $region28: #{lwtl_box_net_forward.12} parent=0 // pred_region
    _
  $region29: #{lwtl_box_net_forward.12} parent=0 // pred_fallthru
    _
  %v29 = vld [vmem:[%s2] sm:$0xf]
  %v30 = vld [vmem:[%s2 + $0x4] sm:$0xf]
  %v31 = vld [vmem:[%s0] sm:$0xff]
  %v32 = vpack.c.bf16 %v31, %v31
  %v33 = vld [vmem:[%s3] sm:$0xf]
  %v34 = vld [vmem:[%s3 + $0x4] sm:$0xf]
  %v35 = vld [vmem:[%s1] sm:$0xf]
  %v36 = vld [vmem:[%s1 + $0x4] sm:$0xf]
  %v37 = vld [vmem:[%s1 + $0x8] sm:$0xf]
  %v38 = vld [vmem:[%s1 + $0xc] sm:$0xf]
  %v41 = vunpack.c.l.b16 %v33
  %v42 = vunpack.c.l.b16 %v34
  %v43 = vpack.c.b16 %v42, %v41
  %v48 = vunpack.c.l.b16 %v35
  %v49 = vunpack.c.l.b16 %v36
  %v50 = vunpack.c.l.b16 %v37
  %v51 = vunpack.c.l.b16 %v38
  %v52 = vpack.c.b16 %v49, %v48
  %v53 = vpack.c.b16 %v51, %v50
  %vm56 = vcmask 261120
  %v58 = vsel %vm56, %v43, 0
  %60 = vmatprep.subr.bf16.mxu0 0
  %61 = vmatpush1.bf16.msra.mxu0 %v52
  %62 = vmatprep.subr.bf16.mxu0 0
  %63 = vmatpush1.bf16.msra.mxu0 %v53
  %64 = vmatprep.subr.bf16.mxu0 0
  %65 = vmatpush1.bf16.msra.mxu0 0
  %66 = vmatprep.subr.bf16.mxu0 0
  %67 = vmatpush1.bf16.msra.mxu0 0
  %68 = vmatprep.subr.bf16.mxu0 0
  %69 = vmatpush1.bf16.msra.mxu0 0
  %70 = vmatprep.subr.bf16.mxu0 0
  %71 = vmatpush1.bf16.msra.mxu0 0
  %72 = vmatprep.subr.bf16.mxu0 0
  %73 = vmatpush1.bf16.msra.mxu0 0
  %74 = vmatprep.subr.bf16.mxu0 0
  %75 = vmatpush1.bf16.msra.mxu0 0
  %76 = vmatprep.subr.bf16.mxu0 0
  %77 = vmatpush1.bf16.msra.mxu0 0
  %78 = vmatprep.subr.bf16.mxu0 0
  %79 = vmatpush1.bf16.msra.mxu0 0
  %80 = vmatprep.subr.bf16.mxu0 0
  %81 = vmatpush1.bf16.msra.mxu0 0
  %82 = vmatprep.subr.bf16.mxu0 0
  %83 = vmatpush1.bf16.msra.mxu0 0
  %84 = vmatprep.subr.bf16.mxu0 0
  %85 = vmatpush1.bf16.msra.mxu0 0
  %86 = vmatprep.subr.bf16.mxu0 0
  %87 = vmatpush1.bf16.msra.mxu0 0
  %88 = vmatprep.subr.bf16.mxu0 0
  %89 = vmatpush1.bf16.msra.mxu0 0
  %90 = vmatprep.subr.bf16.mxu0 0
  %91 = vmatpush1.bf16.msra.mxu0 0
  %92 = vmatprep.mubr.bf16.mxu0 0
  %93 = vmatmul.mubr.bf16.gmra.mrb[0].mxu0 %v58
  %v94 = vpop.f32.mrb[0].mxu0
  %v95 = vadd.f32 0.0, %v94
  %v96 = vpop.f32.mrb[0].mxu0
  %v97 = vpop.f32.mrb[0].mxu0
  %v98 = vadd.f32 0.0, %v97
  %v99 = vpop.f32.mrb[0].mxu0
  %100 = vdwg.mxu0
  %v103 = vunpack.c.l.b16 %v29
  %v104 = vunpack.c.l.b16 %v30
  %v105 = vpack.c.b16 %v104, %v103
  %vm106 = vcmask 64512
  %v108 = vsel %vm106, %v105, 0
  %vm110 = vcmask 1043456
  %v112 = vsel %vm110, %v32, 0
  %114 = vmatprep.subr.bf16.mxu0 0
  %115 = vmatpush1.bf16.msra.mxu0 %v112
  %116 = vmatprep.subr.bf16.mxu0 0
  %117 = vmatpush1.bf16.msra.mxu0 0
  %118 = vmatprep.subr.bf16.mxu0 0
  %119 = vmatpush1.bf16.msra.mxu0 0
  %120 = vmatprep.subr.bf16.mxu0 0
  %121 = vmatpush1.bf16.msra.mxu0 0
  %122 = vmatprep.subr.bf16.mxu0 0
  %123 = vmatpush1.bf16.msra.mxu0 0
  %124 = vmatprep.subr.bf16.mxu0 0
  %125 = vmatpush1.bf16.msra.mxu0 0
  %126 = vmatprep.subr.bf16.mxu0 0
  %127 = vmatpush1.bf16.msra.mxu0 0
  %128 = vmatprep.subr.bf16.mxu0 0
  %129 = vmatpush1.bf16.msra.mxu0 0
  %130 = vmatprep.subr.bf16.mxu0 0
  %131 = vmatpush1.bf16.msra.mxu0 0
  %132 = vmatprep.subr.bf16.mxu0 0
  %133 = vmatpush1.bf16.msra.mxu0 0
  %134 = vmatprep.subr.bf16.mxu0 0
  %135 = vmatpush1.bf16.msra.mxu0 0
  %136 = vmatprep.subr.bf16.mxu0 0
  %137 = vmatpush1.bf16.msra.mxu0 0
  %138 = vmatprep.subr.bf16.mxu0 0
  %139 = vmatpush1.bf16.msra.mxu0 0
  %140 = vmatprep.subr.bf16.mxu0 0
  %141 = vmatpush1.bf16.msra.mxu0 0
  %142 = vmatprep.subr.bf16.mxu0 0
  %143 = vmatpush1.bf16.msra.mxu0 0
  %144 = vmatprep.subr.bf16.mxu0 0
  %145 = vmatpush1.bf16.msra.mxu0 0
  %146 = vmatprep.mubr.bf16.mxu0 0
  %147 = vmatmul.mubr.bf16.gmra.mrb[0].mxu0 %v108
  %v148 = vpop.f32.mrb[0].mxu0
  %v149 = vadd.f32 %v95, %v148
  %v150 = vpop.f32.mrb[0].mxu0
  %v151 = vpop.f32.mrb[0].mxu0
  %v152 = vadd.f32 %v98, %v151
  %v153 = vpop.f32.mrb[0].mxu0
  %154 = vdwg.mxu0
  %v155 = vld [vmem:[%s4] sm:$0xff]
  %v156 = vld [vmem:[%s4 + $0x8] sm:$0xff]
  %158 = vset.pattern.permute.xlu0 0
  %159 = vperm.xlu0 %158, %v155
  %v160 = vpop.permute.xlu0 %159
  %163 = vset.pattern.permute.xlu0 0
  %164 = vperm.xlu0 %163, %v156
  %v165 = vpop.permute.xlu0 %164
  %v167 = vadd.f32 %v149, %v160
  %v168 = vadd.f32 %v152, %v165
  %v169 = vmax.f32 %v167, 0.0
  %v170 = vmax.f32 %v168, 0.0
  %v171 = vld [vmem:[%s5] sm:$0x1]
  %v172 = vpack.c.bf16 %v170, %v169
  %v173 = vld [vmem:[#allocation2] sm:$0x1]
  %175 = vset.pattern.permute.xlu0 0
  %176 = vperm.xlu0 %175, %v173
  %v177 = vpop.permute.xlu0 %176
  %v179 = vlaneseq
  %v180 = vshrl.u32 %v179, 7
  %v181 = vsub.s32 0, %v180
  %v182 = vrot.slane %v177, %v181
  %vm183 = vcmask 130048
  %v185 = vsel %vm183, %v171, 0
  %187 = vmatprep.subr.bf16.mxu0 0
  %188 = vmatpush1.bf16.msra.mxu0 %v172
  %189 = vmatprep.subr.bf16.mxu0 0
  %190 = vmatpush1.bf16.msra.mxu0 0
  %191 = vmatprep.subr.bf16.mxu0 0
  %192 = vmatpush1.bf16.msra.mxu0 0
  %193 = vmatprep.subr.bf16.mxu0 0
  %194 = vmatpush1.bf16.msra.mxu0 0
  %195 = vmatprep.subr.bf16.mxu0 0
  %196 = vmatpush1.bf16.msra.mxu0 0
  %197 = vmatprep.subr.bf16.mxu0 0
  %198 = vmatpush1.bf16.msra.mxu0 0
  %199 = vmatprep.subr.bf16.mxu0 0
  %200 = vmatpush1.bf16.msra.mxu0 0
  %201 = vmatprep.subr.bf16.mxu0 0
  %202 = vmatpush1.bf16.msra.mxu0 0
  %203 = vmatprep.subr.bf16.mxu0 0
  %204 = vmatpush1.bf16.msra.mxu0 0
  %205 = vmatprep.subr.bf16.mxu0 0
  %206 = vmatpush1.bf16.msra.mxu0 0
  %207 = vmatprep.subr.bf16.mxu0 0
  %208 = vmatpush1.bf16.msra.mxu0 0
  %209 = vmatprep.subr.bf16.mxu0 0
  %210 = vmatpush1.bf16.msra.mxu0 0
  %211 = vmatprep.subr.bf16.mxu0 0
  %212 = vmatpush1.bf16.msra.mxu0 0
  %213 = vmatprep.subr.bf16.mxu0 0
  %214 = vmatpush1.bf16.msra.mxu0 0
  %215 = vmatprep.subr.bf16.mxu0 0
  %216 = vmatpush1.bf16.msra.mxu0 0
  %217 = vmatprep.subr.bf16.mxu0 0
  %218 = vmatpush1.bf16.msra.mxu0 0
  %219 = vmatprep.mubr.bf16.mxu0 0
  %220 = vmatmul.mubr.bf16.gmra.mrb[0].mxu0 %v185
  %v221 = vpop.f32.mrb[0].mxu0
  %v222 = vadd.f32 %v182, %v221
  %v223 = vpop.f32.mrb[0].mxu0
  %v224 = vpop.f32.mrb[0].mxu0
  %v225 = vpop.f32.mrb[0].mxu0
  %226 = vdwg.mxu0
  %227 = vst [vmem:[%s7] sm:$0x1] %v222
  // Predicated region
  $region30: #{lwtl_box_net_forward.12} parent=0 // pred_check
    _
  $region31: #{lwtl_box_net_forward.12} parent=0 // pred_check_branch
    %229 = sbr.rel (0) target = $region33
  $region32: #{lwtl_box_net_forward.12} parent=0 // pred_region
    _
  $region33: #{lwtl_box_net_forward.12} parent=0 // pred_fallthru
    _
  // Predicated region
  $region34: #{lwtl_box_net_forward.12} parent=0 // pred_check
    _
  $region35: #{lwtl_box_net_forward.12} parent=0 // pred_check_branch
    %231 = sbr.rel (0) target = $region37
  $region36: #{lwtl_box_net_forward.12} parent=0 // pred_region
    _
  $region37: #{lwtl_box_net_forward.12} parent=0 // pred_fallthru
    _

// kernel: lwtl_box_net_forward.10
$region0: #{lwtl_box_net_forward.10}
  #allocation0 [shape = 'u32[]', space=smem, size = 0x4, offset = 0x4, fixed_abs, tag = 'smem constant byte address 0x4 - core index']
  #allocation1 [shape = 'u32[144,128]{1,0:T(1,128)}', space=vmem, size = 0x12000, scoped, tag = 'internal scratch']
  %s0 = inlined_call_operand.vmem [shape: bf16[768,128], index: 0, kind: input, shape index: {}]
  %s1 = inlined_call_operand.vmem [shape: bf16[32,768], index: 1, kind: input, shape index: {}]
  %s2 = inlined_call_operand.vmem [shape: f32[32,1], index: 2, kind: input, shape index: {}]
  %s3 = inlined_call_operand.vmem [shape: bf16[32,32], index: 3, kind: input, shape index: {}]
  %s4 = inlined_call_operand.vmem [shape: f32[32,1], index: 4, kind: input, shape index: {}]
  %s5 = inlined_call_operand.vmem [shape: bf16[32,128], index: 5, kind: output, shape index: {0}]
  %s6 = inlined_call_operand.vmem [shape: bf16[32,128], index: 6, kind: output, shape index: {1}]
  %7 = xla_tuple %s5, %s6
  %s8 = sld [smem:[#allocation0]]
  $region38: #{lwtl_box_net_forward.10} parent=0
    _
  %s10 = ssub.s32 1, %s8
  %s11 = scalar_select 0, %s10, %s8
  // Predicated region
  $region2: #{lwtl_box_net_forward.10} parent=0 // pred_check
    _
  $region3: #{lwtl_box_net_forward.10} parent=0 // pred_check_branch
    %13 = sbr.rel (0) target = $region5
  $region4: #{lwtl_box_net_forward.10} parent=0 // pred_region
    _
  $region5: #{lwtl_box_net_forward.10} parent=0 // pred_fallthru
    _
  // Predicated region
  $region6: #{lwtl_box_net_forward.10} parent=0 // pred_check
    _
  $region7: #{lwtl_box_net_forward.10} parent=0 // pred_check_branch
    %15 = sbr.rel (0) target = $region9
  $region8: #{lwtl_box_net_forward.10} parent=0 // pred_region
    _
  $region9: #{lwtl_box_net_forward.10} parent=0 // pred_fallthru
    _
  // Predicated region
  $region10: #{lwtl_box_net_forward.10} parent=0 // pred_check
    _
  $region11: #{lwtl_box_net_forward.10} parent=0 // pred_check_branch
    %17 = sbr.rel (0) target = $region13
  $region12: #{lwtl_box_net_forward.10} parent=0 // pred_region
    _
  $region13: #{lwtl_box_net_forward.10} parent=0 // pred_fallthru
    _
  // Predicated region
  $region14: #{lwtl_box_net_forward.10} parent=0 // pred_check
    _
  $region15: #{lwtl_box_net_forward.10} parent=0 // pred_check_branch
    %19 = sbr.rel (0) target = $region17
  $region16: #{lwtl_box_net_forward.10} parent=0 // pred_region
    _
  $region17: #{lwtl_box_net_forward.10} parent=0 // pred_fallthru
    _
  // Predicated region
  $region18: #{lwtl_box_net_forward.10} parent=0 // pred_check
    _
  $region19: #{lwtl_box_net_forward.10} parent=0 // pred_check_branch
    %21 = sbr.rel (0) target = $region21
  $region20: #{lwtl_box_net_forward.10} parent=0 // pred_region
    _
  $region21: #{lwtl_box_net_forward.10} parent=0 // pred_fallthru
    _
  %v23 = vld [vmem:[%s1] sm:$0xff]
  %v24 = vld [vmem:[%s1 + $0x8] sm:$0xff]
  %v25 = vld [vmem:[%s1 + $0x10] sm:$0xff]
  %v26 = vld [vmem:[%s1 + $0x18] sm:$0xff]
  %v27 = vld [vmem:[%s1 + $0x20] sm:$0xff]
  %v28 = vld [vmem:[%s1 + $0x28] sm:$0xff]
  %v29 = vld [vmem:[%s1 + $0x30] sm:$0xff]
  %v30 = vld [vmem:[%s1 + $0x38] sm:$0xff]
  %v31 = vld [vmem:[%s1 + $0x40] sm:$0xff]
  %v32 = vld [vmem:[%s1 + $0x48] sm:$0xff]
  %v33 = vld [vmem:[%s1 + $0x50] sm:$0xff]
  %v34 = vld [vmem:[%s1 + $0x58] sm:$0xff]
  %v35 = vld [vmem:[%s0] sm:$0xf]
  %v36 = vld [vmem:[%s0 + $0x4] sm:$0xf]
  %v37 = vld [vmem:[%s0 + $0x8] sm:$0xf]
  %v38 = vld [vmem:[%s0 + $0xc] sm:$0xf]
  %v39 = vld [vmem:[%s0 + $0x10] sm:$0xf]
  %v40 = vld [vmem:[%s0 + $0x14] sm:$0xf]
  %v41 = vld [vmem:[%s0 + $0x18] sm:$0xf]
  %v42 = vld [vmem:[%s0 + $0x1c] sm:$0xf]
  %v43 = vld [vmem:[%s0 + $0x20] sm:$0xf]
  %v44 = vld [vmem:[%s0 + $0x24] sm:$0xf]
  %v45 = vld [vmem:[%s0 + $0x28] sm:$0xf]
  %v46 = vld [vmem:[%s0 + $0x2c] sm:$0xf]
  %v47 = vld [vmem:[%s0 + $0x30] sm:$0xf]
  %v48 = vld [vmem:[%s0 + $0x34] sm:$0xf]
  %v49 = vld [vmem:[%s0 + $0x38] sm:$0xf]
  %v50 = vld [vmem:[%s0 + $0x3c] sm:$0xf]
  %v51 = vld [vmem:[%s0 + $0x40] sm:$0xf]
  %v52 = vld [vmem:[%s0 + $0x44] sm:$0xf]
  %v53 = vld [vmem:[%s0 + $0x48] sm:$0xf]
  %v54 = vld [vmem:[%s0 + $0x4c] sm:$0xf]
  %v55 = vld [vmem:[%s0 + $0x50] sm:$0xf]
  %v56 = vld [vmem:[%s0 + $0x54] sm:$0xf]
  %v57 = vld [vmem:[%s0 + $0x58] sm:$0xf]
  %v58 = vld [vmem:[%s0 + $0x5c] sm:$0xf]
  %v59 = vld [vmem:[%s0 + $0x60] sm:$0xf]
  %v60 = vld [vmem:[%s0 + $0x64] sm:$0xf]
  %v61 = vld [vmem:[%s0 + $0x68] sm:$0xf]
  %v62 = vld [vmem:[%s0 + $0x6c] sm:$0xf]
  %v63 = vld [vmem:[%s0 + $0x70] sm:$0xf]
  %v64 = vld [vmem:[%s0 + $0x74] sm:$0xf]
  %v65 = vld [vmem:[%s0 + $0x78] sm:$0xf]
  %v66 = vld [vmem:[%s0 + $0x7c] sm:$0xf]
  %v67 = vld [vmem:[%s0 + $0x80] sm:$0xf]
  %v68 = vld [vmem:[%s0 + $0x84] sm:$0xf]
  %v69 = vld [vmem:[%s0 + $0x88] sm:$0xf]
  %v70 = vld [vmem:[%s0 + $0x8c] sm:$0xf]
  %v71 = vld [vmem:[%s0 + $0x90] sm:$0xf]
  %v72 = vld [vmem:[%s0 + $0x94] sm:$0xf]
  %v73 = vld [vmem:[%s0 + $0x98] sm:$0xf]
  %v74 = vld [vmem:[%s0 + $0x9c] sm:$0xf]
  %v75 = vld [vmem:[%s0 + $0xa0] sm:$0xf]
  %v76 = vld [vmem:[%s0 + $0xa4] sm:$0xf]
  %v77 = vld [vmem:[%s0 + $0xa8] sm:$0xf]
  %v78 = vld [vmem:[%s0 + $0xac] sm:$0xf]
  %v79 = vld [vmem:[%s0 + $0xb0] sm:$0xf]
  %v80 = vld [vmem:[%s0 + $0xb4] sm:$0xf]
  %v81 = vld [vmem:[%s0 + $0xb8] sm:$0xf]
  %v82 = vld [vmem:[%s0 + $0xbc] sm:$0xf]
  %v83 = vld [vmem:[%s0 + $0xc0] sm:$0xf]
  %v84 = vld [vmem:[%s0 + $0xc4] sm:$0xf]
  %v85 = vld [vmem:[%s0 + $0xc8] sm:$0xf]
  %v86 = vld [vmem:[%s0 + $0xcc] sm:$0xf]
  %v87 = vld [vmem:[%s0 + $0xd0] sm:$0xf]
  %v88 = vld [vmem:[%s0 + $0xd4] sm:$0xf]
  %v89 = vld [vmem:[%s0 + $0xd8] sm:$0xf]
  %v90 = vld [vmem:[%s0 + $0xdc] sm:$0xf]
  %v91 = vld [vmem:[%s0 + $0xe0] sm:$0xf]
  %v92 = vld [vmem:[%s0 + $0xe4] sm:$0xf]
  %v93 = vld [vmem:[%s0 + $0xe8] sm:$0xf]
  %v94 = vld [vmem:[%s0 + $0xec] sm:$0xf]
  %v95 = vld [vmem:[%s0 + $0xf0] sm:$0xf]
  %v96 = vld [vmem:[%s0 + $0xf4] sm:$0xf]
  %v97 = vld [vmem:[%s0 + $0xf8] sm:$0xf]
  %v98 = vld [vmem:[%s0 + $0xfc] sm:$0xf]
  %v99 = vld [vmem:[%s0 + $0x100] sm:$0xf]
  %v100 = vld [vmem:[%s0 + $0x104] sm:$0xf]
  %v101 = vld [vmem:[%s0 + $0x108] sm:$0xf]
  %v102 = vld [vmem:[%s0 + $0x10c] sm:$0xf]
  %v103 = vld [vmem:[%s0 + $0x110] sm:$0xf]
  %v104 = vld [vmem:[%s0 + $0x114] sm:$0xf]
  %v105 = vld [vmem:[%s0 + $0x118] sm:$0xf]
  %v106 = vld [vmem:[%s0 + $0x11c] sm:$0xf]
  %v107 = vld [vmem:[%s0 + $0x120] sm:$0xf]
  %v108 = vld [vmem:[%s0 + $0x124] sm:$0xf]
  %v109 = vld [vmem:[%s0 + $0x128] sm:$0xf]
  %v110 = vld [vmem:[%s0 + $0x12c] sm:$0xf]
  %v111 = vld [vmem:[%s0 + $0x130] sm:$0xf]
  %v112 = vld [vmem:[%s0 + $0x134] sm:$0xf]
  %v113 = vld [vmem:[%s0 + $0x138] sm:$0xf]
  %v114 = vld [vmem:[%s0 + $0x13c] sm:$0xf]
  %v115 = vld [vmem:[%s0 + $0x140] sm:$0xf]
  %v116 = vld [vmem:[%s0 + $0x144] sm:$0xf]
  %v117 = vld [vmem:[%s0 + $0x148] sm:$0xf]
  %v118 = vld [vmem:[%s0 + $0x14c] sm:$0xf]
  %v119 = vld [vmem:[%s0 + $0x150] sm:$0xf]
  %v120 = vld [vmem:[%s0 + $0x154] sm:$0xf]
  %v121 = vld [vmem:[%s0 + $0x158] sm:$0xf]
  %v122 = vld [vmem:[%s0 + $0x15c] sm:$0xf]
  %v123 = vld [vmem:[%s0 + $0x160] sm:$0xf]
  %v124 = vld [vmem:[%s0 + $0x164] sm:$0xf]
  %v125 = vld [vmem:[%s0 + $0x168] sm:$0xf]
  %v126 = vld [vmem:[%s0 + $0x16c] sm:$0xf]
  %v127 = vld [vmem:[%s0 + $0x170] sm:$0xf]
  %v128 = vld [vmem:[%s0 + $0x174] sm:$0xf]
  %v129 = vld [vmem:[%s0 + $0x178] sm:$0xf]
  %v130 = vld [vmem:[%s0 + $0x17c] sm:$0xf]
  %v131 = vld [vmem:[%s2] sm:$0xff]
  %v132 = vld [vmem:[%s2 + $0x8] sm:$0xff]
  %v133 = vld [vmem:[%s2 + $0x10] sm:$0xff]
  %v134 = vld [vmem:[%s2 + $0x18] sm:$0xff]
  %136 = vset.pattern.permute.xlu0 0
  %137 = vperm.xlu0 %136, %v131
  %v138 = vpop.permute.xlu0 %137
  %141 = vset.pattern.permute.xlu0 0
  %142 = vperm.xlu0 %141, %v132
  %v143 = vpop.permute.xlu0 %142
  %146 = vset.pattern.permute.xlu0 0
  %147 = vperm.xlu0 %146, %v133
  %v148 = vpop.permute.xlu0 %147
  %151 = vset.pattern.permute.xlu0 0
  %152 = vperm.xlu0 %151, %v134
  %v153 = vpop.permute.xlu0 %152
  %v167 = vunpack.c.l.b16 %v23
  %v168 = vunpack.c.h.b16 %v23
  %v169 = vunpack.c.l.b16 %v24
  %v170 = vunpack.c.h.b16 %v24
  %v171 = vunpack.c.l.b16 %v25
  %v172 = vunpack.c.h.b16 %v25
  %v173 = vunpack.c.l.b16 %v26
  %v174 = vunpack.c.h.b16 %v26
  %v175 = vunpack.c.l.b16 %v27
  %v176 = vunpack.c.h.b16 %v27
  %v177 = vunpack.c.l.b16 %v28
  %v178 = vunpack.c.h.b16 %v28
  %v179 = vunpack.c.l.b16 %v29
  %v180 = vunpack.c.h.b16 %v29
  %v181 = vunpack.c.l.b16 %v30
  %v182 = vunpack.c.h.b16 %v30
  %v183 = vunpack.c.l.b16 %v31
  %v184 = vunpack.c.h.b16 %v31
  %v185 = vunpack.c.l.b16 %v32
  %v186 = vunpack.c.h.b16 %v32
  %v187 = vunpack.c.l.b16 %v33
  %v188 = vunpack.c.h.b16 %v33
  %v189 = vunpack.c.l.b16 %v34
  %v190 = vunpack.c.h.b16 %v34
  %v191 = vpack.c.b16 %v173, %v167
  %v192 = vpack.c.b16 %v174, %v168
  %v193 = vpack.c.b16 %v175, %v169
  %v194 = vpack.c.b16 %v176, %v170
  %v195 = vpack.c.b16 %v177, %v171
  %v196 = vpack.c.b16 %v178, %v172
  %v197 = vpack.c.b16 %v185, %v179
  %v198 = vpack.c.b16 %v186, %v180
  %v199 = vpack.c.b16 %v187, %v181
  %v200 = vpack.c.b16 %v188, %v182
  %v201 = vpack.c.b16 %v189, %v183
  %v202 = vpack.c.b16 %v190, %v184
  %v311 = vunpack.c.l.b16 %v35
  %v312 = vunpack.c.l.b16 %v36
  %v313 = vunpack.c.l.b16 %v37
  %v314 = vunpack.c.l.b16 %v38
  %v315 = vunpack.c.l.b16 %v39
  %v316 = vunpack.c.l.b16 %v40
  %v317 = vunpack.c.l.b16 %v41
  %v318 = vunpack.c.l.b16 %v42
  %v319 = vunpack.c.l.b16 %v43
  %v320 = vunpack.c.l.b16 %v44
  %v321 = vunpack.c.l.b16 %v45
  %v322 = vunpack.c.l.b16 %v46
  %v323 = vunpack.c.l.b16 %v47
  %v324 = vunpack.c.l.b16 %v48
  %v325 = vunpack.c.l.b16 %v49
  %v326 = vunpack.c.l.b16 %v50
  %v327 = vunpack.c.l.b16 %v51
  %v328 = vunpack.c.l.b16 %v52
  %v329 = vunpack.c.l.b16 %v53
  %v330 = vunpack.c.l.b16 %v54
  %v331 = vunpack.c.l.b16 %v55
  %v332 = vunpack.c.l.b16 %v56
  %v333 = vunpack.c.l.b16 %v57
  %v334 = vunpack.c.l.b16 %v58
  %v335 = vunpack.c.l.b16 %v59
  %v336 = vunpack.c.l.b16 %v60
  %v337 = vunpack.c.l.b16 %v61
  %v338 = vunpack.c.l.b16 %v62
  %v339 = vunpack.c.l.b16 %v63
  %v340 = vunpack.c.l.b16 %v64
  %v341 = vunpack.c.l.b16 %v65
  %v342 = vunpack.c.l.b16 %v66
  %v343 = vunpack.c.l.b16 %v67
  %v344 = vunpack.c.l.b16 %v68
  %v345 = vunpack.c.l.b16 %v69
  %v346 = vunpack.c.l.b16 %v70
  %v347 = vunpack.c.l.b16 %v71
  %v348 = vunpack.c.l.b16 %v72
  %v349 = vunpack.c.l.b16 %v73
  %v350 = vunpack.c.l.b16 %v74
  %v351 = vunpack.c.l.b16 %v75
  %v352 = vunpack.c.l.b16 %v76
  %v353 = vunpack.c.l.b16 %v77
  %v354 = vunpack.c.l.b16 %v78
  %v355 = vunpack.c.l.b16 %v79
  %v356 = vunpack.c.l.b16 %v80
  %v357 = vunpack.c.l.b16 %v81
  %v358 = vunpack.c.l.b16 %v82
  %v359 = vunpack.c.l.b16 %v83
  %v360 = vunpack.c.l.b16 %v84
  %v361 = vunpack.c.l.b16 %v85
  %v362 = vunpack.c.l.b16 %v86
  %v363 = vunpack.c.l.b16 %v87
  %v364 = vunpack.c.l.b16 %v88
  %v365 = vunpack.c.l.b16 %v89
  %v366 = vunpack.c.l.b16 %v90
  %v367 = vunpack.c.l.b16 %v91
  %v368 = vunpack.c.l.b16 %v92
  %v369 = vunpack.c.l.b16 %v93
  %v370 = vunpack.c.l.b16 %v94
  %v371 = vunpack.c.l.b16 %v95
  %v372 = vunpack.c.l.b16 %v96
  %v373 = vunpack.c.l.b16 %v97
  %v374 = vunpack.c.l.b16 %v98
  %v375 = vunpack.c.l.b16 %v99
  %v376 = vunpack.c.l.b16 %v100
  %v377 = vunpack.c.l.b16 %v101
  %v378 = vunpack.c.l.b16 %v102
  %v379 = vunpack.c.l.b16 %v103
  %v380 = vunpack.c.l.b16 %v104
  %v381 = vunpack.c.l.b16 %v105
  %v382 = vunpack.c.l.b16 %v106
  %v383 = vunpack.c.l.b16 %v107
  %v384 = vunpack.c.l.b16 %v108
  %v385 = vunpack.c.l.b16 %v109
  %v386 = vunpack.c.l.b16 %v110
  %v387 = vunpack.c.l.b16 %v111
  %v388 = vunpack.c.l.b16 %v112
  %v389 = vunpack.c.l.b16 %v113
  %v390 = vunpack.c.l.b16 %v114
  %v391 = vunpack.c.l.b16 %v115
  %v392 = vunpack.c.l.b16 %v116
  %v393 = vunpack.c.l.b16 %v117
  %v394 = vunpack.c.l.b16 %v118
  %v395 = vunpack.c.l.b16 %v119
  %v396 = vunpack.c.l.b16 %v120
  %v397 = vunpack.c.l.b16 %v121
  %v398 = vunpack.c.l.b16 %v122
  %v399 = vunpack.c.l.b16 %v123
  %v400 = vunpack.c.l.b16 %v124
  %v401 = vunpack.c.l.b16 %v125
  %v402 = vunpack.c.l.b16 %v126
  %v403 = vunpack.c.l.b16 %v127
  %v404 = vunpack.c.l.b16 %v128
  %v405 = vunpack.c.l.b16 %v129
  %v406 = vunpack.c.l.b16 %v130
  %v407 = vpack.c.b16 %v312, %v311
  %v408 = vpack.c.b16 %v314, %v313
  %v409 = vpack.c.b16 %v316, %v315
  %v410 = vpack.c.b16 %v318, %v317
  %v411 = vpack.c.b16 %v320, %v319
  %v412 = vpack.c.b16 %v322, %v321
  %v413 = vpack.c.b16 %v324, %v323
  %v414 = vpack.c.b16 %v326, %v325
  %v415 = vpack.c.b16 %v328, %v327
  %v416 = vpack.c.b16 %v330, %v329
  %v417 = vpack.c.b16 %v332, %v331
  %v418 = vpack.c.b16 %v334, %v333
  %v419 = vpack.c.b16 %v336, %v335
  %v420 = vpack.c.b16 %v338, %v337
  %v421 = vpack.c.b16 %v340, %v339
  %v422 = vpack.c.b16 %v342, %v341
  %v423 = vpack.c.b16 %v344, %v343
  %v424 = vpack.c.b16 %v346, %v345
  %v425 = vpack.c.b16 %v348, %v347
  %v426 = vpack.c.b16 %v350, %v349
  %v427 = vpack.c.b16 %v352, %v351
  %v428 = vpack.c.b16 %v354, %v353
  %v429 = vpack.c.b16 %v356, %v355
  %v430 = vpack.c.b16 %v358, %v357
  %v431 = vpack.c.b16 %v360, %v359
  %v432 = vpack.c.b16 %v362, %v361
  %v433 = vpack.c.b16 %v364, %v363
  %v434 = vpack.c.b16 %v366, %v365
  %v435 = vpack.c.b16 %v368, %v367
  %v436 = vpack.c.b16 %v370, %v369
  %v437 = vpack.c.b16 %v372, %v371
  %v438 = vpack.c.b16 %v374, %v373
  %v439 = vpack.c.b16 %v376, %v375
  %v440 = vpack.c.b16 %v378, %v377
  %v441 = vpack.c.b16 %v380, %v379
  %v442 = vpack.c.b16 %v382, %v381
  %v443 = vpack.c.b16 %v384, %v383
  %v444 = vpack.c.b16 %v386, %v385
  %v445 = vpack.c.b16 %v388, %v387
  %v446 = vpack.c.b16 %v390, %v389
  %v447 = vpack.c.b16 %v392, %v391
  %v448 = vpack.c.b16 %v394, %v393
  %v449 = vpack.c.b16 %v396, %v395
  %v450 = vpack.c.b16 %v398, %v397
  %v451 = vpack.c.b16 %v400, %v399
  %v452 = vpack.c.b16 %v402, %v401
  %v453 = vpack.c.b16 %v404, %v403
  %v454 = vpack.c.b16 %v406, %v405
  %503 = vmatprep.subr.bf16.mxu0 0
  %504 = vmatpush1.bf16.msra.mxu0 %v407
  %505 = vmatprep.subr.bf16.mxu0 0
  %506 = vmatpush1.bf16.msra.mxu0 %v408
  %507 = vmatprep.subr.bf16.mxu0 0
  %508 = vmatpush1.bf16.msra.mxu0 %v409
  %509 = vmatprep.subr.bf16.mxu0 0
  %510 = vmatpush1.bf16.msra.mxu0 %v410
  %511 = vmatprep.subr.bf16.mxu0 0
  %512 = vmatpush1.bf16.msra.mxu0 %v411
  %513 = vmatprep.subr.bf16.mxu0 0
  %514 = vmatpush1.bf16.msra.mxu0 %v412
  %515 = vmatprep.subr.bf16.mxu0 0
  %516 = vmatpush1.bf16.msra.mxu0 %v413
  %517 = vmatprep.subr.bf16.mxu0 0
  %518 = vmatpush1.bf16.msra.mxu0 %v414
  %519 = vmatprep.subr.bf16.mxu0 0
  %520 = vmatpush1.bf16.msra.mxu0 %v415
  %521 = vmatprep.subr.bf16.mxu0 0
  %522 = vmatpush1.bf16.msra.mxu0 %v416
  %523 = vmatprep.subr.bf16.mxu0 0
  %524 = vmatpush1.bf16.msra.mxu0 %v417
  %525 = vmatprep.subr.bf16.mxu0 0
  %526 = vmatpush1.bf16.msra.mxu0 %v418
  %527 = vmatprep.subr.bf16.mxu0 0
  %528 = vmatpush1.bf16.msra.mxu0 %v419
  %529 = vmatprep.subr.bf16.mxu0 0
  %530 = vmatpush1.bf16.msra.mxu0 %v420
  %531 = vmatprep.subr.bf16.mxu0 0
  %532 = vmatpush1.bf16.msra.mxu0 %v421
  %533 = vmatprep.subr.bf16.mxu0 0
  %534 = vmatpush1.bf16.msra.mxu0 %v422
  %535 = vmatprep.mubr.bf16.mxu0 %v192
  %536 = vmatmul.mubr.bf16.gmra.mrb[0].mxu0 %v191
  %v537 = vpop.f32.mrb[0].mxu0
  %v538 = vadd.f32 %v138, %v537
  %v539 = vpop.f32.mrb[0].mxu0
  %v540 = vpop.f32.mrb[0].mxu0
  %v541 = vadd.f32 %v143, %v540
  %v542 = vpop.f32.mrb[0].mxu0
  %543 = vmatprep.mubr.bf16.mxu0 %v198
  %544 = vmatmul.mubr.bf16.gmra.mrb[0].mxu0 %v197
  %v545 = vpop.f32.mrb[0].mxu0
  %v546 = vadd.f32 %v148, %v545
  %v547 = vpop.f32.mrb[0].mxu0
  %v548 = vpop.f32.mrb[0].mxu0
  %v549 = vadd.f32 %v153, %v548
  %v550 = vpop.f32.mrb[0].mxu0
  %551 = vdwg.mxu0
  %552 = vmatprep.subr.bf16.mxu0 0
  %553 = vmatpush1.bf16.msra.mxu0 %v423
  %554 = vmatprep.subr.bf16.mxu0 0
  %555 = vmatpush1.bf16.msra.mxu0 %v424
  %556 = vmatprep.subr.bf16.mxu0 0
  %557 = vmatpush1.bf16.msra.mxu0 %v425
  %558 = vmatprep.subr.bf16.mxu0 0
  %559 = vmatpush1.bf16.msra.mxu0 %v426
  %560 = vmatprep.subr.bf16.mxu0 0
  %561 = vmatpush1.bf16.msra.mxu0 %v427
  %562 = vmatprep.subr.bf16.mxu0 0
  %563 = vmatpush1.bf16.msra.mxu0 %v428
  %564 = vmatprep.subr.bf16.mxu0 0
  %565 = vmatpush1.bf16.msra.mxu0 %v429
  %566 = vmatprep.subr.bf16.mxu0 0
  %567 = vmatpush1.bf16.msra.mxu0 %v430
  %568 = vmatprep.subr.bf16.mxu0 0
  %569 = vmatpush1.bf16.msra.mxu0 %v431
  %570 = vmatprep.subr.bf16.mxu0 0
  %571 = vmatpush1.bf16.msra.mxu0 %v432
  %572 = vmatprep.subr.bf16.mxu0 0
  %573 = vmatpush1.bf16.msra.mxu0 %v433
  %574 = vmatprep.subr.bf16.mxu0 0
  %575 = vmatpush1.bf16.msra.mxu0 %v434
  %576 = vmatprep.subr.bf16.mxu0 0
  %577 = vmatpush1.bf16.msra.mxu0 %v435
  %578 = vmatprep.subr.bf16.mxu0 0
  %579 = vmatpush1.bf16.msra.mxu0 %v436
  %580 = vmatprep.subr.bf16.mxu0 0
  %581 = vmatpush1.bf16.msra.mxu0 %v437
  %582 = vmatprep.subr.bf16.mxu0 0
  %583 = vmatpush1.bf16.msra.mxu0 %v438
  %584 = vmatprep.mubr.bf16.mxu0 %v194
  %585 = vmatmul.mubr.bf16.gmra.mrb[0].mxu0 %v193
  %v586 = vpop.f32.mrb[0].mxu0
  %v587 = vadd.f32 %v538, %v586
  %v588 = vpop.f32.mrb[0].mxu0
  %v589 = vpop.f32.mrb[0].mxu0
  %v590 = vadd.f32 %v541, %v589
  %v591 = vpop.f32.mrb[0].mxu0
  %592 = vmatprep.mubr.bf16.mxu0 %v200
  %593 = vmatmul.mubr.bf16.gmra.mrb[0].mxu0 %v199
  %v594 = vpop.f32.mrb[0].mxu0
  %v595 = vadd.f32 %v546, %v594
  %v596 = vpop.f32.mrb[0].mxu0
  %v597 = vpop.f32.mrb[0].mxu0
  %v598 = vadd.f32 %v549, %v597
  %v599 = vpop.f32.mrb[0].mxu0
  %600 = vdwg.mxu0
  %601 = vmatprep.subr.bf16.mxu0 0
  %602 = vmatpush1.bf16.msra.mxu0 %v439
  %603 = vmatprep.subr.bf16.mxu0 0
  %604 = vmatpush1.bf16.msra.mxu0 %v440
  %605 = vmatprep.subr.bf16.mxu0 0
  %606 = vmatpush1.bf16.msra.mxu0 %v441
  %607 = vmatprep.subr.bf16.mxu0 0
  %608 = vmatpush1.bf16.msra.mxu0 %v442
  %609 = vmatprep.subr.bf16.mxu0 0
  %610 = vmatpush1.bf16.msra.mxu0 %v443
  %611 = vmatprep.subr.bf16.mxu0 0
  %612 = vmatpush1.bf16.msra.mxu0 %v444
  %613 = vmatprep.subr.bf16.mxu0 0
  %614 = vmatpush1.bf16.msra.mxu0 %v445
  %615 = vmatprep.subr.bf16.mxu0 0
  %616 = vmatpush1.bf16.msra.mxu0 %v446
  %617 = vmatprep.subr.bf16.mxu0 0
  %618 = vmatpush1.bf16.msra.mxu0 %v447
  %619 = vmatprep.subr.bf16.mxu0 0
  %620 = vmatpush1.bf16.msra.mxu0 %v448
  %621 = vmatprep.subr.bf16.mxu0 0
  %622 = vmatpush1.bf16.msra.mxu0 %v449
  %623 = vmatprep.subr.bf16.mxu0 0
  %624 = vmatpush1.bf16.msra.mxu0 %v450
  %625 = vmatprep.subr.bf16.mxu0 0
  %626 = vmatpush1.bf16.msra.mxu0 %v451
  %627 = vmatprep.subr.bf16.mxu0 0
  %628 = vmatpush1.bf16.msra.mxu0 %v452
  %629 = vmatprep.subr.bf16.mxu0 0
  %630 = vmatpush1.bf16.msra.mxu0 %v453
  %631 = vmatprep.subr.bf16.mxu0 0
  %632 = vmatpush1.bf16.msra.mxu0 %v454
  %633 = vmatprep.mubr.bf16.mxu0 %v196
  %634 = vmatmul.mubr.bf16.gmra.mrb[0].mxu0 %v195
  %v635 = vpop.f32.mrb[0].mxu0
  %v636 = vadd.f32 %v587, %v635
  %v637 = vpop.f32.mrb[0].mxu0
  %v638 = vpop.f32.mrb[0].mxu0
  %v639 = vadd.f32 %v590, %v638
  %v640 = vpop.f32.mrb[0].mxu0
  %641 = vmatprep.mubr.bf16.mxu0 %v202
  %642 = vmatmul.mubr.bf16.gmra.mrb[0].mxu0 %v201
  %v643 = vpop.f32.mrb[0].mxu0
  %v644 = vadd.f32 %v595, %v643
  %v645 = vpop.f32.mrb[0].mxu0
  %v646 = vpop.f32.mrb[0].mxu0
  %v647 = vadd.f32 %v598, %v646
  %v648 = vpop.f32.mrb[0].mxu0
  %649 = vdwg.mxu0
  %v650 = vmax.f32 %v636, 0.0
  %v651 = vmax.f32 %v639, 0.0
  %v652 = vmax.f32 %v644, 0.0
  %v653 = vmax.f32 %v647, 0.0
  %v654 = vpack.c.bf16 %v651, %v650
  %v655 = vpack.c.bf16 %v653, %v652
  %v658 = vunpack.c.l.b16 %v654
  %v659 = vunpack.c.h.b16 %v654
  %v660 = vunpack.c.l.b16 %v655
  %v661 = vunpack.c.h.b16 %v655
  %v662 = vpack.c.b16 %v658, %v658
  %v663 = vpack.c.b16 %v659, %v659
  %v664 = vpack.c.b16 %v660, %v660
  %v665 = vpack.c.b16 %v661, %v661
  %670 = vst [vmem:[%s5] sm:$0xf] %v662
  %671 = vst [vmem:[%s5 + $0x4] sm:$0xf] %v663
  %672 = vst [vmem:[%s5 + $0x8] sm:$0xf] %v664
  %673 = vst [vmem:[%s5 + $0xc] sm:$0xf] %v665
  %v674 = vld [vmem:[%s3] sm:$0xf]
  %v675 = vld [vmem:[%s3 + $0x4] sm:$0xf]
  %v676 = vld [vmem:[%s3 + $0x8] sm:$0xf]
  %v677 = vld [vmem:[%s3 + $0xc] sm:$0xf]
  %v678 = vld [vmem:[%s4] sm:$0xff]
  %v679 = vld [vmem:[%s4 + $0x8] sm:$0xff]
  %v680 = vld [vmem:[%s4 + $0x10] sm:$0xff]
  %v681 = vld [vmem:[%s4 + $0x18] sm:$0xff]
  %683 = vset.pattern.permute.xlu0 0
  %684 = vperm.xlu0 %683, %v678
  %v685 = vpop.permute.xlu0 %684
  %688 = vset.pattern.permute.xlu0 0
  %689 = vperm.xlu0 %688, %v679
  %v690 = vpop.permute.xlu0 %689
  %693 = vset.pattern.permute.xlu0 0
  %694 = vperm.xlu0 %693, %v680
  %v695 = vpop.permute.xlu0 %694
  %698 = vset.pattern.permute.xlu0 0
  %699 = vperm.xlu0 %698, %v681
  %v700 = vpop.permute.xlu0 %699
  %v706 = vunpack.c.l.b16 %v674
  %v707 = vunpack.c.l.b16 %v675
  %v708 = vunpack.c.l.b16 %v676
  %v709 = vunpack.c.l.b16 %v677
  %v710 = vpack.c.b16 %v707, %v706
  %v711 = vpack.c.b16 %v709, %v708
  %vm712 = vcmask 261120
  %v714 = vsel %vm712, %v710, 0
  %v717 = vsel %vm712, %v711, 0
  %719 = vmatprep.subr.bf16.mxu0 0
  %720 = vmatpush1.bf16.msra.mxu0 %v654
  %721 = vmatprep.subr.bf16.mxu0 0
  %722 = vmatpush1.bf16.msra.mxu0 %v655
  %723 = vmatprep.subr.bf16.mxu0 0
  %724 = vmatpush1.bf16.msra.mxu0 0
  %725 = vmatprep.subr.bf16.mxu0 0
  %726 = vmatpush1.bf16.msra.mxu0 0
  %727 = vmatprep.subr.bf16.mxu0 0
  %728 = vmatpush1.bf16.msra.mxu0 0
  %729 = vmatprep.subr.bf16.mxu0 0
  %730 = vmatpush1.bf16.msra.mxu0 0
  %731 = vmatprep.subr.bf16.mxu0 0
  %732 = vmatpush1.bf16.msra.mxu0 0
  %733 = vmatprep.subr.bf16.mxu0 0
  %734 = vmatpush1.bf16.msra.mxu0 0
  %735 = vmatprep.subr.bf16.mxu0 0
  %736 = vmatpush1.bf16.msra.mxu0 0
  %737 = vmatprep.subr.bf16.mxu0 0
  %738 = vmatpush1.bf16.msra.mxu0 0
  %739 = vmatprep.subr.bf16.mxu0 0
  %740 = vmatpush1.bf16.msra.mxu0 0
  %741 = vmatprep.subr.bf16.mxu0 0
  %742 = vmatpush1.bf16.msra.mxu0 0
  %743 = vmatprep.subr.bf16.mxu0 0
  %744 = vmatpush1.bf16.msra.mxu0 0
  %745 = vmatprep.subr.bf16.mxu0 0
  %746 = vmatpush1.bf16.msra.mxu0 0
  %747 = vmatprep.subr.bf16.mxu0 0
  %748 = vmatpush1.bf16.msra.mxu0 0
  %749 = vmatprep.subr.bf16.mxu0 0
  %750 = vmatpush1.bf16.msra.mxu0 0
  %751 = vmatprep.mubr.bf16.mxu0 0
  %752 = vmatmul.mubr.bf16.gmra.mrb[0].mxu0 %v714
  %v753 = vpop.f32.mrb[0].mxu0
  %v754 = vadd.f32 %v685, %v753
  %v755 = vpop.f32.mrb[0].mxu0
  %v756 = vpop.f32.mrb[0].mxu0
  %v757 = vadd.f32 %v690, %v756
  %v758 = vpop.f32.mrb[0].mxu0
  %759 = vmatprep.mubr.bf16.mxu0 0
  %760 = vmatmul.mubr.bf16.gmra.mrb[0].mxu0 %v717
  %v761 = vpop.f32.mrb[0].mxu0
  %v762 = vadd.f32 %v695, %v761
  %v763 = vpop.f32.mrb[0].mxu0
  %v764 = vpop.f32.mrb[0].mxu0
  %v765 = vadd.f32 %v700, %v764
  %v766 = vpop.f32.mrb[0].mxu0
  %767 = vdwg.mxu0
  %v768 = vmax.f32 %v754, 0.0
  %v769 = vmax.f32 %v757, 0.0
  %v770 = vmax.f32 %v762, 0.0
  %v771 = vmax.f32 %v765, 0.0
  %v772 = vpack.c.bf16 %v769, %v768
  %v773 = vpack.c.bf16 %v771, %v770
  %v776 = vunpack.c.l.b16 %v772
  %v777 = vunpack.c.h.b16 %v772
  %v778 = vunpack.c.l.b16 %v773
  %v779 = vunpack.c.h.b16 %v773
  %v780 = vpack.c.b16 %v776, %v776
  %v781 = vpack.c.b16 %v777, %v777
  %v782 = vpack.c.b16 %v778, %v778
  %v783 = vpack.c.b16 %v779, %v779
  %788 = vst [vmem:[%s6] sm:$0xf] %v780
  %789 = vst [vmem:[%s6 + $0x4] sm:$0xf] %v781
  %790 = vst [vmem:[%s6 + $0x8] sm:$0xf] %v782
  %791 = vst [vmem:[%s6 + $0xc] sm:$0xf] %v783
  // Predicated region
  $region22: #{lwtl_box_net_forward.10} parent=0 // pred_check
    _
  $region23: #{lwtl_box_net_forward.10} parent=0 // pred_check_branch
    %793 = sbr.rel (0) target = $region25
  $region24: #{lwtl_box_net_forward.10} parent=0 // pred_region
    _
  $region25: #{lwtl_box_net_forward.10} parent=0 // pred_fallthru
    _
  // Predicated region
  $region26: #{lwtl_box_net_forward.10} parent=0 // pred_check
    _
  $region27: #{lwtl_box_net_forward.10} parent=0 // pred_check_branch
    %795 = sbr.rel (0) target = $region29
  $region28: #{lwtl_box_net_forward.10} parent=0 // pred_region
    _
  $region29: #{lwtl_box_net_forward.10} parent=0 // pred_fallthru
    _
  // Predicated region
  $region30: #{lwtl_box_net_forward.10} parent=0 // pred_check
    _
  $region31: #{lwtl_box_net_forward.10} parent=0 // pred_check_branch
    %797 = sbr.rel (0) target = $region33
  $region32: #{lwtl_box_net_forward.10} parent=0 // pred_region
    _
  $region33: #{lwtl_box_net_forward.10} parent=0 // pred_fallthru
    _
  // Predicated region
  $region34: #{lwtl_box_net_forward.10} parent=0 // pred_check
    _
  $region35: #{lwtl_box_net_forward.10} parent=0 // pred_check_branch
    %799 = sbr.rel (0) target = $region37
  $region36: #{lwtl_box_net_forward.10} parent=0 // pred_region
    _
  $region37: #{lwtl_box_net_forward.10} parent=0 // pred_fallthru
    _

// kernel: lwtl_box_net_forward.13
$region0: #{lwtl_box_net_forward.13}
  #allocation0 [shape = 'u32[]', space=smem, size = 0x4, offset = 0x4, fixed_abs, tag = 'smem constant byte address 0x4 - core index']
  #allocation1 [shape = 'u32[144,128]{1,0:T(1,128)}', space=vmem, size = 0x12000, scoped, tag = 'internal scratch']
  %s0 = inlined_call_operand.vmem [shape: bf16[32,128], index: 0, kind: input, shape index: {}]
  %s1 = inlined_call_operand.vmem [shape: f32[1,128], index: 1, kind: input, shape index: {}]
  %s2 = inlined_call_operand.vmem [shape: bf16[16,32], index: 2, kind: input, shape index: {}]
  %s3 = inlined_call_operand.vmem [shape: f32[16,1], index: 3, kind: input, shape index: {}]
  %s4 = inlined_call_operand.vmem [shape: f32[16,1], index: 4, kind: input, shape index: {}]
  %s5 = inlined_call_operand.vmem [shape: f32[8,128], index: 5, kind: output, shape index: {0}]
  %s6 = inlined_call_operand.vmem [shape: f32[8,128], index: 6, kind: output, shape index: {1}]
  %7 = xla_tuple %s5, %s6
  %s8 = sld [smem:[#allocation0]]
  $region38: #{lwtl_box_net_forward.13} parent=0
    _
  %s10 = ssub.s32 1, %s8
  %s11 = scalar_select 0, %s10, %s8
  // Predicated region
  $region2: #{lwtl_box_net_forward.13} parent=0 // pred_check
    _
  $region3: #{lwtl_box_net_forward.13} parent=0 // pred_check_branch
    %13 = sbr.rel (0) target = $region5
  $region4: #{lwtl_box_net_forward.13} parent=0 // pred_region
    _
  $region5: #{lwtl_box_net_forward.13} parent=0 // pred_fallthru
    _
  // Predicated region
  $region6: #{lwtl_box_net_forward.13} parent=0 // pred_check
    _
  $region7: #{lwtl_box_net_forward.13} parent=0 // pred_check_branch
    %15 = sbr.rel (0) target = $region9
  $region8: #{lwtl_box_net_forward.13} parent=0 // pred_region
    _
  $region9: #{lwtl_box_net_forward.13} parent=0 // pred_fallthru
    _
  // Predicated region
  $region10: #{lwtl_box_net_forward.13} parent=0 // pred_check
    _
  $region11: #{lwtl_box_net_forward.13} parent=0 // pred_check_branch
    %17 = sbr.rel (0) target = $region13
  $region12: #{lwtl_box_net_forward.13} parent=0 // pred_region
    _
  $region13: #{lwtl_box_net_forward.13} parent=0 // pred_fallthru
    _
  // Predicated region
  $region14: #{lwtl_box_net_forward.13} parent=0 // pred_check
    _
  $region15: #{lwtl_box_net_forward.13} parent=0 // pred_check_branch
    %19 = sbr.rel (0) target = $region17
  $region16: #{lwtl_box_net_forward.13} parent=0 // pred_region
    _
  $region17: #{lwtl_box_net_forward.13} parent=0 // pred_fallthru
    _
  // Predicated region
  $region18: #{lwtl_box_net_forward.13} parent=0 // pred_check
    _
  $region19: #{lwtl_box_net_forward.13} parent=0 // pred_check_branch
    %21 = sbr.rel (0) target = $region21
  $region20: #{lwtl_box_net_forward.13} parent=0 // pred_region
    _
  $region21: #{lwtl_box_net_forward.13} parent=0 // pred_fallthru
    _
  %v23 = vld [vmem:[%s2] sm:$0xf]
  %v24 = vld [vmem:[%s2 + $0x4] sm:$0xf]
  %v25 = vld [vmem:[%s0] sm:$0xf]
  %v26 = vld [vmem:[%s0 + $0x4] sm:$0xf]
  %v27 = vld [vmem:[%s0 + $0x8] sm:$0xf]
  %v28 = vld [vmem:[%s0 + $0xc] sm:$0xf]
  %v29 = vld [vmem:[%s3] sm:$0xff]
  %v30 = vld [vmem:[%s3 + $0x8] sm:$0xff]
  %v31 = vld [vmem:[%s1] sm:$0x1]
  %33 = vset.pattern.permute.xlu0 0
  %34 = vperm.xlu0 %33, %v29
  %v35 = vpop.permute.xlu0 %34
  %38 = vset.pattern.permute.xlu0 0
  %39 = vperm.xlu0 %38, %v30
  %v40 = vpop.permute.xlu0 %39
  %v43 = vlaneseq
  %v44 = vshrl.u32 %v43, 7
  %v45 = vsub.s32 0, %v44
  %v46 = vrot.slane %v31, %v45
  %v48 = vmul.f32 %v35, %v46
  %v49 = vmul.f32 %v40, %v46
  %v52 = vunpack.c.l.b16 %v23
  %v53 = vunpack.c.l.b16 %v24
  %v54 = vpack.c.b16 %v53, %v52
  %v59 = vunpack.c.l.b16 %v25
  %v60 = vunpack.c.l.b16 %v26
  %v61 = vunpack.c.l.b16 %v27
  %v62 = vunpack.c.l.b16 %v28
  %v63 = vpack.c.b16 %v60, %v59
  %v64 = vpack.c.b16 %v62, %v61
  %vm67 = vcmask 261120
  %v69 = vsel %vm67, %v54, 0
  %71 = vmatprep.subr.bf16.mxu0 0
  %72 = vmatpush1.bf16.msra.mxu0 %v63
  %73 = vmatprep.subr.bf16.mxu0 0
  %74 = vmatpush1.bf16.msra.mxu0 %v64
  %75 = vmatprep.subr.bf16.mxu0 0
  %76 = vmatpush1.bf16.msra.mxu0 0
  %77 = vmatprep.subr.bf16.mxu0 0
  %78 = vmatpush1.bf16.msra.mxu0 0
  %79 = vmatprep.subr.bf16.mxu0 0
  %80 = vmatpush1.bf16.msra.mxu0 0
  %81 = vmatprep.subr.bf16.mxu0 0
  %82 = vmatpush1.bf16.msra.mxu0 0
  %83 = vmatprep.subr.bf16.mxu0 0
  %84 = vmatpush1.bf16.msra.mxu0 0
  %85 = vmatprep.subr.bf16.mxu0 0
  %86 = vmatpush1.bf16.msra.mxu0 0
  %87 = vmatprep.subr.bf16.mxu0 0
  %88 = vmatpush1.bf16.msra.mxu0 0
  %89 = vmatprep.subr.bf16.mxu0 0
  %90 = vmatpush1.bf16.msra.mxu0 0
  %91 = vmatprep.subr.bf16.mxu0 0
  %92 = vmatpush1.bf16.msra.mxu0 0
  %93 = vmatprep.subr.bf16.mxu0 0
  %94 = vmatpush1.bf16.msra.mxu0 0
  %95 = vmatprep.subr.bf16.mxu0 0
  %96 = vmatpush1.bf16.msra.mxu0 0
  %97 = vmatprep.subr.bf16.mxu0 0
  %98 = vmatpush1.bf16.msra.mxu0 0
  %99 = vmatprep.subr.bf16.mxu0 0
  %100 = vmatpush1.bf16.msra.mxu0 0
  %101 = vmatprep.subr.bf16.mxu0 0
  %102 = vmatpush1.bf16.msra.mxu0 0
  %103 = vmatprep.mubr.bf16.mxu0 0
  %104 = vmatmul.mubr.bf16.gmra.mrb[0].mxu0 %v69
  %v105 = vpop.f32.mrb[0].mxu0
  %v106 = vadd.f32 %v48, %v105
  %v107 = vpop.f32.mrb[0].mxu0
  %v108 = vpop.f32.mrb[0].mxu0
  %v109 = vadd.f32 %v49, %v108
  %v110 = vpop.f32.mrb[0].mxu0
  %111 = vdwg.mxu0
  %v112 = vld [vmem:[%s4] sm:$0xff]
  %v113 = vld [vmem:[%s4 + $0x8] sm:$0xff]
  %115 = vset.pattern.permute.xlu0 0
  %116 = vperm.xlu0 %115, %v112
  %v117 = vpop.permute.xlu0 %116
  %120 = vset.pattern.permute.xlu0 0
  %121 = vperm.xlu0 %120, %v113
  %v122 = vpop.permute.xlu0 %121
  %v124 = vadd.f32 %v106, %v117
  %v125 = vadd.f32 %v109, %v122
  %126 = vst [vmem:[%s5] sm:$0xff] %v124
  %v127 = vmax.f32 %v125, 0.0
  %v128 = vand.u32 2147483647, %v125
  %v129 = vsub.f32 0.0, %v128
  %v130 = vmul.f32 %v129, 1.442695
  %v131 = vpow.pop %v130
  %v132 = vadd.f32 %v131, 1.0
  %v133 = vlog2.pop %v132
  %v134 = vmul.f32 %v133, 0.6931472
  %v135 = vadd.f32 %v127, %v134
  %v136 = vadd.f32 %v135, 0.01
  %137 = vst [vmem:[%s6] sm:$0xff] %v136
  // Predicated region
  $region22: #{lwtl_box_net_forward.13} parent=0 // pred_check
    _
  $region23: #{lwtl_box_net_forward.13} parent=0 // pred_check_branch
    %139 = sbr.rel (0) target = $region25
  $region24: #{lwtl_box_net_forward.13} parent=0 // pred_region
    _
  $region25: #{lwtl_box_net_forward.13} parent=0 // pred_fallthru
    _
  // Predicated region
  $region26: #{lwtl_box_net_forward.13} parent=0 // pred_check
    _
  $region27: #{lwtl_box_net_forward.13} parent=0 // pred_check_branch
    %141 = sbr.rel (0) target = $region29
  $region28: #{lwtl_box_net_forward.13} parent=0 // pred_region
    _
  $region29: #{lwtl_box_net_forward.13} parent=0 // pred_fallthru
    _
  // Predicated region
  $region30: #{lwtl_box_net_forward.13} parent=0 // pred_check
    _
  $region31: #{lwtl_box_net_forward.13} parent=0 // pred_check_branch
    %143 = sbr.rel (0) target = $region33
  $region32: #{lwtl_box_net_forward.13} parent=0 // pred_region
    _
  $region33: #{lwtl_box_net_forward.13} parent=0 // pred_fallthru
    _
  // Predicated region
  $region34: #{lwtl_box_net_forward.13} parent=0 // pred_check
    _
  $region35: #{lwtl_box_net_forward.13} parent=0 // pred_check_branch
    %145 = sbr.rel (0) target = $region37
  $region36: #{lwtl_box_net_forward.13} parent=0 // pred_region
    _
  $region37: #{lwtl_box_net_forward.13} parent=0 // pred_fallthru
    _

// kernel: lwtl_box_net_forward.16
$region0: #{lwtl_box_net_forward.16}
  #allocation0 [shape = 'u32[]', space=smem, size = 0x4, offset = 0x4, fixed_abs, tag = 'smem constant byte address 0x4 - core index']
  #allocation1 [shape = 'u32[144,128]{1,0:T(1,128)}', space=vmem, size = 0x12000, scoped, tag = 'internal scratch']
  %s0 = inlined_call_operand.vmem [shape: f32[2,24,32], index: 0, kind: input, shape index: {}]
  %s1 = inlined_call_operand.vmem [shape: bf16[2,32,64], index: 1, kind: input, shape index: {}]
  %s2 = inlined_call_operand.vmem [shape: f32[2,24,64], index: 2, kind: output, shape index: {}]
  %s3 = sld [smem:[#allocation0]]
  $region41: #{lwtl_box_net_forward.16} parent=0
    _
  %s5 = ssub.s32 1, %s3
  %s6 = scalar_select 0, %s5, %s3
  loop: start=0, step=1, limit=4
  $region2: #{lwtl_box_net_forward.16} parent=0 // loop_pre_header
    _
  $region3: #{lwtl_box_net_forward.16} parent=0 // loop_header
    %s8 = sphi 0, %s12
    %p9 = scmp.ge.s32.totalorder %s8, 4
    %s18 = sphi 0, %s20
    %s21 = sphi 0, %s18
    %s22 = sphi 0, %s21
    %s38 = sphi 0, %s22
    %s44 = sphi 0, %s46
    %s47 = sphi 0, %s44
    %s48 = sphi 0, %s47
    %s64 = sphi 0, %s48
    %s70 = sphi 0, %s72
    %s73 = sphi 0, %s70
    %s74 = sphi 0, %s73
    %s90 = sphi 0, %s74
  $region4: #{lwtl_box_net_forward.16} parent=0 // loop_header_branch
    %11 = sbr.rel (%p9) target = $region8
  $region5: #{lwtl_box_net_forward.16} parent=0 // loop_body
    %s13 = ssub.s32 %s8, 1
    %s14 = ssub.s32 %s8, 2
    %s15 = sadd.s32 %s8, 1
    %s16 = ssub.s32 %s8, %s15
    %p17 = scmp.eq.s32.totalorder %s16, 0
    %s19 = sadd.s32 %s18, 1
    %s20 = scalar_select %p17, %s18, %s19
    %p23 = pneg %p17
    %p24 = scmp.eq.s32.totalorder %s8, 1
    %p25 = por %p23, %p24
    %p26 = scmp.ne.s32.totalorder %s18, %s21
    %p27 = scmp.eq.s32.totalorder %s8, 0
    %p28 = por %p26, %p27
    %p29 = scmp.ne.s32.totalorder %s18, %s21
    %p30 = scmp.eq.s32.totalorder %s13, 1
    %p31 = por %p29, %p30
    %p32 = scmp.ne.s32.totalorder %s21, %s22
    %p33 = scmp.eq.s32.totalorder %s13, 0
    %p34 = por %p32, %p33
    %p35 = scmp.ne.s32.totalorder %s21, %s22
    %p36 = scmp.eq.s32.totalorder %s14, 1
    %p37 = por %p35, %p36
    %p39 = scmp.ne.s32.totalorder %s22, %s38
    %p40 = scmp.eq.s32.totalorder %s14, 0
    %p41 = por %p39, %p40
    %s42 = ssub.s32 %s8, %s15
    %p43 = scmp.eq.s32.totalorder %s42, 0
    %s45 = sadd.s32 %s44, 1
    %s46 = scalar_select %p43, %s44, %s45
    %p49 = pneg %p43
    %p50 = scmp.eq.s32.totalorder %s8, 1
    %p51 = por %p49, %p50
    %p52 = scmp.ne.s32.totalorder %s44, %s47
    %p53 = scmp.eq.s32.totalorder %s8, 0
    %p54 = por %p52, %p53
    %p55 = scmp.ne.s32.totalorder %s44, %s47
    %p56 = scmp.eq.s32.totalorder %s13, 1
    %p57 = por %p55, %p56
    %p58 = scmp.ne.s32.totalorder %s47, %s48
    %p59 = scmp.eq.s32.totalorder %s13, 0
    %p60 = por %p58, %p59
    %p61 = scmp.ne.s32.totalorder %s47, %s48
    %p62 = scmp.eq.s32.totalorder %s14, 1
    %p63 = por %p61, %p62
    %p65 = scmp.ne.s32.totalorder %s48, %s64
    %p66 = scmp.eq.s32.totalorder %s14, 0
    %p67 = por %p65, %p66
    %s68 = ssub.s32 %s8, %s15
    %p69 = scmp.eq.s32.totalorder %s68, 0
    %s71 = sadd.s32 %s70, 1
    %s72 = scalar_select %p69, %s70, %s71
    %p75 = pneg %p69
    %p76 = scmp.eq.s32.totalorder %s8, 1
    %p77 = por %p75, %p76
    %p78 = scmp.ne.s32.totalorder %s70, %s73
    %p79 = scmp.eq.s32.totalorder %s8, 0
    %p80 = por %p78, %p79
    %p81 = scmp.ne.s32.totalorder %s70, %s73
    %p82 = scmp.eq.s32.totalorder %s13, 1
    %p83 = por %p81, %p82
    %p84 = scmp.ne.s32.totalorder %s73, %s74
    %p85 = scmp.eq.s32.totalorder %s13, 0
    %p86 = por %p84, %p85
    %p87 = scmp.ne.s32.totalorder %s73, %s74
    %p88 = scmp.eq.s32.totalorder %s14, 1
    %p89 = por %p87, %p88
    %p91 = scmp.ne.s32.totalorder %s74, %s90
    %p92 = scmp.eq.s32.totalorder %s14, 0
    %p93 = por %p91, %p92
    %p94 = scmp.le.s32.totalorder 1, %s8
    %p95 = scmp.lt.s32.totalorder %s8, 3
    %p96 = pnand %p94, %p95
    %p97 = pneg %p96
    // Predicated region
    $region9: #{lwtl_box_net_forward.16} parent=5 // pred_check
      _
    $region10: #{lwtl_box_net_forward.16} parent=5 // pred_check_branch
      %99 = sbr.rel (%p96) target = $region12
    $region11: #{lwtl_box_net_forward.16} parent=5 // pred_region
      %s100 = ssub.s32 %s8, 1
    $region12: #{lwtl_box_net_forward.16} parent=5 // pred_fallthru
      _
    %p101 = scmp.lt.s32.totalorder %s8, 2
    // Predicated region
    $region13: #{lwtl_box_net_forward.16} parent=5 // pred_check
      %p102 = pneg %p101
    $region14: #{lwtl_box_net_forward.16} parent=5 // pred_check_branch
      %104 = sbr.rel (%p102) target = $region16
    $region15: #{lwtl_box_net_forward.16} parent=5 // pred_region
      // Predicated region
      $region17: #{lwtl_box_net_forward.16} parent=15 // pred_check
        %p105 = pneg %p28
      $region18: #{lwtl_box_net_forward.16} parent=15 // pred_check_branch
        %107 = sbr.rel (%p105) target = $region20
      $region19: #{lwtl_box_net_forward.16} parent=15 // pred_region
        %p108 = scmp.lt.s32.totalorder %s8, 1
        %s109 = scalar_select %p108, %s8, 1
        %s110 = smul.addr %s109, 3
        %s111 = smul.addr %s110, 8
        %s112 = scalar_lea.vmem %s0, %s111
      $region20: #{lwtl_box_net_forward.16} parent=15 // pred_fallthru
        _
      // Predicated region
      $region21: #{lwtl_box_net_forward.16} parent=15 // pred_check
        %p113 = pneg %p54
      $region22: #{lwtl_box_net_forward.16} parent=15 // pred_check_branch
        %115 = sbr.rel (%p113) target = $region24
      $region23: #{lwtl_box_net_forward.16} parent=15 // pred_region
        %p116 = scmp.lt.s32.totalorder %s8, 1
        %s117 = scalar_select %p116, %s8, 1
        %s118 = smul.addr %s117, 4
        %s119 = smul.addr %s118, 4
        %s120 = scalar_lea.vmem %s1, %s119
      $region24: #{lwtl_box_net_forward.16} parent=15 // pred_fallthru
        _
    $region16: #{lwtl_box_net_forward.16} parent=5 // pred_fallthru
      _
    %p121 = scmp.le.s32.totalorder 1, %s8
    %p122 = scmp.lt.s32.totalorder %s8, 3
    %p123 = pnand %p121, %p122
    %p124 = pneg %p123
    // Predicated region
    $region25: #{lwtl_box_net_forward.16} parent=5 // pred_check
      _
    $region26: #{lwtl_box_net_forward.16} parent=5 // pred_check_branch
      %126 = sbr.rel (%p123) target = $region28
    $region27: #{lwtl_box_net_forward.16} parent=5 // pred_region
      %s127 = ssub.s32 %s8, 1
      %p128 = scmp.lt.s32.totalorder %s13, 1
      %s129 = scalar_select %p128, %s13, 1
      %s130 = smul.addr %s129, 3
      %s131 = smul.addr %s130, 8
      %s132 = scalar_lea.vmem %s0, %s131
      %p133 = pneg %p34
      %p134 = pneg %p31
      %p135 = scmp.lt.s32.totalorder %s13, 1
      %s136 = scalar_select %p135, %s13, 1
      %s137 = smul.addr %s136, 4
      %s138 = smul.addr %s137, 4
      %s139 = scalar_lea.vmem %s1, %s138
      %p140 = pneg %p60
      %p141 = pneg %p57
      %p142 = pneg %p86
      %p143 = pneg %p83
      %p144 = scmp.lt.s32.totalorder %s13, 1
      %s145 = scalar_select %p144, %s13, 1
      %s146 = smul.addr %s145, 3
      %s147 = smul.addr %s146, 8
      %s148 = scalar_lea.vmem %s2, %s147
      %p149 = scmp.lt.s32.totalorder %s13, 1
      %s150 = scalar_select %p149, %s13, 1
      %s151 = smul.addr %s150, 3
      %s152 = smul.addr %s151, 8
      %s153 = scalar_lea.vmem %s0, %s152
      %p154 = scmp.lt.s32.totalorder %s13, 1
      %s155 = scalar_select %p154, %s13, 1
      %s156 = smul.addr %s155, 4
      %s157 = smul.addr %s156, 4
      %s158 = scalar_lea.vmem %s1, %s157
      %p159 = scmp.lt.s32.totalorder %s13, 1
      %s160 = scalar_select %p159, %s13, 1
      %s161 = smul.addr %s160, 3
      %s162 = smul.addr %s161, 8
      %s163 = scalar_lea.vmem %s2, %s162
      %v165 = vld [vmem:[%s153] sm:$0xff]
      %v166 = vld [vmem:[%s153 + $0x8] sm:$0xff]
      %v167 = vld [vmem:[%s153 + $0x10] sm:$0xff]
      %v168 = vld [vmem:[%s158] sm:$0xf]
      %v169 = vld [vmem:[%s158 + $0x4] sm:$0xf]
      %v170 = vld [vmem:[%s158 + $0x8] sm:$0xf]
      %v171 = vld [vmem:[%s158 + $0xc] sm:$0xf]
      %v172 = vpack.c.bf16 %v166, %v165
      %v173 = vpack.c.bf16 %v167, %v167
      %v178 = vunpack.c.l.b16 %v168
      %v179 = vunpack.c.l.b16 %v169
      %v180 = vunpack.c.l.b16 %v170
      %v181 = vunpack.c.l.b16 %v171
      %v182 = vpack.c.b16 %v179, %v178
      %v183 = vpack.c.b16 %v181, %v180
      %vm186 = vcmask 261120
      %v188 = vsel %vm186, %v172, 0
      %v191 = vsel %vm186, %v173, 0
      %193 = vmatprep.subr.bf16.mxu0 0
      %194 = vmatpush1.bf16.msra.mxu0 %v182
      %195 = vmatprep.subr.bf16.mxu0 0
      %196 = vmatpush1.bf16.msra.mxu0 %v183
      %197 = vmatprep.subr.bf16.mxu0 0
      %198 = vmatpush1.bf16.msra.mxu0 0
      %199 = vmatprep.subr.bf16.mxu0 0
      %200 = vmatpush1.bf16.msra.mxu0 0
      %201 = vmatprep.subr.bf16.mxu0 0
      %202 = vmatpush1.bf16.msra.mxu0 0
      %203 = vmatprep.subr.bf16.mxu0 0
      %204 = vmatpush1.bf16.msra.mxu0 0
      %205 = vmatprep.subr.bf16.mxu0 0
      %206 = vmatpush1.bf16.msra.mxu0 0
      %207 = vmatprep.subr.bf16.mxu0 0
      %208 = vmatpush1.bf16.msra.mxu0 0
      %209 = vmatprep.subr.bf16.mxu0 0
      %210 = vmatpush1.bf16.msra.mxu0 0
      %211 = vmatprep.subr.bf16.mxu0 0
      %212 = vmatpush1.bf16.msra.mxu0 0
      %213 = vmatprep.subr.bf16.mxu0 0
      %214 = vmatpush1.bf16.msra.mxu0 0
      %215 = vmatprep.subr.bf16.mxu0 0
      %216 = vmatpush1.bf16.msra.mxu0 0
      %217 = vmatprep.subr.bf16.mxu0 0
      %218 = vmatpush1.bf16.msra.mxu0 0
      %219 = vmatprep.subr.bf16.mxu0 0
      %220 = vmatpush1.bf16.msra.mxu0 0
      %221 = vmatprep.subr.bf16.mxu0 0
      %222 = vmatpush1.bf16.msra.mxu0 0
      %223 = vmatprep.subr.bf16.mxu0 0
      %224 = vmatpush1.bf16.msra.mxu0 0
      %225 = vmatprep.mubr.bf16.mxu0 0
      %226 = vmatmul.mubr.bf16.gmra.mrb[0].mxu0 %v188
      %v227 = vpop.f32.mrb[0].mxu0
      %v228 = vadd.f32 0.0, %v227
      %v229 = vpop.f32.mrb[0].mxu0
      %v230 = vpop.f32.mrb[0].mxu0
      %v231 = vadd.f32 0.0, %v230
      %v232 = vpop.f32.mrb[0].mxu0
      %233 = vmatprep.mubr.bf16.mxu0 0
      %234 = vmatmul.mubr.bf16.gmra.mrb[0].mxu0 %v191
      %v235 = vpop.f32.mrb[0].mxu0
      %v236 = vadd.f32 0.0, %v235
      %v237 = vpop.f32.mrb[0].mxu0
      %v238 = vpop.f32.mrb[0].mxu0
      %v239 = vpop.f32.mrb[0].mxu0
      %240 = vdwg.mxu0
      %vm241 = vcmask 523264
      %242 = vst.msk [vmem:[%s163] sm:$0xff] %vm241, %v228
      %243 = vst.msk [vmem:[%s163 + $0x8] sm:$0xff] %vm241, %v231
      %244 = vst.msk [vmem:[%s163 + $0x10] sm:$0xff] %vm241, %v236
      %p245 = scmp.lt.s32.totalorder %s13, 1
      %s246 = scalar_select %p245, %s13, 1
      %s247 = smul.addr %s246, 3
      %s248 = smul.addr %s247, 8
      %s249 = scalar_lea.vmem %s2, %s248
      // Predicated region
      $region29: #{lwtl_box_net_forward.16} parent=27 // pred_check
        %p250 = pneg %p83
      $region30: #{lwtl_box_net_forward.16} parent=27 // pred_check_branch
        %252 = sbr.rel (%p250) target = $region32
      $region31: #{lwtl_box_net_forward.16} parent=27 // pred_region
        _
      $region32: #{lwtl_box_net_forward.16} parent=27 // pred_fallthru
        _
    $region28: #{lwtl_box_net_forward.16} parent=5 // pred_fallthru
      _
    %p253 = scmp.le.s32.totalorder 2, %s8
    // Predicated region
    $region33: #{lwtl_box_net_forward.16} parent=5 // pred_check
      %p254 = pneg %p253
    $region34: #{lwtl_box_net_forward.16} parent=5 // pred_check_branch
      %256 = sbr.rel (%p254) target = $region36
    $region35: #{lwtl_box_net_forward.16} parent=5 // pred_region
      %s257 = ssub.s32 %s8, 2
      // Predicated region
      $region37: #{lwtl_box_net_forward.16} parent=35 // pred_check
        %p258 = pneg %p89
      $region38: #{lwtl_box_net_forward.16} parent=35 // pred_check_branch
        %260 = sbr.rel (%p258) target = $region40
      $region39: #{lwtl_box_net_forward.16} parent=35 // pred_region
        %p261 = scmp.lt.s32.totalorder %s14, 1
        %s262 = scalar_select %p261, %s14, 1
        %s263 = smul.addr %s262, 3
        %s264 = smul.addr %s263, 8
        %s265 = scalar_lea.vmem %s2, %s264
      $region40: #{lwtl_box_net_forward.16} parent=35 // pred_fallthru
        _
    $region36: #{lwtl_box_net_forward.16} parent=5 // pred_fallthru
      _
  $region6: #{lwtl_box_net_forward.16} parent=0 // loop_footer
    %s12 = sadd.s32 1, %s8
  $region7: #{lwtl_box_net_forward.16} parent=0 // loop_footer_branch
    %7 = sbr.rel target = $region3
  $region8: #{lwtl_box_net_forward.16} parent=0 // loop_exit
    _

// kernel: lwtl_box_net_forward.15
$region0: #{lwtl_box_net_forward.15}
  #allocation0 [shape = 'u32[]', space=smem, size = 0x4, offset = 0x4, fixed_abs, tag = 'smem constant byte address 0x4 - core index']
  #allocation1 [shape = 'u32[144,128]{1,0:T(1,128)}', space=vmem, size = 0x12000, scoped, tag = 'internal scratch']
  %s0 = inlined_call_operand.vmem [shape: bf16[2,32,64], index: 0, kind: input, shape index: {}]
  %s1 = inlined_call_operand.vmem [shape: f32[2,8,64], index: 1, kind: input, shape index: {}]
  %s2 = inlined_call_operand.vmem [shape: f32[2,8,64], index: 2, kind: input, shape index: {}]
  %s3 = inlined_call_operand.vmem [shape: f32[2,24,32], index: 3, kind: output, shape index: {}]
  %s4 = sld [smem:[#allocation0]]
  $region45: #{lwtl_box_net_forward.15} parent=0
    _
  %s6 = ssub.s32 1, %s4
  %s7 = scalar_select 0, %s6, %s4
  loop: start=0, step=1, limit=4
  $region2: #{lwtl_box_net_forward.15} parent=0 // loop_pre_header
    _
  $region3: #{lwtl_box_net_forward.15} parent=0 // loop_header
    %s9 = sphi 0, %s13
    %p10 = scmp.ge.s32.totalorder %s9, 4
    %s19 = sphi 0, %s21
    %s22 = sphi 0, %s19
    %s23 = sphi 0, %s22
    %s39 = sphi 0, %s23
    %s45 = sphi 0, %s47
    %s48 = sphi 0, %s45
    %s49 = sphi 0, %s48
    %s65 = sphi 0, %s49
    %s71 = sphi 0, %s73
    %s74 = sphi 0, %s71
    %s75 = sphi 0, %s74
    %s91 = sphi 0, %s75
    %s97 = sphi 0, %s99
    %s100 = sphi 0, %s97
    %s101 = sphi 0, %s100
    %s117 = sphi 0, %s101
  $region4: #{lwtl_box_net_forward.15} parent=0 // loop_header_branch
    %12 = sbr.rel (%p10) target = $region8
  $region5: #{lwtl_box_net_forward.15} parent=0 // loop_body
    %s14 = ssub.s32 %s9, 1
    %s15 = ssub.s32 %s9, 2
    %s16 = sadd.s32 %s9, 1
    %s17 = ssub.s32 %s9, %s16
    %p18 = scmp.eq.s32.totalorder %s17, 0
    %s20 = sadd.s32 %s19, 1
    %s21 = scalar_select %p18, %s19, %s20
    %p24 = pneg %p18
    %p25 = scmp.eq.s32.totalorder %s9, 1
    %p26 = por %p24, %p25
    %p27 = scmp.ne.s32.totalorder %s19, %s22
    %p28 = scmp.eq.s32.totalorder %s9, 0
    %p29 = por %p27, %p28
    %p30 = scmp.ne.s32.totalorder %s19, %s22
    %p31 = scmp.eq.s32.totalorder %s14, 1
    %p32 = por %p30, %p31
    %p33 = scmp.ne.s32.totalorder %s22, %s23
    %p34 = scmp.eq.s32.totalorder %s14, 0
    %p35 = por %p33, %p34
    %p36 = scmp.ne.s32.totalorder %s22, %s23
    %p37 = scmp.eq.s32.totalorder %s15, 1
    %p38 = por %p36, %p37
    %p40 = scmp.ne.s32.totalorder %s23, %s39
    %p41 = scmp.eq.s32.totalorder %s15, 0
    %p42 = por %p40, %p41
    %s43 = ssub.s32 %s9, %s16
    %p44 = scmp.eq.s32.totalorder %s43, 0
    %s46 = sadd.s32 %s45, 1
    %s47 = scalar_select %p44, %s45, %s46
    %p50 = pneg %p44
    %p51 = scmp.eq.s32.totalorder %s9, 1
    %p52 = por %p50, %p51
    %p53 = scmp.ne.s32.totalorder %s45, %s48
    %p54 = scmp.eq.s32.totalorder %s9, 0
    %p55 = por %p53, %p54
    %p56 = scmp.ne.s32.totalorder %s45, %s48
    %p57 = scmp.eq.s32.totalorder %s14, 1
    %p58 = por %p56, %p57
    %p59 = scmp.ne.s32.totalorder %s48, %s49
    %p60 = scmp.eq.s32.totalorder %s14, 0
    %p61 = por %p59, %p60
    %p62 = scmp.ne.s32.totalorder %s48, %s49
    %p63 = scmp.eq.s32.totalorder %s15, 1
    %p64 = por %p62, %p63
    %p66 = scmp.ne.s32.totalorder %s49, %s65
    %p67 = scmp.eq.s32.totalorder %s15, 0
    %p68 = por %p66, %p67
    %s69 = ssub.s32 %s9, %s16
    %p70 = scmp.eq.s32.totalorder %s69, 0
    %s72 = sadd.s32 %s71, 1
    %s73 = scalar_select %p70, %s71, %s72
    %p76 = pneg %p70
    %p77 = scmp.eq.s32.totalorder %s9, 1
    %p78 = por %p76, %p77
    %p79 = scmp.ne.s32.totalorder %s71, %s74
    %p80 = scmp.eq.s32.totalorder %s9, 0
    %p81 = por %p79, %p80
    %p82 = scmp.ne.s32.totalorder %s71, %s74
    %p83 = scmp.eq.s32.totalorder %s14, 1
    %p84 = por %p82, %p83
    %p85 = scmp.ne.s32.totalorder %s74, %s75
    %p86 = scmp.eq.s32.totalorder %s14, 0
    %p87 = por %p85, %p86
    %p88 = scmp.ne.s32.totalorder %s74, %s75
    %p89 = scmp.eq.s32.totalorder %s15, 1
    %p90 = por %p88, %p89
    %p92 = scmp.ne.s32.totalorder %s75, %s91
    %p93 = scmp.eq.s32.totalorder %s15, 0
    %p94 = por %p92, %p93
    %s95 = ssub.s32 %s9, %s16
    %p96 = scmp.eq.s32.totalorder %s95, 0
    %s98 = sadd.s32 %s97, 1
    %s99 = scalar_select %p96, %s97, %s98
    %p102 = pneg %p96
    %p103 = scmp.eq.s32.totalorder %s9, 1
    %p104 = por %p102, %p103
    %p105 = scmp.ne.s32.totalorder %s97, %s100
    %p106 = scmp.eq.s32.totalorder %s9, 0
    %p107 = por %p105, %p106
    %p108 = scmp.ne.s32.totalorder %s97, %s100
    %p109 = scmp.eq.s32.totalorder %s14, 1
    %p110 = por %p108, %p109
    %p111 = scmp.ne.s32.totalorder %s100, %s101
    %p112 = scmp.eq.s32.totalorder %s14, 0
    %p113 = por %p111, %p112
    %p114 = scmp.ne.s32.totalorder %s100, %s101
    %p115 = scmp.eq.s32.totalorder %s15, 1
    %p116 = por %p114, %p115
    %p118 = scmp.ne.s32.totalorder %s101, %s117
    %p119 = scmp.eq.s32.totalorder %s15, 0
    %p120 = por %p118, %p119
    %p121 = scmp.le.s32.totalorder 1, %s9
    %p122 = scmp.lt.s32.totalorder %s9, 3
    %p123 = pnand %p121, %p122
    %p124 = pneg %p123
    // Predicated region
    $region9: #{lwtl_box_net_forward.15} parent=5 // pred_check
      _
    $region10: #{lwtl_box_net_forward.15} parent=5 // pred_check_branch
      %126 = sbr.rel (%p123) target = $region12
    $region11: #{lwtl_box_net_forward.15} parent=5 // pred_region
      %s127 = ssub.s32 %s9, 1
    $region12: #{lwtl_box_net_forward.15} parent=5 // pred_fallthru
      _
    %p128 = scmp.lt.s32.totalorder %s9, 2
    // Predicated region
    $region13: #{lwtl_box_net_forward.15} parent=5 // pred_check
      %p129 = pneg %p128
    $region14: #{lwtl_box_net_forward.15} parent=5 // pred_check_branch
      %131 = sbr.rel (%p129) target = $region16
    $region15: #{lwtl_box_net_forward.15} parent=5 // pred_region
      // Predicated region
      $region17: #{lwtl_box_net_forward.15} parent=15 // pred_check
        %p132 = pneg %p29
      $region18: #{lwtl_box_net_forward.15} parent=15 // pred_check_branch
        %134 = sbr.rel (%p132) target = $region20
      $region19: #{lwtl_box_net_forward.15} parent=15 // pred_region
        %p135 = scmp.lt.s32.totalorder %s9, 1
        %s136 = scalar_select %p135, %s9, 1
        %s137 = smul.addr %s136, 4
        %s138 = smul.addr %s137, 4
        %s139 = scalar_lea.vmem %s0, %s138
      $region20: #{lwtl_box_net_forward.15} parent=15 // pred_fallthru
        _
      // Predicated region
      $region21: #{lwtl_box_net_forward.15} parent=15 // pred_check
        %p140 = pneg %p55
      $region22: #{lwtl_box_net_forward.15} parent=15 // pred_check_branch
        %142 = sbr.rel (%p140) target = $region24
      $region23: #{lwtl_box_net_forward.15} parent=15 // pred_region
        %p143 = scmp.lt.s32.totalorder %s9, 1
        %s144 = scalar_select %p143, %s9, 1
        %s145 = smul.addr %s144, 8
        %s146 = scalar_lea.vmem %s1, %s145
      $region24: #{lwtl_box_net_forward.15} parent=15 // pred_fallthru
        _
      // Predicated region
      $region25: #{lwtl_box_net_forward.15} parent=15 // pred_check
        %p147 = pneg %p81
      $region26: #{lwtl_box_net_forward.15} parent=15 // pred_check_branch
        %149 = sbr.rel (%p147) target = $region28
      $region27: #{lwtl_box_net_forward.15} parent=15 // pred_region
        %p150 = scmp.lt.s32.totalorder %s9, 1
        %s151 = scalar_select %p150, %s9, 1
        %s152 = smul.addr %s151, 8
        %s153 = scalar_lea.vmem %s2, %s152
      $region28: #{lwtl_box_net_forward.15} parent=15 // pred_fallthru
        _
    $region16: #{lwtl_box_net_forward.15} parent=5 // pred_fallthru
      _
    %p154 = scmp.le.s32.totalorder 1, %s9
    %p155 = scmp.lt.s32.totalorder %s9, 3
    %p156 = pnand %p154, %p155
    %p157 = pneg %p156
    // Predicated region
    $region29: #{lwtl_box_net_forward.15} parent=5 // pred_check
      _
    $region30: #{lwtl_box_net_forward.15} parent=5 // pred_check_branch
      %159 = sbr.rel (%p156) target = $region32
    $region31: #{lwtl_box_net_forward.15} parent=5 // pred_region
      %s160 = ssub.s32 %s9, 1
      %p161 = scmp.lt.s32.totalorder %s14, 1
      %s162 = scalar_select %p161, %s14, 1
      %s163 = smul.addr %s162, 4
      %s164 = smul.addr %s163, 4
      %s165 = scalar_lea.vmem %s0, %s164
      %p166 = pneg %p35
      %p167 = pneg %p32
      %p168 = scmp.lt.s32.totalorder %s14, 1
      %s169 = scalar_select %p168, %s14, 1
      %s170 = smul.addr %s169, 8
      %s171 = scalar_lea.vmem %s1, %s170
      %p172 = pneg %p61
      %p173 = pneg %p58
      %p174 = scmp.lt.s32.totalorder %s14, 1
      %s175 = scalar_select %p174, %s14, 1
      %s176 = smul.addr %s175, 8
      %s177 = scalar_lea.vmem %s2, %s176
      %p178 = pneg %p87
      %p179 = pneg %p84
      %p180 = pneg %p113
      %p181 = pneg %p110
      %p182 = scmp.lt.s32.totalorder %s14, 1
      %s183 = scalar_select %p182, %s14, 1
      %s184 = smul.addr %s183, 3
      %s185 = smul.addr %s184, 8
      %s186 = scalar_lea.vmem %s3, %s185
      %p187 = scmp.lt.s32.totalorder %s14, 1
      %s188 = scalar_select %p187, %s14, 1
      %s189 = smul.addr %s188, 4
      %s190 = smul.addr %s189, 4
      %s191 = scalar_lea.vmem %s0, %s190
      %p192 = scmp.lt.s32.totalorder %s14, 1
      %s193 = scalar_select %p192, %s14, 1
      %s194 = smul.addr %s193, 8
      %s195 = scalar_lea.vmem %s1, %s194
      %p196 = scmp.lt.s32.totalorder %s14, 1
      %s197 = scalar_select %p196, %s14, 1
      %s198 = smul.addr %s197, 8
      %s199 = scalar_lea.vmem %s2, %s198
      %p200 = scmp.lt.s32.totalorder %s14, 1
      %s201 = scalar_select %p200, %s14, 1
      %s202 = smul.addr %s201, 3
      %s203 = smul.addr %s202, 8
      %s204 = scalar_lea.vmem %s3, %s203
      %v206 = vld [vmem:[%s191] sm:$0xf]
      %v207 = vld [vmem:[%s191 + $0x4] sm:$0xf]
      %v208 = vld [vmem:[%s191 + $0x8] sm:$0xf]
      %v209 = vld [vmem:[%s191 + $0xc] sm:$0xf]
      %v210 = vld [vmem:[%s195] sm:$0xff]
      %v211 = vld [vmem:[%s199] sm:$0xff]
      %v212 = vmul.f32 %v210, %v211
      %v213 = vpack.c.bf16 %v212, %v212
      %v218 = vunpack.c.l.b16 %v206
      %v219 = vunpack.c.l.b16 %v207
      %v220 = vunpack.c.l.b16 %v208
      %v221 = vunpack.c.l.b16 %v209
      %v222 = vpack.c.b16 %v219, %v218
      %v223 = vpack.c.b16 %v221, %v220
      %vm224 = vcmask 523264
      %v226 = vsel %vm224, %v213, 0
      %v229 = vsel %vm224, %v222, 0
      %v232 = vsel %vm224, %v223, 0
      %234 = vmatprep.subr.bf16.mxu0 0
      %235 = vmatpush1.bf16.xpose.msra.mxu0 %v229
      %236 = vmatprep.subr.bf16.mxu0 0
      %237 = vmatpush1.bf16.xpose.msra.mxu0 %v232
      %238 = vmatprep.subr.bf16.mxu0 0
      %239 = vmatpush1.bf16.xpose.msra.mxu0 0
      %240 = vmatprep.subr.bf16.mxu0 0
      %241 = vmatpush1.bf16.xpose.msra.mxu0 0
      %242 = vmatprep.subr.bf16.mxu0 0
      %243 = vmatpush1.bf16.xpose.msra.mxu0 0
      %244 = vmatprep.subr.bf16.mxu0 0
      %245 = vmatpush1.bf16.xpose.msra.mxu0 0
      %246 = vmatprep.subr.bf16.mxu0 0
      %247 = vmatpush1.bf16.xpose.msra.mxu0 0
      %248 = vmatprep.subr.bf16.mxu0 0
      %249 = vmatpush1.bf16.xpose.msra.mxu0 0
      %250 = vmatprep.subr.bf16.mxu0 0
      %251 = vmatpush1.bf16.xpose.msra.mxu0 0
      %252 = vmatprep.subr.bf16.mxu0 0
      %253 = vmatpush1.bf16.xpose.msra.mxu0 0
      %254 = vmatprep.subr.bf16.mxu0 0
      %255 = vmatpush1.bf16.xpose.msra.mxu0 0
      %256 = vmatprep.subr.bf16.mxu0 0
      %257 = vmatpush1.bf16.xpose.msra.mxu0 0
      %258 = vmatprep.subr.bf16.mxu0 0
      %259 = vmatpush1.bf16.xpose.msra.mxu0 0
      %260 = vmatprep.subr.bf16.mxu0 0
      %261 = vmatpush1.bf16.xpose.msra.mxu0 0
      %262 = vmatprep.subr.bf16.mxu0 0
      %263 = vmatpush1.bf16.xpose.msra.mxu0 0
      %264 = vmatprep.subr.bf16.mxu0 0
      %265 = vmatpush1.bf16.xpose.msra.mxu0 0
      %266 = vmatprep.mubr.bf16.mxu0 0
      %267 = vmatmul.mubr.bf16.gmra.mrb[0].mxu0 %v226
      %v268 = vpop.f32.mrb[0].mxu0
      %v269 = vadd.f32 0.0, %v268
      %v270 = vpop.f32.mrb[0].mxu0
      %v271 = vpop.f32.mrb[0].mxu0
      %v272 = vpop.f32.mrb[0].mxu0
      %273 = vdwg.mxu0
      %v274 = vsel %vm224, %v211, 0.0
      %275 = vadd.xlane.f32.xlu0 %v274
      %v276 = vpop.xlane.xlu0 %275
      %v277 = vadd.f32 %v276, 1e-06
      %v278 = vrcp.pop %v277
      %v279 = vmul.f32 %v269, %v278
      %vm280 = vcmask 261120
      %281 = vst.msk [vmem:[%s204] sm:$0xff] %vm280, %v279
      %v282 = vpack.c.bf16 %v279, %v279
      %v286 = vsel %vm280, %v282, 0
      %288 = vmatprep.subr.bf16.mxu0 0
      %289 = vmatpush1.bf16.msra.mxu0 %v222
      %290 = vmatprep.subr.bf16.mxu0 0
      %291 = vmatpush1.bf16.msra.mxu0 %v223
      %292 = vmatprep.subr.bf16.mxu0 0
      %293 = vmatpush1.bf16.msra.mxu0 0
      %294 = vmatprep.subr.bf16.mxu0 0
      %295 = vmatpush1.bf16.msra.mxu0 0
      %296 = vmatprep.subr.bf16.mxu0 0
      %297 = vmatpush1.bf16.msra.mxu0 0
      %298 = vmatprep.subr.bf16.mxu0 0
      %299 = vmatpush1.bf16.msra.mxu0 0
      %300 = vmatprep.subr.bf16.mxu0 0
      %301 = vmatpush1.bf16.msra.mxu0 0
      %302 = vmatprep.subr.bf16.mxu0 0
      %303 = vmatpush1.bf16.msra.mxu0 0
      %304 = vmatprep.subr.bf16.mxu0 0
      %305 = vmatpush1.bf16.msra.mxu0 0
      %306 = vmatprep.subr.bf16.mxu0 0
      %307 = vmatpush1.bf16.msra.mxu0 0
      %308 = vmatprep.subr.bf16.mxu0 0
      %309 = vmatpush1.bf16.msra.mxu0 0
      %310 = vmatprep.subr.bf16.mxu0 0
      %311 = vmatpush1.bf16.msra.mxu0 0
      %312 = vmatprep.subr.bf16.mxu0 0
      %313 = vmatpush1.bf16.msra.mxu0 0
      %314 = vmatprep.subr.bf16.mxu0 0
      %315 = vmatpush1.bf16.msra.mxu0 0
      %316 = vmatprep.subr.bf16.mxu0 0
      %317 = vmatpush1.bf16.msra.mxu0 0
      %318 = vmatprep.subr.bf16.mxu0 0
      %319 = vmatpush1.bf16.msra.mxu0 0
      %320 = vmatprep.mubr.bf16.mxu0 0
      %321 = vmatmul.mubr.bf16.gmra.mrb[0].mxu0 %v286
      %v322 = vpop.f32.mrb[0].mxu0
      %v323 = vadd.f32 0.0, %v322
      %v324 = vpop.f32.mrb[0].mxu0
      %v325 = vpop.f32.mrb[0].mxu0
      %v326 = vpop.f32.mrb[0].mxu0
      %327 = vdwg.mxu0
      %v328 = vsub.f32 %v323, %v210
      %v329 = vmul.f32 %v211, %v328
      %v330 = vpack.c.bf16 %v329, %v329
      %v331 = vmul.f32 %v279, 0.1
      %v333 = vsel %vm224, %v330, 0
      %335 = vmatprep.subr.bf16.mxu0 0
      %336 = vmatpush1.bf16.xpose.msra.mxu0 %v229
      %337 = vmatprep.subr.bf16.mxu0 0
      %338 = vmatpush1.bf16.xpose.msra.mxu0 %v232
      %339 = vmatprep.subr.bf16.mxu0 0
      %340 = vmatpush1.bf16.xpose.msra.mxu0 0
      %341 = vmatprep.subr.bf16.mxu0 0
      %342 = vmatpush1.bf16.xpose.msra.mxu0 0
      %343 = vmatprep.subr.bf16.mxu0 0
      %344 = vmatpush1.bf16.xpose.msra.mxu0 0
      %345 = vmatprep.subr.bf16.mxu0 0
      %346 = vmatpush1.bf16.xpose.msra.mxu0 0
      %347 = vmatprep.subr.bf16.mxu0 0
      %348 = vmatpush1.bf16.xpose.msra.mxu0 0
      %349 = vmatprep.subr.bf16.mxu0 0
      %350 = vmatpush1.bf16.xpose.msra.mxu0 0
      %351 = vmatprep.subr.bf16.mxu0 0
      %352 = vmatpush1.bf16.xpose.msra.mxu0 0
      %353 = vmatprep.subr.bf16.mxu0 0
      %354 = vmatpush1.bf16.xpose.msra.mxu0 0
      %355 = vmatprep.subr.bf16.mxu0 0
      %356 = vmatpush1.bf16.xpose.msra.mxu0 0
      %357 = vmatprep.subr.bf16.mxu0 0
      %358 = vmatpush1.bf16.xpose.msra.mxu0 0
      %359 = vmatprep.subr.bf16.mxu0 0
      %360 = vmatpush1.bf16.xpose.msra.mxu0 0
      %361 = vmatprep.subr.bf16.mxu0 0
      %362 = vmatpush1.bf16.xpose.msra.mxu0 0
      %363 = vmatprep.subr.bf16.mxu0 0
      %364 = vmatpush1.bf16.xpose.msra.mxu0 0
      %365 = vmatprep.subr.bf16.mxu0 0
      %366 = vmatpush1.bf16.xpose.msra.mxu0 0
      %367 = vmatprep.mubr.bf16.mxu0 0
      %368 = vmatmul.mubr.bf16.gmra.mrb[0].mxu0 %v333
      %v369 = vpop.f32.mrb[0].mxu0
      %v370 = vadd.f32 %v331, %v369
      %v371 = vpop.f32.mrb[0].mxu0
      %v372 = vpop.f32.mrb[0].mxu0
      %v373 = vpop.f32.mrb[0].mxu0
      %374 = vdwg.mxu0
      %v375 = vpack.c.bf16 %v370, %v370
      %v377 = vsel %vm280, %v375, 0
      %379 = vmatprep.subr.bf16.mxu0 0
      %380 = vmatpush1.bf16.msra.mxu0 %v222
      %381 = vmatprep.subr.bf16.mxu0 0
      %382 = vmatpush1.bf16.msra.mxu0 %v223
      %383 = vmatprep.subr.bf16.mxu0 0
      %384 = vmatpush1.bf16.msra.mxu0 0
      %385 = vmatprep.subr.bf16.mxu0 0
      %386 = vmatpush1.bf16.msra.mxu0 0
      %387 = vmatprep.subr.bf16.mxu0 0
      %388 = vmatpush1.bf16.msra.mxu0 0
      %389 = vmatprep.subr.bf16.mxu0 0
      %390 = vmatpush1.bf16.msra.mxu0 0
      %391 = vmatprep.subr.bf16.mxu0 0
      %392 = vmatpush1.bf16.msra.mxu0 0
      %393 = vmatprep.subr.bf16.mxu0 0
      %394 = vmatpush1.bf16.msra.mxu0 0
      %395 = vmatprep.subr.bf16.mxu0 0
      %396 = vmatpush1.bf16.msra.mxu0 0
      %397 = vmatprep.subr.bf16.mxu0 0
      %398 = vmatpush1.bf16.msra.mxu0 0
      %399 = vmatprep.subr.bf16.mxu0 0
      %400 = vmatpush1.bf16.msra.mxu0 0
      %401 = vmatprep.subr.bf16.mxu0 0
      %402 = vmatpush1.bf16.msra.mxu0 0
      %403 = vmatprep.subr.bf16.mxu0 0
      %404 = vmatpush1.bf16.msra.mxu0 0
      %405 = vmatprep.subr.bf16.mxu0 0
      %406 = vmatpush1.bf16.msra.mxu0 0
      %407 = vmatprep.subr.bf16.mxu0 0
      %408 = vmatpush1.bf16.msra.mxu0 0
      %409 = vmatprep.subr.bf16.mxu0 0
      %410 = vmatpush1.bf16.msra.mxu0 0
      %411 = vmatprep.mubr.bf16.mxu0 0
      %412 = vmatmul.mubr.bf16.gmra.mrb[0].mxu0 %v377
      %v413 = vpop.f32.mrb[0].mxu0
      %v414 = vadd.f32 0.0, %v413
      %v415 = vpop.f32.mrb[0].mxu0
      %v416 = vpop.f32.mrb[0].mxu0
      %v417 = vpop.f32.mrb[0].mxu0
      %418 = vdwg.mxu0
      %v419 = vmul.f32 %v370, %v370
      %v420 = vsel %vm280, %v419, 0.0
      %421 = vadd.xlane.f32.xlu0 %v420
      %v422 = vpop.xlane.xlu0 %421
      %v423 = vrot.slane %v422, 4
      %v424 = vadd.f32 %v422, %v423
      %v425 = vrot.slane %v424, 2
      %v426 = vadd.f32 %v424, %v425
      %v427 = vrot.slane %v426, 1
      %v428 = vadd.f32 %v426, %v427
      %s429 = vtos %v428
      %v430 = vmul.f32 %v211, %v414
      %v431 = vmul.f32 %v430, %v414
      %v432 = vsel %vm224, %v431, 0.0
      %433 = vadd.xlane.f32.xlu0 %v432
      %v434 = vpop.xlane.xlu0 %433
      %v435 = vrot.slane %v434, 4
      %v436 = vadd.f32 %v434, %v435
      %v437 = vrot.slane %v436, 2
      %v438 = vadd.f32 %v436, %v437
      %v439 = vrot.slane %v438, 1
      %v440 = vadd.f32 %v438, %v439
      %s441 = vtos %v440
      %s442 = smul.f32 %s429, 0.1
      %s443 = sadd.f32 %s441, %s442
      %s444 = sadd.f32 %s443, 1e-08
      %v445 = vstv %s444
      %v446 = vrcp.pop %v445
      %s447 = vtos %v446
      %s448 = smul.f32 %s429, %s447
      %v449 = vstv %s448
      %v450 = vmul.f32 %v449, %v370
      %v451 = vsub.f32 %v279, %v450
      %452 = vst.msk [vmem:[%s204 + $0x8] sm:$0xff] %vm280, %v451
      %v453 = vpack.c.bf16 %v451, %v451
      %v455 = vsel %vm280, %v453, 0
      %457 = vmatprep.subr.bf16.mxu0 0
      %458 = vmatpush1.bf16.msra.mxu0 %v222
      %459 = vmatprep.subr.bf16.mxu0 0
      %460 = vmatpush1.bf16.msra.mxu0 %v223
      %461 = vmatprep.subr.bf16.mxu0 0
      %462 = vmatpush1.bf16.msra.mxu0 0
      %463 = vmatprep.subr.bf16.mxu0 0
      %464 = vmatpush1.bf16.msra.mxu0 0
      %465 = vmatprep.subr.bf16.mxu0 0
      %466 = vmatpush1.bf16.msra.mxu0 0
      %467 = vmatprep.subr.bf16.mxu0 0
      %468 = vmatpush1.bf16.msra.mxu0 0
      %469 = vmatprep.subr.bf16.mxu0 0
      %470 = vmatpush1.bf16.msra.mxu0 0
      %471 = vmatprep.subr.bf16.mxu0 0
      %472 = vmatpush1.bf16.msra.mxu0 0
      %473 = vmatprep.subr.bf16.mxu0 0
      %474 = vmatpush1.bf16.msra.mxu0 0
      %475 = vmatprep.subr.bf16.mxu0 0
      %476 = vmatpush1.bf16.msra.mxu0 0
      %477 = vmatprep.subr.bf16.mxu0 0
      %478 = vmatpush1.bf16.msra.mxu0 0
      %479 = vmatprep.subr.bf16.mxu0 0
      %480 = vmatpush1.bf16.msra.mxu0 0
      %481 = vmatprep.subr.bf16.mxu0 0
      %482 = vmatpush1.bf16.msra.mxu0 0
      %483 = vmatprep.subr.bf16.mxu0 0
      %484 = vmatpush1.bf16.msra.mxu0 0
      %485 = vmatprep.subr.bf16.mxu0 0
      %486 = vmatpush1.bf16.msra.mxu0 0
      %487 = vmatprep.subr.bf16.mxu0 0
      %488 = vmatpush1.bf16.msra.mxu0 0
      %489 = vmatprep.mubr.bf16.mxu0 0
      %490 = vmatmul.mubr.bf16.gmra.mrb[0].mxu0 %v455
      %v491 = vpop.f32.mrb[0].mxu0
      %v492 = vadd.f32 0.0, %v491
      %v493 = vpop.f32.mrb[0].mxu0
      %v494 = vpop.f32.mrb[0].mxu0
      %v495 = vpop.f32.mrb[0].mxu0
      %496 = vdwg.mxu0
      %v497 = vsub.f32 %v492, %v210
      %v498 = vmul.f32 %v211, %v497
      %v499 = vpack.c.bf16 %v498, %v498
      %v500 = vmul.f32 %v451, 0.1
      %v502 = vsel %vm224, %v499, 0
      %504 = vmatprep.subr.bf16.mxu0 0
      %505 = vmatpush1.bf16.xpose.msra.mxu0 %v229
      %506 = vmatprep.subr.bf16.mxu0 0
      %507 = vmatpush1.bf16.xpose.msra.mxu0 %v232
      %508 = vmatprep.subr.bf16.mxu0 0
      %509 = vmatpush1.bf16.xpose.msra.mxu0 0
      %510 = vmatprep.subr.bf16.mxu0 0
      %511 = vmatpush1.bf16.xpose.msra.mxu0 0
      %512 = vmatprep.subr.bf16.mxu0 0
      %513 = vmatpush1.bf16.xpose.msra.mxu0 0
      %514 = vmatprep.subr.bf16.mxu0 0
      %515 = vmatpush1.bf16.xpose.msra.mxu0 0
      %516 = vmatprep.subr.bf16.mxu0 0
      %517 = vmatpush1.bf16.xpose.msra.mxu0 0
      %518 = vmatprep.subr.bf16.mxu0 0
      %519 = vmatpush1.bf16.xpose.msra.mxu0 0
      %520 = vmatprep.subr.bf16.mxu0 0
      %521 = vmatpush1.bf16.xpose.msra.mxu0 0
      %522 = vmatprep.subr.bf16.mxu0 0
      %523 = vmatpush1.bf16.xpose.msra.mxu0 0
      %524 = vmatprep.subr.bf16.mxu0 0
      %525 = vmatpush1.bf16.xpose.msra.mxu0 0
      %526 = vmatprep.subr.bf16.mxu0 0
      %527 = vmatpush1.bf16.xpose.msra.mxu0 0
      %528 = vmatprep.subr.bf16.mxu0 0
      %529 = vmatpush1.bf16.xpose.msra.mxu0 0
      %530 = vmatprep.subr.bf16.mxu0 0
      %531 = vmatpush1.bf16.xpose.msra.mxu0 0
      %532 = vmatprep.subr.bf16.mxu0 0
      %533 = vmatpush1.bf16.xpose.msra.mxu0 0
      %534 = vmatprep.subr.bf16.mxu0 0
      %535 = vmatpush1.bf16.xpose.msra.mxu0 0
      %536 = vmatprep.mubr.bf16.mxu0 0
      %537 = vmatmul.mubr.bf16.gmra.mrb[0].mxu0 %v502
      %v538 = vpop.f32.mrb[0].mxu0
      %v539 = vadd.f32 %v500, %v538
      %v540 = vpop.f32.mrb[0].mxu0
      %v541 = vpop.f32.mrb[0].mxu0
      %v542 = vpop.f32.mrb[0].mxu0
      %543 = vdwg.mxu0
      %v544 = vpack.c.bf16 %v539, %v539
      %v546 = vsel %vm280, %v544, 0
      %548 = vmatprep.subr.bf16.mxu0 0
      %549 = vmatpush1.bf16.msra.mxu0 %v222
      %550 = vmatprep.subr.bf16.mxu0 0
      %551 = vmatpush1.bf16.msra.mxu0 %v223
      %552 = vmatprep.subr.bf16.mxu0 0
      %553 = vmatpush1.bf16.msra.mxu0 0
      %554 = vmatprep.subr.bf16.mxu0 0
      %555 = vmatpush1.bf16.msra.mxu0 0
      %556 = vmatprep.subr.bf16.mxu0 0
      %557 = vmatpush1.bf16.msra.mxu0 0
      %558 = vmatprep.subr.bf16.mxu0 0
      %559 = vmatpush1.bf16.msra.mxu0 0
      %560 = vmatprep.subr.bf16.mxu0 0
      %561 = vmatpush1.bf16.msra.mxu0 0
      %562 = vmatprep.subr.bf16.mxu0 0
      %563 = vmatpush1.bf16.msra.mxu0 0
      %564 = vmatprep.subr.bf16.mxu0 0
      %565 = vmatpush1.bf16.msra.mxu0 0
      %566 = vmatprep.subr.bf16.mxu0 0
      %567 = vmatpush1.bf16.msra.mxu0 0
      %568 = vmatprep.subr.bf16.mxu0 0
      %569 = vmatpush1.bf16.msra.mxu0 0
      %570 = vmatprep.subr.bf16.mxu0 0
      %571 = vmatpush1.bf16.msra.mxu0 0
      %572 = vmatprep.subr.bf16.mxu0 0
      %573 = vmatpush1.bf16.msra.mxu0 0
      %574 = vmatprep.subr.bf16.mxu0 0
      %575 = vmatpush1.bf16.msra.mxu0 0
      %576 = vmatprep.subr.bf16.mxu0 0
      %577 = vmatpush1.bf16.msra.mxu0 0
      %578 = vmatprep.subr.bf16.mxu0 0
      %579 = vmatpush1.bf16.msra.mxu0 0
      %580 = vmatprep.mubr.bf16.mxu0 0
      %581 = vmatmul.mubr.bf16.gmra.mrb[0].mxu0 %v546
      %v582 = vpop.f32.mrb[0].mxu0
      %v583 = vadd.f32 0.0, %v582
      %v584 = vpop.f32.mrb[0].mxu0
      %v585 = vpop.f32.mrb[0].mxu0
      %v586 = vpop.f32.mrb[0].mxu0
      %587 = vdwg.mxu0
      %v588 = vmul.f32 %v539, %v539
      %v589 = vsel %vm280, %v588, 0.0
      %590 = vadd.xlane.f32.xlu0 %v589
      %v591 = vpop.xlane.xlu0 %590
      %v592 = vrot.slane %v591, 4
      %v593 = vadd.f32 %v591, %v592
      %v594 = vrot.slane %v593, 2
      %v595 = vadd.f32 %v593, %v594
      %v596 = vrot.slane %v595, 1
      %v597 = vadd.f32 %v595, %v596
      %s598 = vtos %v597
      %v599 = vmul.f32 %v211, %v583
      %v600 = vmul.f32 %v599, %v583
      %v601 = vsel %vm224, %v600, 0.0
      %602 = vadd.xlane.f32.xlu0 %v601
      %v603 = vpop.xlane.xlu0 %602
      %v604 = vrot.slane %v603, 4
      %v605 = vadd.f32 %v603, %v604
      %v606 = vrot.slane %v605, 2
      %v607 = vadd.f32 %v605, %v606
      %v608 = vrot.slane %v607, 1
      %v609 = vadd.f32 %v607, %v608
      %s610 = vtos %v609
      %s611 = smul.f32 %s598, 0.1
      %s612 = sadd.f32 %s610, %s611
      %s613 = sadd.f32 %s612, 1e-08
      %v614 = vstv %s613
      %v615 = vrcp.pop %v614
      %s616 = vtos %v615
      %s617 = smul.f32 %s598, %s616
      %v618 = vstv %s617
      %v619 = vmul.f32 %v618, %v539
      %v620 = vsub.f32 %v451, %v619
      %621 = vst.msk [vmem:[%s204 + $0x10] sm:$0xff] %vm280, %v620
      %p622 = scmp.lt.s32.totalorder %s14, 1
      %s623 = scalar_select %p622, %s14, 1
      %s624 = smul.addr %s623, 3
      %s625 = smul.addr %s624, 8
      %s626 = scalar_lea.vmem %s3, %s625
      // Predicated region
      $region33: #{lwtl_box_net_forward.15} parent=31 // pred_check
        %p627 = pneg %p110
      $region34: #{lwtl_box_net_forward.15} parent=31 // pred_check_branch
        %629 = sbr.rel (%p627) target = $region36
      $region35: #{lwtl_box_net_forward.15} parent=31 // pred_region
        _
      $region36: #{lwtl_box_net_forward.15} parent=31 // pred_fallthru
        _
    $region32: #{lwtl_box_net_forward.15} parent=5 // pred_fallthru
      _
    %p630 = scmp.le.s32.totalorder 2, %s9
    // Predicated region
    $region37: #{lwtl_box_net_forward.15} parent=5 // pred_check
      %p631 = pneg %p630
    $region38: #{lwtl_box_net_forward.15} parent=5 // pred_check_branch
      %633 = sbr.rel (%p631) target = $region40
    $region39: #{lwtl_box_net_forward.15} parent=5 // pred_region
      %s634 = ssub.s32 %s9, 2
      // Predicated region
      $region41: #{lwtl_box_net_forward.15} parent=39 // pred_check
        %p635 = pneg %p116
      $region42: #{lwtl_box_net_forward.15} parent=39 // pred_check_branch
        %637 = sbr.rel (%p635) target = $region44
      $region43: #{lwtl_box_net_forward.15} parent=39 // pred_region
        %p638 = scmp.lt.s32.totalorder %s15, 1
        %s639 = scalar_select %p638, %s15, 1
        %s640 = smul.addr %s639, 3
        %s641 = smul.addr %s640, 8
        %s642 = scalar_lea.vmem %s3, %s641
      $region44: #{lwtl_box_net_forward.15} parent=39 // pred_fallthru
        _
    $region40: #{lwtl_box_net_forward.15} parent=5 // pred_fallthru
      _
  $region6: #{lwtl_box_net_forward.15} parent=0 // loop_footer
    %s13 = sadd.s32 1, %s9
  $region7: #{lwtl_box_net_forward.15} parent=0 // loop_footer_branch
    %8 = sbr.rel target = $region3
  $region8: #{lwtl_box_net_forward.15} parent=0 // loop_exit
    _

// kernel: squeeze.15
$region0: #{squeeze.15}
  %s0 = inlined_call_operand.vmem [shape: f32[1,1,2,8,8,8], index: 0, kind: input, shape index: {}]
  %s1 = inlined_call_operand.vmem [shape: f32[1,2,8,64], index: 1, kind: output, shape index: {}]
  %v2 = vld [vmem:[%s0] ss:$8 sm:$0xf]
  %v3 = vld [vmem:[%s0] ss:$8 sm:$0xf0]
  %vm4 = vcmask 1047556
  %v5 = vsel %vm4, %v3, %v2
  %vm6 = vcmask 64512
  %7 = vst.msk [vmem:[%s1] sm:$0xff] %vm6, %v5
  %s8 = scalar_lea.vmem %s0, 64
  %v9 = vld [vmem:[%s8] ss:$8 sm:$0xf]
  %s10 = scalar_lea.vmem %s0, 64
  %v11 = vld [vmem:[%s10] ss:$8 sm:$0xf0]
  %vm12 = vcmask 1047556
  %v13 = vsel %vm12, %v11, %v9
  %vm14 = vcmask 64512
  %s15 = scalar_lea.vmem %s1, 8
  %16 = vst.msk [vmem:[%s15] sm:$0xff] %vm14, %v13
  %s17 = scalar_lea.vmem %s0, 7
  %v18 = vld [vmem:[%s17] ss:$8 sm:$0xf]
  %s19 = scalar_lea.vmem %s0, 7
  %v20 = vld [vmem:[%s19] ss:$8 sm:$0xf0]
  %vm21 = vcmask 1047556
  %v22 = vsel %vm21, %v20, %v18
  %23 = vrot.lane.b32.xlu0 %v22, 56
  %v24 = vpop.permute.xlu0 %23
  %vm25 = vcmask 523712
  %26 = vst.msk [vmem:[%s1] sm:$0xff] %vm25, %v24
  %s27 = scalar_lea.vmem %s0, 71
  %v28 = vld [vmem:[%s27] ss:$8 sm:$0xf]
  %s29 = scalar_lea.vmem %s0, 71
  %v30 = vld [vmem:[%s29] ss:$8 sm:$0xf0]
  %vm31 = vcmask 1047556
  %v32 = vsel %vm31, %v30, %v28
  %33 = vrot.lane.b32.xlu0 %v32, 56
  %v34 = vpop.permute.xlu0 %33
  %vm35 = vcmask 523712
  %s36 = scalar_lea.vmem %s1, 8
  %37 = vst.msk [vmem:[%s36] sm:$0xff] %vm35, %v34
  %s38 = scalar_lea.vmem %s0, 6
  %v39 = vld [vmem:[%s38] ss:$8 sm:$0xf]
  %s40 = scalar_lea.vmem %s0, 6
  %v41 = vld [vmem:[%s40] ss:$8 sm:$0xf0]
  %vm42 = vcmask 1047556
  %v43 = vsel %vm42, %v41, %v39
  %44 = vrot.lane.b32.xlu0 %v43, 48
  %v45 = vpop.permute.xlu0 %44
  %vm46 = vcmask 458112
  %47 = vst.msk [vmem:[%s1] sm:$0xff] %vm46, %v45
  %s48 = scalar_lea.vmem %s0, 70
  %v49 = vld [vmem:[%s48] ss:$8 sm:$0xf]
  %s50 = scalar_lea.vmem %s0, 70
  %v51 = vld [vmem:[%s50] ss:$8 sm:$0xf0]
  %vm52 = vcmask 1047556
  %v53 = vsel %vm52, %v51, %v49
  %54 = vrot.lane.b32.xlu0 %v53, 48
  %v55 = vpop.permute.xlu0 %54
  %vm56 = vcmask 458112
  %s57 = scalar_lea.vmem %s1, 8
  %58 = vst.msk [vmem:[%s57] sm:$0xff] %vm56, %v55
  %s59 = scalar_lea.vmem %s0, 5
  %v60 = vld [vmem:[%s59] ss:$8 sm:$0xf]
  %s61 = scalar_lea.vmem %s0, 5
  %v62 = vld [vmem:[%s61] ss:$8 sm:$0xf0]
  %vm63 = vcmask 1047556
  %v64 = vsel %vm63, %v62, %v60
  %65 = vrot.lane.b32.xlu0 %v64, 40
  %v66 = vpop.permute.xlu0 %65
  %vm67 = vcmask 392512
  %68 = vst.msk [vmem:[%s1] sm:$0xff] %vm67, %v66
  %s69 = scalar_lea.vmem %s0, 69
  %v70 = vld [vmem:[%s69] ss:$8 sm:$0xf]
  %s71 = scalar_lea.vmem %s0, 69
  %v72 = vld [vmem:[%s71] ss:$8 sm:$0xf0]
  %vm73 = vcmask 1047556
  %v74 = vsel %vm73, %v72, %v70
  %75 = vrot.lane.b32.xlu0 %v74, 40
  %v76 = vpop.permute.xlu0 %75
  %vm77 = vcmask 392512
  %s78 = scalar_lea.vmem %s1, 8
  %79 = vst.msk [vmem:[%s78] sm:$0xff] %vm77, %v76
  %s80 = scalar_lea.vmem %s0, 4
  %v81 = vld [vmem:[%s80] ss:$8 sm:$0xf]
  %s82 = scalar_lea.vmem %s0, 4
  %v83 = vld [vmem:[%s82] ss:$8 sm:$0xf0]
  %vm84 = vcmask 1047556
  %v85 = vsel %vm84, %v83, %v81
  %86 = vrot.lane.b32.xlu0 %v85, 32
  %v87 = vpop.permute.xlu0 %86
  %vm88 = vcmask 326912
  %89 = vst.msk [vmem:[%s1] sm:$0xff] %vm88, %v87
  %s90 = scalar_lea.vmem %s0, 68
  %v91 = vld [vmem:[%s90] ss:$8 sm:$0xf]
  %s92 = scalar_lea.vmem %s0, 68
  %v93 = vld [vmem:[%s92] ss:$8 sm:$0xf0]
  %vm94 = vcmask 1047556
  %v95 = vsel %vm94, %v93, %v91
  %96 = vrot.lane.b32.xlu0 %v95, 32
  %v97 = vpop.permute.xlu0 %96
  %vm98 = vcmask 326912
  %s99 = scalar_lea.vmem %s1, 8
  %100 = vst.msk [vmem:[%s99] sm:$0xff] %vm98, %v97
  %s101 = scalar_lea.vmem %s0, 3
  %v102 = vld [vmem:[%s101] ss:$8 sm:$0xf]
  %s103 = scalar_lea.vmem %s0, 3
  %v104 = vld [vmem:[%s103] ss:$8 sm:$0xf0]
  %vm105 = vcmask 1047556
  %v106 = vsel %vm105, %v104, %v102
  %107 = vrot.lane.b32.xlu0 %v106, 24
  %v108 = vpop.permute.xlu0 %107
  %vm109 = vcmask 261312
  %110 = vst.msk [vmem:[%s1] sm:$0xff] %vm109, %v108
  %s111 = scalar_lea.vmem %s0, 67
  %v112 = vld [vmem:[%s111] ss:$8 sm:$0xf]
  %s113 = scalar_lea.vmem %s0, 67
  %v114 = vld [vmem:[%s113] ss:$8 sm:$0xf0]
  %vm115 = vcmask 1047556
  %v116 = vsel %vm115, %v114, %v112
  %117 = vrot.lane.b32.xlu0 %v116, 24
  %v118 = vpop.permute.xlu0 %117
  %vm119 = vcmask 261312
  %s120 = scalar_lea.vmem %s1, 8
  %121 = vst.msk [vmem:[%s120] sm:$0xff] %vm119, %v118
  %s122 = scalar_lea.vmem %s0, 2
  %v123 = vld [vmem:[%s122] ss:$8 sm:$0xf]
  %s124 = scalar_lea.vmem %s0, 2
  %v125 = vld [vmem:[%s124] ss:$8 sm:$0xf0]
  %vm126 = vcmask 1047556
  %v127 = vsel %vm126, %v125, %v123
  %128 = vrot.lane.b32.xlu0 %v127, 16
  %v129 = vpop.permute.xlu0 %128
  %vm130 = vcmask 195712
  %131 = vst.msk [vmem:[%s1] sm:$0xff] %vm130, %v129
  %s132 = scalar_lea.vmem %s0, 66
  %v133 = vld [vmem:[%s132] ss:$8 sm:$0xf]
  %s134 = scalar_lea.vmem %s0, 66
  %v135 = vld [vmem:[%s134] ss:$8 sm:$0xf0]
  %vm136 = vcmask 1047556
  %v137 = vsel %vm136, %v135, %v133
  %138 = vrot.lane.b32.xlu0 %v137, 16
  %v139 = vpop.permute.xlu0 %138
  %vm140 = vcmask 195712
  %s141 = scalar_lea.vmem %s1, 8
  %142 = vst.msk [vmem:[%s141] sm:$0xff] %vm140, %v139
  %s143 = scalar_lea.vmem %s0, 1
  %v144 = vld [vmem:[%s143] ss:$8 sm:$0xf]
  %s145 = scalar_lea.vmem %s0, 1
  %v146 = vld [vmem:[%s145] ss:$8 sm:$0xf0]
  %vm147 = vcmask 1047556
  %v148 = vsel %vm147, %v146, %v144
  %149 = vrot.lane.b32.xlu0 %v148, 8
  %v150 = vpop.permute.xlu0 %149
  %vm151 = vcmask 130112
  %152 = vst.msk [vmem:[%s1] sm:$0xff] %vm151, %v150
  %s153 = scalar_lea.vmem %s0, 65
  %v154 = vld [vmem:[%s153] ss:$8 sm:$0xf]
  %s155 = scalar_lea.vmem %s0, 65
  %v156 = vld [vmem:[%s155] ss:$8 sm:$0xf0]
  %vm157 = vcmask 1047556
  %v158 = vsel %vm157, %v156, %v154
  %159 = vrot.lane.b32.xlu0 %v158, 8
  %v160 = vpop.permute.xlu0 %159
  %vm161 = vcmask 130112
  %s162 = scalar_lea.vmem %s1, 8
  %163 = vst.msk [vmem:[%s162] sm:$0xff] %vm161, %v160

// kernel: lwtl_box_net_forward.14
$region0: #{lwtl_box_net_forward.14}
  #allocation0 [shape = 'u32[]', space=smem, size = 0x4, offset = 0x4, fixed_abs, tag = 'smem constant byte address 0x4 - core index']
  #allocation1 [shape = 'u32[144,128]{1,0:T(1,128)}', space=vmem, size = 0x12000, scoped, tag = 'internal scratch']
  %s0 = inlined_call_operand.vmem [shape: bf16[32,128], index: 0, kind: input, shape index: {}]
  %s1 = inlined_call_operand.vmem [shape: f32[1,128], index: 1, kind: input, shape index: {}]
  %s2 = inlined_call_operand.vmem [shape: bf16[16,32], index: 2, kind: input, shape index: {}]
  %s3 = inlined_call_operand.vmem [shape: f32[16,1], index: 3, kind: input, shape index: {}]
  %s4 = inlined_call_operand.vmem [shape: f32[16,1], index: 4, kind: input, shape index: {}]
  %s5 = inlined_call_operand.vmem [shape: f32[8,128], index: 5, kind: output, shape index: {0}]
  %s6 = inlined_call_operand.hbm [shape: f32[8,128], index: 6, kind: output, shape index: {1}]
  %7 = xla_tuple %s5, %s6
  %s8 = sld [smem:[#allocation0]]
  $region38: #{lwtl_box_net_forward.14} parent=0
    _
  %s10 = ssub.s32 1, %s8
  %s11 = scalar_select 0, %s10, %s8
  $region1: #{lwtl_box_net_forward.14} parent=0
    #allocation2 [shape = 'u8[4096]{0}', space=vmem, size = 0x1000, scoped, tag = 'output window, operand 1, single buffered']
    #allocation3 [shape = 's32[1]{0}', space=sflag, size = 0x4, scoped, tag = 'scoped memory for lwtl_box_net_forward.14']
    %12 = vsyncpa [#allocation3], 0
    // Predicated region
    $region2: #{lwtl_box_net_forward.14} parent=1 // pred_check
      _
    $region3: #{lwtl_box_net_forward.14} parent=1 // pred_check_branch
      %14 = sbr.rel (0) target = $region5
    $region4: #{lwtl_box_net_forward.14} parent=1 // pred_region
      _
    $region5: #{lwtl_box_net_forward.14} parent=1 // pred_fallthru
      _
    // Predicated region
    $region6: #{lwtl_box_net_forward.14} parent=1 // pred_check
      _
    $region7: #{lwtl_box_net_forward.14} parent=1 // pred_check_branch
      %16 = sbr.rel (0) target = $region9
    $region8: #{lwtl_box_net_forward.14} parent=1 // pred_region
      _
    $region9: #{lwtl_box_net_forward.14} parent=1 // pred_fallthru
      _
    // Predicated region
    $region10: #{lwtl_box_net_forward.14} parent=1 // pred_check
      _
    $region11: #{lwtl_box_net_forward.14} parent=1 // pred_check_branch
      %18 = sbr.rel (0) target = $region13
    $region12: #{lwtl_box_net_forward.14} parent=1 // pred_region
      _
    $region13: #{lwtl_box_net_forward.14} parent=1 // pred_fallthru
      _
    // Predicated region
    $region14: #{lwtl_box_net_forward.14} parent=1 // pred_check
      _
    $region15: #{lwtl_box_net_forward.14} parent=1 // pred_check_branch
      %20 = sbr.rel (0) target = $region17
    $region16: #{lwtl_box_net_forward.14} parent=1 // pred_region
      _
    $region17: #{lwtl_box_net_forward.14} parent=1 // pred_fallthru
      _
    // Predicated region
    $region18: #{lwtl_box_net_forward.14} parent=1 // pred_check
      _
    $region19: #{lwtl_box_net_forward.14} parent=1 // pred_check_branch
      %22 = sbr.rel (0) target = $region21
    $region20: #{lwtl_box_net_forward.14} parent=1 // pred_region
      _
    $region21: #{lwtl_box_net_forward.14} parent=1 // pred_fallthru
      _
    %v24 = vld [vmem:[%s2] sm:$0xf]
    %v25 = vld [vmem:[%s2 + $0x4] sm:$0xf]
    %v26 = vld [vmem:[%s0] sm:$0xf]
    %v27 = vld [vmem:[%s0 + $0x4] sm:$0xf]
    %v28 = vld [vmem:[%s0 + $0x8] sm:$0xf]
    %v29 = vld [vmem:[%s0 + $0xc] sm:$0xf]
    %v30 = vld [vmem:[%s3] sm:$0xff]
    %v31 = vld [vmem:[%s3 + $0x8] sm:$0xff]
    %v32 = vld [vmem:[%s1] sm:$0x1]
    %34 = vset.pattern.permute.xlu0 0
    %35 = vperm.xlu0 %34, %v30
    %v36 = vpop.permute.xlu0 %35
    %39 = vset.pattern.permute.xlu0 0
    %40 = vperm.xlu0 %39, %v31
    %v41 = vpop.permute.xlu0 %40
    %v44 = vlaneseq
    %v45 = vshrl.u32 %v44, 7
    %v46 = vsub.s32 0, %v45
    %v47 = vrot.slane %v32, %v46
    %v49 = vmul.f32 %v36, %v47
    %v50 = vmul.f32 %v41, %v47
    %v53 = vunpack.c.l.b16 %v24
    %v54 = vunpack.c.l.b16 %v25
    %v55 = vpack.c.b16 %v54, %v53
    %v60 = vunpack.c.l.b16 %v26
    %v61 = vunpack.c.l.b16 %v27
    %v62 = vunpack.c.l.b16 %v28
    %v63 = vunpack.c.l.b16 %v29
    %v64 = vpack.c.b16 %v61, %v60
    %v65 = vpack.c.b16 %v63, %v62
    %vm68 = vcmask 261120
    %v70 = vsel %vm68, %v55, 0
    %72 = vmatprep.subr.bf16.mxu0 0
    %73 = vmatpush1.bf16.msra.mxu0 %v64
    %74 = vmatprep.subr.bf16.mxu0 0
    %75 = vmatpush1.bf16.msra.mxu0 %v65
    %76 = vmatprep.subr.bf16.mxu0 0
    %77 = vmatpush1.bf16.msra.mxu0 0
    %78 = vmatprep.subr.bf16.mxu0 0
    %79 = vmatpush1.bf16.msra.mxu0 0
    %80 = vmatprep.subr.bf16.mxu0 0
    %81 = vmatpush1.bf16.msra.mxu0 0
    %82 = vmatprep.subr.bf16.mxu0 0
    %83 = vmatpush1.bf16.msra.mxu0 0
    %84 = vmatprep.subr.bf16.mxu0 0
    %85 = vmatpush1.bf16.msra.mxu0 0
    %86 = vmatprep.subr.bf16.mxu0 0
    %87 = vmatpush1.bf16.msra.mxu0 0
    %88 = vmatprep.subr.bf16.mxu0 0
    %89 = vmatpush1.bf16.msra.mxu0 0
    %90 = vmatprep.subr.bf16.mxu0 0
    %91 = vmatpush1.bf16.msra.mxu0 0
    %92 = vmatprep.subr.bf16.mxu0 0
    %93 = vmatpush1.bf16.msra.mxu0 0
    %94 = vmatprep.subr.bf16.mxu0 0
    %95 = vmatpush1.bf16.msra.mxu0 0
    %96 = vmatprep.subr.bf16.mxu0 0
    %97 = vmatpush1.bf16.msra.mxu0 0
    %98 = vmatprep.subr.bf16.mxu0 0
    %99 = vmatpush1.bf16.msra.mxu0 0
    %100 = vmatprep.subr.bf16.mxu0 0
    %101 = vmatpush1.bf16.msra.mxu0 0
    %102 = vmatprep.subr.bf16.mxu0 0
    %103 = vmatpush1.bf16.msra.mxu0 0
    %104 = vmatprep.mubr.bf16.mxu0 0
    %105 = vmatmul.mubr.bf16.gmra.mrb[0].mxu0 %v70
    %v106 = vpop.f32.mrb[0].mxu0
    %v107 = vadd.f32 %v49, %v106
    %v108 = vpop.f32.mrb[0].mxu0
    %v109 = vpop.f32.mrb[0].mxu0
    %v110 = vadd.f32 %v50, %v109
    %v111 = vpop.f32.mrb[0].mxu0
    %112 = vdwg.mxu0
    %v113 = vld [vmem:[%s4] sm:$0xff]
    %v114 = vld [vmem:[%s4 + $0x8] sm:$0xff]
    %116 = vset.pattern.permute.xlu0 0
    %117 = vperm.xlu0 %116, %v113
    %v118 = vpop.permute.xlu0 %117
    %121 = vset.pattern.permute.xlu0 0
    %122 = vperm.xlu0 %121, %v114
    %v123 = vpop.permute.xlu0 %122
    %v125 = vadd.f32 %v107, %v118
    %v126 = vadd.f32 %v110, %v123
    %127 = vst [vmem:[%s5] sm:$0xff] %v125
    %v128 = vmax.f32 %v126, 0.0
    %v129 = vand.u32 2147483647, %v126
    %v130 = vsub.f32 0.0, %v129
    %v131 = vmul.f32 %v130, 1.442695
    %v132 = vpow.pop %v131
    %v133 = vadd.f32 %v132, 1.0
    %v134 = vlog2.pop %v133
    %v135 = vmul.f32 %v134, 0.6931472
    %v136 = vadd.f32 %v128, %v135
    %v137 = vadd.f32 %v136, 0.01
    %138 = vst [vmem:[#allocation2] sm:$0xff] %v137
    // Predicated region
    $region22: #{lwtl_box_net_forward.14} parent=1 // pred_check
      _
    $region23: #{lwtl_box_net_forward.14} parent=1 // pred_check_branch
      %140 = sbr.rel (0) target = $region25
    $region24: #{lwtl_box_net_forward.14} parent=1 // pred_region
      _
    $region25: #{lwtl_box_net_forward.14} parent=1 // pred_fallthru
      _
    // Predicated region
    $region26: #{lwtl_box_net_forward.14} parent=1 // pred_check
      _
    $region27: #{lwtl_box_net_forward.14} parent=1 // pred_check_branch
      %142 = sbr.rel (0) target = $region29
    $region28: #{lwtl_box_net_forward.14} parent=1 // pred_region
      %s144 = ssub.s32 128, 128
      %145 = vsyncadd [#allocation3], %s144
      %s147 = sshll.u32 [#allocation2], 4
      %s148 = int_to_ptr.vmem [resolvable:$true] %s147
      %150 = dma.vmem_to_hbm [thread:$0]  %s148, 128, %s6, [#allocation3]
    $region29: #{lwtl_box_net_forward.14} parent=1 // pred_fallthru
      _
    // Predicated region
    $region30: #{lwtl_box_net_forward.14} parent=1 // pred_check
      _
    $region31: #{lwtl_box_net_forward.14} parent=1 // pred_check_branch
      %152 = sbr.rel (0) target = $region33
    $region32: #{lwtl_box_net_forward.14} parent=1 // pred_region
      _
    $region33: #{lwtl_box_net_forward.14} parent=1 // pred_fallthru
      _
    // Predicated region
    $region34: #{lwtl_box_net_forward.14} parent=1 // pred_check
      _
    $region35: #{lwtl_box_net_forward.14} parent=1 // pred_check_branch
      %154 = sbr.rel (0) target = $region37
    $region36: #{lwtl_box_net_forward.14} parent=1 // pred_region
      %155 = dma.done [#allocation3], 128
    $region37: #{lwtl_box_net_forward.14} parent=1 // pred_fallthru
      _
    %156 = vsyncpa [#allocation3], 1

</llo_original>
